<compile_context>
chip_gen: v6e
topology: v6e:2x2x1
jax: 0.10.0
libtpu: 0.0.40
codegen_flags: <defaults>
</compile_context>

<pallas_src>
import functools

import jax
import jax.numpy as jnp
from jax.experimental import pallas as pl
from jax.experimental.pallas import tpu as pltpu

F32 = jnp.float32
BF16 = jnp.bfloat16


def _layernorm(x, g, b, eps=1e-12):
    mu = jnp.mean(x, axis=-1, keepdims=True)
    var = jnp.mean(jnp.square(x - mu), axis=-1, keepdims=True)
    return (x - mu) * jax.lax.rsqrt(var + eps) * g + b


def _softmax(x):
    m = jnp.max(x, axis=-1, keepdims=True)
    e = jnp.exp(x - m)
    return e / jnp.sum(e, axis=-1, keepdims=True)


def _mm(a, w):
    """bf16 MXU matmul with f32 accumulation (w is already bf16)."""
    return jnp.dot(a.astype(BF16), w, preferred_element_type=F32)


def bert_ggnn_kernel(
    emb_ref, adj_ref,
    lne_g_ref, lne_b_ref,
    wqkv_ref, bqkv_ref, wo_ref, bo_ref,
    ln1_g_ref, ln1_b_ref,
    w1_ref, b1_ref, w2_ref, b2_ref,
    ln2_g_ref, ln2_b_ref,
    win_ref, bin_ref, wmsg_ref,
    wgz_ref, wgr_ref, wgn_ref,
    ugz_ref, ugr_ref, ugn_ref,
    bgz_ref, bgr_ref, bgn_ref,
    wfc_ref, bfc_ref,
    out_ref,
    *, num_heads):
    BB, S, D = emb_ref.shape
    H = win_ref.shape[1]
    P = wfc_ref.shape[1]
    dh = D // num_heads
    N = BB * S

    # Flatten the batch block so every dense matmul has BB*S rows (fills MXU).
    x = emb_ref[...].reshape(N, D)

    # ---- BERT embedding LayerNorm ----
    x = _layernorm(x, lne_g_ref[...], lne_b_ref[...])

    # ---- BERT encoder layer: multi-head self-attention (post-LN) ----
    # 1/sqrt(dh) attention scale is pre-folded into the Q columns of w_qkv/b_qkv.
    qkv = _mm(x, wqkv_ref[...]) + bqkv_ref[...]                     # (N, 3D) f32
    qkv_b = qkv.astype(BF16)
    acc = None
    for h in range(num_heads):
        c0 = h * dh
        # One lane-slice per head for the whole batch block; reshapes below
        # only split/merge the leading (sublane) axis -> no data movement.
        qh = qkv_b[:, c0:c0 + dh].reshape(BB, S, dh)
        kh = qkv_b[:, D + c0:D + c0 + dh].reshape(BB, S, dh)
        vh = qkv_b[:, 2 * D + c0:2 * D + c0 + dh].reshape(BB, S, dh)
        s = jnp.einsum('bqd,bkd->bqk', qh, kh,
                       preferred_element_type=F32)                  # (BB, S, S)
        p = _softmax(s).astype(BF16)
        ctx = jnp.einsum('bqk,bkd->bqd', p, vh,
                         preferred_element_type=F32)                # (BB, S, dh)
        # Fold the head concat into the output projection: sum_h ctx_h @ W_o[h],
        # with all BB*S rows in one MXU matmul.
        part = jnp.dot(ctx.reshape(N, dh).astype(BF16), wo_ref[h],
                       preferred_element_type=F32)                  # (N, D)
        acc = part if acc is None else acc + part
    attn_out = acc + bo_ref[...]                                    # (N, D)
    x = _layernorm(x + attn_out, ln1_g_ref[...], ln1_b_ref[...])

    # ---- BERT encoder layer: FFN (post-LN) ----
    # TODO(synk): HF BERT uses exact erf GELU; tanh approximation kept here.
    ffn = jax.nn.gelu(_mm(x, w1_ref[...]) + b1_ref[...])
    ffn = _mm(ffn, w2_ref[...]) + b2_ref[...]
    bert_out = _layernorm(x + ffn, ln2_g_ref[...], ln2_b_ref[...])  # (N, D)

    # ---- GGNN layer: fused multi-head message passing + GRU gate ----
    hproj = _mm(bert_out, win_ref[...]) + bin_ref[...]              # (N, H)
    # One block-diagonal (H,H) matmul replaces the per-head message matmuls.
    msg_pre = _mm(hproj, wmsg_ref[...]).astype(BF16)                # (N, H)
    adj = adj_ref[...].astype(BF16)                                 # (BB, S, S)
    m = jnp.einsum('bij,bjh->bih', adj, msg_pre.reshape(BB, S, H),
                   preferred_element_type=F32).reshape(N, H)        # (N, H)

    # GRU gates with per-gate weight matrices (no lane-unaligned slicing).
    z = jax.nn.sigmoid(_mm(m, wgz_ref[...]) + _mm(hproj, ugz_ref[...]) + bgz_ref[...])
    r = jax.nn.sigmoid(_mm(m, wgr_ref[...]) + _mm(hproj, ugr_ref[...]) + bgr_ref[...])
    n = jnp.tanh(_mm(m, wgn_ref[...]) + bgn_ref[...] + r * _mm(hproj, ugn_ref[...]))
    ggnn_out = (1.0 - z) * n + z * hproj                            # (N, H)

    # dropout: identity in eval mode

    # ---- classifier on [CLS] token (row 0 of each sequence in the block) ----
    cls = ggnn_out.reshape(BB, S, H)[:, 0, :]                       # (BB, H)
    logits = _mm(cls, wfc_ref[...]) + bfc_ref[...]                  # (BB, P)
    out_ref[...] = logits.reshape(BB, 1, P)


def bert_ggnn_forward(params, emb, adj, *, num_heads, batch_block=None):
    B, S, D = emb.shape
    H = params['w_in'].shape[1]
    P = params['w_fc'].shape[1]
    Dff = params['w1'].shape[1]
    dh = D // num_heads
    dhg = H // num_heads

    # --- choose how many sequences to process per grid step ---------------
    # Target ~256 MXU rows per step (v6e/v7x; v5e saturates at 128) but keep
    # at least 2 grid steps so both v7x TensorCores get work on the
    # batch-parallel axis.
    if batch_block is None:
        bb = max(1, 256 // S)
        bb = min(bb, B)
        if B >= 2:
            bb = min(bb, B // 2)
        while B % bb:
            bb -= 1
        batch_block = bb
    BB = batch_block
    assert B % BB == 0, (B, BB)

    # --- wrapper-side weight repacking (layout plumbing, done once) --------
    # Fold the 1/sqrt(dh) attention scale into the Q columns.
    scale = 1.0 / (dh ** 0.5)
    w_qkv = params['w_qkv'].at[:, :D].multiply(scale)
    b_qkv = params['b_qkv'].at[:, :D].multiply(scale)

    # Per-head output projection (nh, dh, D): lets the kernel accumulate
    # sum_h ctx_h @ W_o[h] instead of lane-concatenating contexts.
    w_o_h = params['w_o'].reshape(num_heads, dh, D)

    # Block-diagonal message weight (H, H): one fused matmul for all heads.
    w_msg_bd = jnp.zeros((H, H), F32)
    for h in range(num_heads):
        w_msg_bd = w_msg_bd.at[h * dhg:(h + 1) * dhg,
                               h * dhg:(h + 1) * dhg].set(params['w_msg'][h])

    # Split GRU gate weights/biases into z / r / n pieces.
    w_gz = params['w_g'][:, 0 * H:1 * H]
    w_gr = params['w_g'][:, 1 * H:2 * H]
    w_gn = params['w_g'][:, 2 * H:3 * H]
    u_gz = params['u_g'][:, 0 * H:1 * H]
    u_gr = params['u_g'][:, 1 * H:2 * H]
    u_gn = params['u_g'][:, 2 * H:3 * H]
    b_gz = params['b_g'][:, 0 * H:1 * H]
    b_gr = params['b_g'][:, 1 * H:2 * H]
    b_gn = params['b_g'][:, 2 * H:3 * H]

    kernel = functools.partial(bert_ggnn_kernel, num_heads=num_heads)

    full2d = lambda shape: pl.BlockSpec(shape, lambda b: (0, 0))
    full3d = lambda shape: pl.BlockSpec(shape, lambda b: (0, 0, 0))

    in_specs = [
        pl.BlockSpec((BB, S, D), lambda b: (b, 0, 0)),          # embeddings
        pl.BlockSpec((BB, S, S), lambda b: (b, 0, 0)),          # dependency graph
        full2d((1, D)), full2d((1, D)),                         # emb LayerNorm
        full2d((D, 3 * D)), full2d((1, 3 * D)),                 # fused QKV (Q pre-scaled)
        full3d((num_heads, dh, D)), full2d((1, D)),             # per-head out proj
        full2d((1, D)), full2d((1, D)),                         # LN1
        full2d((D, Dff)), full2d((1, Dff)),                     # FFN in
        full2d((Dff, D)), full2d((1, D)),                       # FFN out
        full2d((1, D)), full2d((1, D)),                         # LN2
        full2d((D, H)), full2d((1, H)),                         # GGNN input proj
        full2d((H, H)),                                         # block-diag msg weight
        full2d((H, H)), full2d((H, H)), full2d((H, H)),         # W_g z/r/n
        full2d((H, H)), full2d((H, H)), full2d((H, H)),         # U_g z/r/n
        full2d((1, H)), full2d((1, H)), full2d((1, H)),         # b_g z/r/n
        full2d((H, P)), full2d((1, P)),                         # fc
    ]
    out_spec = pl.BlockSpec((BB, 1, P), lambda b: (b, 0, 0))

    logits = pl.pallas_call(
        kernel,
        grid=(B // BB,),
        in_specs=in_specs,
        out_specs=out_spec,
        out_shape=jax.ShapeDtypeStruct((B, 1, P), jnp.float32),
        compiler_params=pltpu.CompilerParams(
            dimension_semantics=("parallel",),
            vmem_limit_bytes=64 * 1024 * 1024),
    )(
        emb.astype(F32), adj.astype(F32),
        params['lne_g'], params['lne_b'],
        w_qkv.astype(BF16), b_qkv,
        w_o_h.astype(BF16), params['b_o'],
        params['ln1_g'], params['ln1_b'],
        params['w1'].astype(BF16), params['b1'],
        params['w2'].astype(BF16), params['b2'],
        params['ln2_g'], params['ln2_b'],
        params['w_in'].astype(BF16), params['b_in'],
        w_msg_bd.astype(BF16),
        w_gz.astype(BF16), w_gr.astype(BF16), w_gn.astype(BF16),
        u_gz.astype(BF16), u_gr.astype(BF16), u_gn.astype(BF16),
        b_gz, b_gr, b_gn,
        params['w_fc'].astype(BF16), params['b_fc'],
    )
    return logits[:, 0, :]


def init_params(key, *, vocab, max_seq, bert_dim, ffn_dim, hidden_dim,
                num_heads, polarities):
    ks = jax.random.split(key, 12)

    def w(k, shape, scale=0.02):
        return (scale * jax.random.normal(k, shape)).astype(jnp.float32)

    f32 = jnp.float32
    return dict(
        word_emb=w(ks[0], (vocab, bert_dim)),
        seg_emb=w(ks[1], (2, bert_dim)),
        pos_emb=w(ks[2], (max_seq, bert_dim)),
        lne_g=jnp.ones((1, bert_dim), f32), lne_b=jnp.zeros((1, bert_dim), f32),
        w_qkv=w(ks[3], (bert_dim, 3 * bert_dim)),
        b_qkv=jnp.zeros((1, 3 * bert_dim), f32),
        w_o=w(ks[4], (bert_dim, bert_dim)), b_o=jnp.zeros((1, bert_dim), f32),
        ln1_g=jnp.ones((1, bert_dim), f32), ln1_b=jnp.zeros((1, bert_dim), f32),
        w1=w(ks[5], (bert_dim, ffn_dim)), b1=jnp.zeros((1, ffn_dim), f32),
        w2=w(ks[6], (ffn_dim, bert_dim)), b2=jnp.zeros((1, bert_dim), f32),
        ln2_g=jnp.ones((1, bert_dim), f32), ln2_b=jnp.zeros((1, bert_dim), f32),
        w_in=w(ks[7], (bert_dim, hidden_dim)),
        b_in=jnp.zeros((1, hidden_dim), f32),
        w_msg=w(ks[8], (num_heads, hidden_dim // num_heads, hidden_dim // num_heads)),
        w_g=w(ks[9], (hidden_dim, 3 * hidden_dim)),
        u_g=w(ks[10], (hidden_dim, 3 * hidden_dim)),
        b_g=jnp.zeros((1, 3 * hidden_dim), f32),
        w_fc=w(ks[11], (hidden_dim, polarities)),
        b_fc=jnp.zeros((1, polarities), f32),
    )


if __name__ == "__main__":
    B, S = 4, 8
    bert_dim, hidden_dim, num_heads, polarities = 32, 32, 2, 3
    vocab = 30

    key = jax.random.PRNGKey(0)
    k_p, k_ids, k_adj = jax.random.split(key, 3)

    params = init_params(
        k_p, vocab=vocab, max_seq=S, bert_dim=bert_dim, ffn_dim=4 * bert_dim,
        hidden_dim=hidden_dim, num_heads=num_heads, polarities=polarities)

    # module inputs: (text_bert_indices, bert_segments_indices, dependency_graph)
    text_bert_indices = jax.random.randint(k_ids, (B, S), 0, vocab)
    bert_segments_indices = jnp.concatenate(
        [jnp.zeros((B, S // 2), jnp.int32), jnp.ones((B, S // 2), jnp.int32)], axis=1)
    dep = (jax.random.uniform(k_adj, (B, S, S)) < 0.3).astype(jnp.float32)
    dependency_graph = jnp.clip(
        dep + jnp.transpose(dep, (0, 2, 1)) + jnp.eye(S, dtype=jnp.float32)[None],
        0.0, 1.0)

    # glue: BERT embedding lookup (gather) stays in plain JAX
    emb = (params['word_emb'][text_bert_indices]
           + params['seg_emb'][bert_segments_indices]
           + params['pos_emb'][None, :, :]).astype(jnp.float32)

    logits = bert_ggnn_forward(params, emb, dependency_graph,
                               num_heads=num_heads, batch_block=2)
    logits = jax.block_until_ready(logits)

    assert logits.shape == (B, polarities), logits.shape
    assert bool(jnp.all(jnp.isfinite(logits)))
    print("KERNEL_OK")
</pallas_src>

<mosaic_0001>
module attributes {stable_mosaic.version = 11 : i64} {
  func.func @bert_ggnn_kernel(%arg0: i32, %arg1: memref<2x8x32xf32, #tpu.memory_space<vmem>>, %arg2: memref<2x8x8xf32, #tpu.memory_space<vmem>>, %arg3: memref<1x32xf32, #tpu.memory_space<vmem>>, %arg4: memref<1x32xf32, #tpu.memory_space<vmem>>, %arg5: memref<32x96xbf16, #tpu.memory_space<vmem>>, %arg6: memref<1x96xf32, #tpu.memory_space<vmem>>, %arg7: memref<2x16x32xbf16, #tpu.memory_space<vmem>>, %arg8: memref<1x32xf32, #tpu.memory_space<vmem>>, %arg9: memref<1x32xf32, #tpu.memory_space<vmem>>, %arg10: memref<1x32xf32, #tpu.memory_space<vmem>>, %arg11: memref<32x128xbf16, #tpu.memory_space<vmem>>, %arg12: memref<1x128xf32, #tpu.memory_space<vmem>>, %arg13: memref<128x32xbf16, #tpu.memory_space<vmem>>, %arg14: memref<1x32xf32, #tpu.memory_space<vmem>>, %arg15: memref<1x32xf32, #tpu.memory_space<vmem>>, %arg16: memref<1x32xf32, #tpu.memory_space<vmem>>, %arg17: memref<32x32xbf16, #tpu.memory_space<vmem>>, %arg18: memref<1x32xf32, #tpu.memory_space<vmem>>, %arg19: memref<32x32xbf16, #tpu.memory_space<vmem>>, %arg20: memref<32x32xbf16, #tpu.memory_space<vmem>>, %arg21: memref<32x32xbf16, #tpu.memory_space<vmem>>, %arg22: memref<32x32xbf16, #tpu.memory_space<vmem>>, %arg23: memref<32x32xbf16, #tpu.memory_space<vmem>>, %arg24: memref<32x32xbf16, #tpu.memory_space<vmem>>, %arg25: memref<32x32xbf16, #tpu.memory_space<vmem>>, %arg26: memref<1x32xf32, #tpu.memory_space<vmem>>, %arg27: memref<1x32xf32, #tpu.memory_space<vmem>>, %arg28: memref<1x32xf32, #tpu.memory_space<vmem>>, %arg29: memref<32x3xbf16, #tpu.memory_space<vmem>>, %arg30: memref<1x3xf32, #tpu.memory_space<vmem>>, %arg31: memref<2x1x3xf32, #tpu.memory_space<vmem>>) attributes {dimension_semantics = [#tpu.dimension_semantics<parallel>], iteration_bounds = array<i64: 2>, scalar_prefetch = 0 : i64, scratch_operands = 0 : i64, tpu.core_type = #tpu.core_type<tc>, window_params = [{transform_indices = @transform_0, window_bounds = array<i64: 2, 8, 32>}, {transform_indices = @transform_1, window_bounds = array<i64: 2, 8, 8>}, {pipeline_mode = #tpu.pipeline_mode<synchronous>, transform_indices = @transform_2, window_bounds = array<i64: 1, 32>}, {pipeline_mode = #tpu.pipeline_mode<synchronous>, transform_indices = @transform_3, window_bounds = array<i64: 1, 32>}, {pipeline_mode = #tpu.pipeline_mode<synchronous>, transform_indices = @transform_4, window_bounds = array<i64: 32, 96>}, {pipeline_mode = #tpu.pipeline_mode<synchronous>, transform_indices = @transform_5, window_bounds = array<i64: 1, 96>}, {pipeline_mode = #tpu.pipeline_mode<synchronous>, transform_indices = @transform_6, window_bounds = array<i64: 2, 16, 32>}, {pipeline_mode = #tpu.pipeline_mode<synchronous>, transform_indices = @transform_7, window_bounds = array<i64: 1, 32>}, {pipeline_mode = #tpu.pipeline_mode<synchronous>, transform_indices = @transform_8, window_bounds = array<i64: 1, 32>}, {pipeline_mode = #tpu.pipeline_mode<synchronous>, transform_indices = @transform_9, window_bounds = array<i64: 1, 32>}, {pipeline_mode = #tpu.pipeline_mode<synchronous>, transform_indices = @transform_10, window_bounds = array<i64: 32, 128>}, {pipeline_mode = #tpu.pipeline_mode<synchronous>, transform_indices = @transform_11, window_bounds = array<i64: 1, 128>}, {pipeline_mode = #tpu.pipeline_mode<synchronous>, transform_indices = @transform_12, window_bounds = array<i64: 128, 32>}, {pipeline_mode = #tpu.pipeline_mode<synchronous>, transform_indices = @transform_13, window_bounds = array<i64: 1, 32>}, {pipeline_mode = #tpu.pipeline_mode<synchronous>, transform_indices = @transform_14, window_bounds = array<i64: 1, 32>}, {pipeline_mode = #tpu.pipeline_mode<synchronous>, transform_indices = @transform_15, window_bounds = array<i64: 1, 32>}, {pipeline_mode = #tpu.pipeline_mode<synchronous>, transform_indices = @transform_16, window_bounds = array<i64: 32, 32>}, {pipeline_mode = #tpu.pipeline_mode<synchronous>, transform_indices = @transform_17, window_bounds = array<i64: 1, 32>}, {pipeline_mode = #tpu.pipeline_mode<synchronous>, transform_indices = @transform_18, window_bounds = array<i64: 32, 32>}, {pipeline_mode = #tpu.pipeline_mode<synchronous>, transform_indices = @transform_19, window_bounds = array<i64: 32, 32>}, {pipeline_mode = #tpu.pipeline_mode<synchronous>, transform_indices = @transform_20, window_bounds = array<i64: 32, 32>}, {pipeline_mode = #tpu.pipeline_mode<synchronous>, transform_indices = @transform_21, window_bounds = array<i64: 32, 32>}, {pipeline_mode = #tpu.pipeline_mode<synchronous>, transform_indices = @transform_22, window_bounds = array<i64: 32, 32>}, {pipeline_mode = #tpu.pipeline_mode<synchronous>, transform_indices = @transform_23, window_bounds = array<i64: 32, 32>}, {pipeline_mode = #tpu.pipeline_mode<synchronous>, transform_indices = @transform_24, window_bounds = array<i64: 32, 32>}, {pipeline_mode = #tpu.pipeline_mode<synchronous>, transform_indices = @transform_25, window_bounds = array<i64: 1, 32>}, {pipeline_mode = #tpu.pipeline_mode<synchronous>, transform_indices = @transform_26, window_bounds = array<i64: 1, 32>}, {pipeline_mode = #tpu.pipeline_mode<synchronous>, transform_indices = @transform_27, window_bounds = array<i64: 1, 32>}, {pipeline_mode = #tpu.pipeline_mode<synchronous>, transform_indices = @transform_28, window_bounds = array<i64: 32, 3>}, {pipeline_mode = #tpu.pipeline_mode<synchronous>, transform_indices = @transform_29, window_bounds = array<i64: 1, 3>}, {transform_indices = @transform_30, window_bounds = array<i64: 2, 1, 3>}]} {
    %c0 = arith.constant 0 : index
    %c0_0 = arith.constant 0 : index
    %c0_1 = arith.constant 0 : index
    %0 = vector.load %arg1[%c0, %c0_0, %c0_1] : memref<2x8x32xf32, #tpu.memory_space<vmem>>, vector<2x8x32xf32>
    %1 = vector.shape_cast %0 : vector<2x8x32xf32> to vector<16x32xf32>
    %c0_2 = arith.constant 0 : index
    %c0_3 = arith.constant 0 : index
    %2 = vector.load %arg3[%c0_2, %c0_3] : memref<1x32xf32, #tpu.memory_space<vmem>>, vector<1x32xf32>
    %c0_4 = arith.constant 0 : index
    %c0_5 = arith.constant 0 : index
    %3 = vector.load %arg4[%c0_4, %c0_5] : memref<1x32xf32, #tpu.memory_space<vmem>>, vector<1x32xf32>
    %cst = arith.constant dense<0.000000e+00> : vector<16xf32>
    %4 = vector.multi_reduction <add>, %1, %cst [1] : vector<16x32xf32> to vector<16xf32>
    %5 = vector.shape_cast %4 : vector<16xf32> to vector<16x1xf32>
    %cst_6 = arith.constant 3.200000e+01 : f32
    %6 = vector.broadcast %cst_6 : f32 to vector<16x1xf32>
    %7 = arith.divf %5, %6 : vector<16x1xf32>
    %8 = vector.broadcast %7 : vector<16x1xf32> to vector<16x32xf32>
    %9 = arith.subf %1, %8 : vector<16x32xf32>
    %10 = arith.mulf %9, %9 : vector<16x32xf32>
    %cst_7 = arith.constant dense<0.000000e+00> : vector<16xf32>
    %11 = vector.multi_reduction <add>, %10, %cst_7 [1] : vector<16x32xf32> to vector<16xf32>
    %12 = vector.shape_cast %11 : vector<16xf32> to vector<16x1xf32>
    %cst_8 = arith.constant 3.200000e+01 : f32
    %13 = vector.broadcast %cst_8 : f32 to vector<16x1xf32>
    %14 = arith.divf %12, %13 : vector<16x1xf32>
    %15 = vector.broadcast %7 : vector<16x1xf32> to vector<16x32xf32>
    %16 = arith.subf %1, %15 : vector<16x32xf32>
    %cst_9 = arith.constant 9.99999996E-13 : f32
    %17 = vector.broadcast %cst_9 : f32 to vector<16x1xf32>
    %18 = arith.addf %14, %17 : vector<16x1xf32>
    %19 = math.rsqrt %18 : vector<16x1xf32>
    %20 = vector.broadcast %19 : vector<16x1xf32> to vector<16x32xf32>
    %21 = arith.mulf %16, %20 : vector<16x32xf32>
    %22 = vector.broadcast %2 : vector<1x32xf32> to vector<16x32xf32>
    %23 = arith.mulf %21, %22 : vector<16x32xf32>
    %24 = vector.broadcast %3 : vector<1x32xf32> to vector<16x32xf32>
    %25 = arith.addf %23, %24 : vector<16x32xf32>
    %c0_10 = arith.constant 0 : index
    %c0_11 = arith.constant 0 : index
    %26 = vector.load %arg5[%c0_10, %c0_11] : memref<32x96xbf16, #tpu.memory_space<vmem>>, vector<32x96xbf16>
    %27 = arith.truncf %25 : vector<16x32xf32> to vector<16x32xbf16>
    %cst_12 = arith.constant dense<0.000000e+00> : vector<16x96xf32>
    %28 = tpu.matmul %27, %26, %cst_12 {dimension_numbers = #tpu.dot_dimension_numbers<[1], [0], [0], [1], [0, 0, 1, 1], [], []>} : vector<16x32xbf16>, vector<32x96xbf16>, vector<16x96xf32> -> vector<16x96xf32>
    %c0_13 = arith.constant 0 : index
    %c0_14 = arith.constant 0 : index
    %29 = vector.load %arg6[%c0_13, %c0_14] : memref<1x96xf32, #tpu.memory_space<vmem>>, vector<1x96xf32>
    %30 = vector.broadcast %29 : vector<1x96xf32> to vector<16x96xf32>
    %31 = arith.addf %28, %30 : vector<16x96xf32>
    %32 = arith.truncf %31 : vector<16x96xf32> to vector<16x96xbf16>
    %33 = vector.extract_strided_slice %32 {offsets = [0, 0], sizes = [16, 16], strides = [1, 1]} : vector<16x96xbf16> to vector<16x16xbf16>
    %34 = vector.shape_cast %33 : vector<16x16xbf16> to vector<2x8x16xbf16>
    %35 = vector.extract_strided_slice %32 {offsets = [0, 32], sizes = [16, 16], strides = [1, 1]} : vector<16x96xbf16> to vector<16x16xbf16>
    %36 = vector.shape_cast %35 : vector<16x16xbf16> to vector<2x8x16xbf16>
    %37 = vector.extract_strided_slice %32 {offsets = [0, 64], sizes = [16, 16], strides = [1, 1]} : vector<16x96xbf16> to vector<16x16xbf16>
    %38 = vector.shape_cast %37 : vector<16x16xbf16> to vector<2x8x16xbf16>
    "tpu.trace_start"() <{level = 10 : i32, message = "bqd,bkd->bqk"}> : () -> ()
    %cst_15 = arith.constant dense<0.000000e+00> : vector<2x8x8xf32>
    %39 = tpu.matmul %34, %36, %cst_15 {dimension_numbers = #tpu.dot_dimension_numbers<[2], [2], [1], [1], [0, 0, 0, 1, 1, 1], [0], [0]>} : vector<2x8x16xbf16>, vector<2x8x16xbf16>, vector<2x8x8xf32> -> vector<2x8x8xf32>
    "tpu.trace_stop"() : () -> ()
    %cst_16 = arith.constant dense<0xFF800000> : vector<2x8xf32>
    %40 = vector.multi_reduction <maximumf>, %39, %cst_16 [2] : vector<2x8x8xf32> to vector<2x8xf32>
    %41 = vector.shape_cast %40 : vector<2x8xf32> to vector<2x8x1xf32>
    %42 = vector.broadcast %41 : vector<2x8x1xf32> to vector<2x8x8xf32>
    %43 = arith.subf %39, %42 : vector<2x8x8xf32>
    %44 = math.exp %43 : vector<2x8x8xf32>
    %cst_17 = arith.constant dense<0.000000e+00> : vector<2x8xf32>
    %45 = vector.multi_reduction <add>, %44, %cst_17 [2] : vector<2x8x8xf32> to vector<2x8xf32>
    %46 = vector.shape_cast %45 : vector<2x8xf32> to vector<2x8x1xf32>
    %47 = vector.broadcast %46 : vector<2x8x1xf32> to vector<2x8x8xf32>
    %48 = arith.divf %44, %47 : vector<2x8x8xf32>
    %49 = arith.truncf %48 : vector<2x8x8xf32> to vector<2x8x8xbf16>
    "tpu.trace_start"() <{level = 10 : i32, message = "bqk,bkd->bqd"}> : () -> ()
    %cst_18 = arith.constant dense<0.000000e+00> : vector<2x8x16xf32>
    %50 = tpu.matmul %49, %38, %cst_18 {dimension_numbers = #tpu.dot_dimension_numbers<[2], [1], [1], [2], [0, 0, 0, 1, 1, 2], [0], [0]>} : vector<2x8x8xbf16>, vector<2x8x16xbf16>, vector<2x8x16xf32> -> vector<2x8x16xf32>
    "tpu.trace_stop"() : () -> ()
    %51 = vector.shape_cast %50 : vector<2x8x16xf32> to vector<16x16xf32>
    %52 = arith.truncf %51 : vector<16x16xf32> to vector<16x16xbf16>
    %c0_19 = arith.constant 0 : index
    %c0_20 = arith.constant 0 : index
    %c0_21 = arith.constant 0 : index
    %53 = vector.load %arg7[%c0_19, %c0_20, %c0_21] : memref<2x16x32xbf16, #tpu.memory_space<vmem>>, vector<1x16x32xbf16>
    %54 = vector.shape_cast %53 : vector<1x16x32xbf16> to vector<16x32xbf16>
    %cst_22 = arith.constant dense<0.000000e+00> : vector<16x32xf32>
    %55 = tpu.matmul %52, %54, %cst_22 {dimension_numbers = #tpu.dot_dimension_numbers<[1], [0], [0], [1], [0, 0, 1, 1], [], []>} : vector<16x16xbf16>, vector<16x32xbf16>, vector<16x32xf32> -> vector<16x32xf32>
    %56 = vector.extract_strided_slice %32 {offsets = [0, 16], sizes = [16, 16], strides = [1, 1]} : vector<16x96xbf16> to vector<16x16xbf16>
    %57 = vector.shape_cast %56 : vector<16x16xbf16> to vector<2x8x16xbf16>
    %58 = vector.extract_strided_slice %32 {offsets = [0, 48], sizes = [16, 16], strides = [1, 1]} : vector<16x96xbf16> to vector<16x16xbf16>
    %59 = vector.shape_cast %58 : vector<16x16xbf16> to vector<2x8x16xbf16>
    %60 = vector.extract_strided_slice %32 {offsets = [0, 80], sizes = [16, 16], strides = [1, 1]} : vector<16x96xbf16> to vector<16x16xbf16>
    %61 = vector.shape_cast %60 : vector<16x16xbf16> to vector<2x8x16xbf16>
    "tpu.trace_start"() <{level = 10 : i32, message = "bqd,bkd->bqk"}> : () -> ()
    %cst_23 = arith.constant dense<0.000000e+00> : vector<2x8x8xf32>
    %62 = tpu.matmul %57, %59, %cst_23 {dimension_numbers = #tpu.dot_dimension_numbers<[2], [2], [1], [1], [0, 0, 0, 1, 1, 1], [0], [0]>} : vector<2x8x16xbf16>, vector<2x8x16xbf16>, vector<2x8x8xf32> -> vector<2x8x8xf32>
    "tpu.trace_stop"() : () -> ()
    %cst_24 = arith.constant dense<0xFF800000> : vector<2x8xf32>
    %63 = vector.multi_reduction <maximumf>, %62, %cst_24 [2] : vector<2x8x8xf32> to vector<2x8xf32>
    %64 = vector.shape_cast %63 : vector<2x8xf32> to vector<2x8x1xf32>
    %65 = vector.broadcast %64 : vector<2x8x1xf32> to vector<2x8x8xf32>
    %66 = arith.subf %62, %65 : vector<2x8x8xf32>
    %67 = math.exp %66 : vector<2x8x8xf32>
    %cst_25 = arith.constant dense<0.000000e+00> : vector<2x8xf32>
    %68 = vector.multi_reduction <add>, %67, %cst_25 [2] : vector<2x8x8xf32> to vector<2x8xf32>
    %69 = vector.shape_cast %68 : vector<2x8xf32> to vector<2x8x1xf32>
    %70 = vector.broadcast %69 : vector<2x8x1xf32> to vector<2x8x8xf32>
    %71 = arith.divf %67, %70 : vector<2x8x8xf32>
    %72 = arith.truncf %71 : vector<2x8x8xf32> to vector<2x8x8xbf16>
    "tpu.trace_start"() <{level = 10 : i32, message = "bqk,bkd->bqd"}> : () -> ()
    %cst_26 = arith.constant dense<0.000000e+00> : vector<2x8x16xf32>
    %73 = tpu.matmul %72, %61, %cst_26 {dimension_numbers = #tpu.dot_dimension_numbers<[2], [1], [1], [2], [0, 0, 0, 1, 1, 2], [0], [0]>} : vector<2x8x8xbf16>, vector<2x8x16xbf16>, vector<2x8x16xf32> -> vector<2x8x16xf32>
    "tpu.trace_stop"() : () -> ()
    %74 = vector.shape_cast %73 : vector<2x8x16xf32> to vector<16x16xf32>
    %75 = arith.truncf %74 : vector<16x16xf32> to vector<16x16xbf16>
    %c1 = arith.constant 1 : index
    %c0_27 = arith.constant 0 : index
    %c0_28 = arith.constant 0 : index
    %76 = vector.load %arg7[%c1, %c0_27, %c0_28] : memref<2x16x32xbf16, #tpu.memory_space<vmem>>, vector<1x16x32xbf16>
    %77 = vector.shape_cast %76 : vector<1x16x32xbf16> to vector<16x32xbf16>
    %cst_29 = arith.constant dense<0.000000e+00> : vector<16x32xf32>
    %78 = tpu.matmul %75, %77, %cst_29 {dimension_numbers = #tpu.dot_dimension_numbers<[1], [0], [0], [1], [0, 0, 1, 1], [], []>} : vector<16x16xbf16>, vector<16x32xbf16>, vector<16x32xf32> -> vector<16x32xf32>
    %79 = arith.addf %55, %78 : vector<16x32xf32>
    %c0_30 = arith.constant 0 : index
    %c0_31 = arith.constant 0 : index
    %80 = vector.load %arg8[%c0_30, %c0_31] : memref<1x32xf32, #tpu.memory_space<vmem>>, vector<1x32xf32>
    %81 = vector.broadcast %80 : vector<1x32xf32> to vector<16x32xf32>
    %82 = arith.addf %79, %81 : vector<16x32xf32>
    %83 = arith.addf %25, %82 : vector<16x32xf32>
    %c0_32 = arith.constant 0 : index
    %c0_33 = arith.constant 0 : index
    %84 = vector.load %arg9[%c0_32, %c0_33] : memref<1x32xf32, #tpu.memory_space<vmem>>, vector<1x32xf32>
    %c0_34 = arith.constant 0 : index
    %c0_35 = arith.constant 0 : index
    %85 = vector.load %arg10[%c0_34, %c0_35] : memref<1x32xf32, #tpu.memory_space<vmem>>, vector<1x32xf32>
    %cst_36 = arith.constant dense<0.000000e+00> : vector<16xf32>
    %86 = vector.multi_reduction <add>, %83, %cst_36 [1] : vector<16x32xf32> to vector<16xf32>
    %87 = vector.shape_cast %86 : vector<16xf32> to vector<16x1xf32>
    %cst_37 = arith.constant 3.200000e+01 : f32
    %88 = vector.broadcast %cst_37 : f32 to vector<16x1xf32>
    %89 = arith.divf %87, %88 : vector<16x1xf32>
    %90 = vector.broadcast %89 : vector<16x1xf32> to vector<16x32xf32>
    %91 = arith.subf %83, %90 : vector<16x32xf32>
    %92 = arith.mulf %91, %91 : vector<16x32xf32>
    %cst_38 = arith.constant dense<0.000000e+00> : vector<16xf32>
    %93 = vector.multi_reduction <add>, %92, %cst_38 [1] : vector<16x32xf32> to vector<16xf32>
    %94 = vector.shape_cast %93 : vector<16xf32> to vector<16x1xf32>
    %cst_39 = arith.constant 3.200000e+01 : f32
    %95 = vector.broadcast %cst_39 : f32 to vector<16x1xf32>
    %96 = arith.divf %94, %95 : vector<16x1xf32>
    %97 = vector.broadcast %89 : vector<16x1xf32> to vector<16x32xf32>
    %98 = arith.subf %83, %97 : vector<16x32xf32>
    %cst_40 = arith.constant 9.99999996E-13 : f32
    %99 = vector.broadcast %cst_40 : f32 to vector<16x1xf32>
    %100 = arith.addf %96, %99 : vector<16x1xf32>
    %101 = math.rsqrt %100 : vector<16x1xf32>
    %102 = vector.broadcast %101 : vector<16x1xf32> to vector<16x32xf32>
    %103 = arith.mulf %98, %102 : vector<16x32xf32>
    %104 = vector.broadcast %84 : vector<1x32xf32> to vector<16x32xf32>
    %105 = arith.mulf %103, %104 : vector<16x32xf32>
    %106 = vector.broadcast %85 : vector<1x32xf32> to vector<16x32xf32>
    %107 = arith.addf %105, %106 : vector<16x32xf32>
    %c0_41 = arith.constant 0 : index
    %c0_42 = arith.constant 0 : index
    %108 = vector.load %arg11[%c0_41, %c0_42] : memref<32x128xbf16, #tpu.memory_space<vmem>>, vector<32x128xbf16>
    %109 = arith.truncf %107 : vector<16x32xf32> to vector<16x32xbf16>
    %cst_43 = arith.constant dense<0.000000e+00> : vector<16x128xf32>
    %110 = tpu.matmul %109, %108, %cst_43 {dimension_numbers = #tpu.dot_dimension_numbers<[1], [0], [0], [1], [0, 0, 1, 1], [], []>} : vector<16x32xbf16>, vector<32x128xbf16>, vector<16x128xf32> -> vector<16x128xf32>
    %c0_44 = arith.constant 0 : index
    %c0_45 = arith.constant 0 : index
    %111 = vector.load %arg12[%c0_44, %c0_45] : memref<1x128xf32, #tpu.memory_space<vmem>>, vector<1x128xf32>
    %112 = vector.broadcast %111 : vector<1x128xf32> to vector<16x128xf32>
    %113 = arith.addf %110, %112 : vector<16x128xf32>
    %114 = arith.mulf %113, %113 : vector<16x128xf32>
    %115 = arith.mulf %113, %114 : vector<16x128xf32>
    %cst_46 = arith.constant 4.471500e-02 : f32
    %116 = vector.broadcast %cst_46 : f32 to vector<16x128xf32>
    %117 = arith.mulf %116, %115 : vector<16x128xf32>
    %118 = arith.addf %113, %117 : vector<16x128xf32>
    %cst_47 = arith.constant 0.797884583 : f32
    %119 = vector.broadcast %cst_47 : f32 to vector<16x128xf32>
    %120 = arith.mulf %119, %118 : vector<16x128xf32>
    %121 = math.tanh %120 : vector<16x128xf32>
    %cst_48 = arith.constant 1.000000e+00 : f32
    %122 = vector.broadcast %cst_48 : f32 to vector<16x128xf32>
    %123 = arith.addf %122, %121 : vector<16x128xf32>
    %cst_49 = arith.constant 5.000000e-01 : f32
    %124 = vector.broadcast %cst_49 : f32 to vector<16x128xf32>
    %125 = arith.mulf %124, %123 : vector<16x128xf32>
    %126 = arith.mulf %113, %125 : vector<16x128xf32>
    %c0_50 = arith.constant 0 : index
    %c0_51 = arith.constant 0 : index
    %127 = vector.load %arg13[%c0_50, %c0_51] : memref<128x32xbf16, #tpu.memory_space<vmem>>, vector<128x32xbf16>
    %128 = arith.truncf %126 : vector<16x128xf32> to vector<16x128xbf16>
    %cst_52 = arith.constant dense<0.000000e+00> : vector<16x32xf32>
    %129 = tpu.matmul %128, %127, %cst_52 {dimension_numbers = #tpu.dot_dimension_numbers<[1], [0], [0], [1], [0, 0, 1, 1], [], []>} : vector<16x128xbf16>, vector<128x32xbf16>, vector<16x32xf32> -> vector<16x32xf32>
    %c0_53 = arith.constant 0 : index
    %c0_54 = arith.constant 0 : index
    %130 = vector.load %arg14[%c0_53, %c0_54] : memref<1x32xf32, #tpu.memory_space<vmem>>, vector<1x32xf32>
    %131 = vector.broadcast %130 : vector<1x32xf32> to vector<16x32xf32>
    %132 = arith.addf %129, %131 : vector<16x32xf32>
    %133 = arith.addf %107, %132 : vector<16x32xf32>
    %c0_55 = arith.constant 0 : index
    %c0_56 = arith.constant 0 : index
    %134 = vector.load %arg15[%c0_55, %c0_56] : memref<1x32xf32, #tpu.memory_space<vmem>>, vector<1x32xf32>
    %c0_57 = arith.constant 0 : index
    %c0_58 = arith.constant 0 : index
    %135 = vector.load %arg16[%c0_57, %c0_58] : memref<1x32xf32, #tpu.memory_space<vmem>>, vector<1x32xf32>
    %cst_59 = arith.constant dense<0.000000e+00> : vector<16xf32>
    %136 = vector.multi_reduction <add>, %133, %cst_59 [1] : vector<16x32xf32> to vector<16xf32>
    %137 = vector.shape_cast %136 : vector<16xf32> to vector<16x1xf32>
    %cst_60 = arith.constant 3.200000e+01 : f32
    %138 = vector.broadcast %cst_60 : f32 to vector<16x1xf32>
    %139 = arith.divf %137, %138 : vector<16x1xf32>
    %140 = vector.broadcast %139 : vector<16x1xf32> to vector<16x32xf32>
    %141 = arith.subf %133, %140 : vector<16x32xf32>
    %142 = arith.mulf %141, %141 : vector<16x32xf32>
    %cst_61 = arith.constant dense<0.000000e+00> : vector<16xf32>
    %143 = vector.multi_reduction <add>, %142, %cst_61 [1] : vector<16x32xf32> to vector<16xf32>
    %144 = vector.shape_cast %143 : vector<16xf32> to vector<16x1xf32>
    %cst_62 = arith.constant 3.200000e+01 : f32
    %145 = vector.broadcast %cst_62 : f32 to vector<16x1xf32>
    %146 = arith.divf %144, %145 : vector<16x1xf32>
    %147 = vector.broadcast %139 : vector<16x1xf32> to vector<16x32xf32>
    %148 = arith.subf %133, %147 : vector<16x32xf32>
    %cst_63 = arith.constant 9.99999996E-13 : f32
    %149 = vector.broadcast %cst_63 : f32 to vector<16x1xf32>
    %150 = arith.addf %146, %149 : vector<16x1xf32>
    %151 = math.rsqrt %150 : vector<16x1xf32>
    %152 = vector.broadcast %151 : vector<16x1xf32> to vector<16x32xf32>
    %153 = arith.mulf %148, %152 : vector<16x32xf32>
    %154 = vector.broadcast %134 : vector<1x32xf32> to vector<16x32xf32>
    %155 = arith.mulf %153, %154 : vector<16x32xf32>
    %156 = vector.broadcast %135 : vector<1x32xf32> to vector<16x32xf32>
    %157 = arith.addf %155, %156 : vector<16x32xf32>
    %c0_64 = arith.constant 0 : index
    %c0_65 = arith.constant 0 : index
    %158 = vector.load %arg17[%c0_64, %c0_65] : memref<32x32xbf16, #tpu.memory_space<vmem>>, vector<32x32xbf16>
    %159 = arith.truncf %157 : vector<16x32xf32> to vector<16x32xbf16>
    %cst_66 = arith.constant dense<0.000000e+00> : vector<16x32xf32>
    %160 = tpu.matmul %159, %158, %cst_66 {dimension_numbers = #tpu.dot_dimension_numbers<[1], [0], [0], [1], [0, 0, 1, 1], [], []>} : vector<16x32xbf16>, vector<32x32xbf16>, vector<16x32xf32> -> vector<16x32xf32>
    %c0_67 = arith.constant 0 : index
    %c0_68 = arith.constant 0 : index
    %161 = vector.load %arg18[%c0_67, %c0_68] : memref<1x32xf32, #tpu.memory_space<vmem>>, vector<1x32xf32>
    %162 = vector.broadcast %161 : vector<1x32xf32> to vector<16x32xf32>
    %163 = arith.addf %160, %162 : vector<16x32xf32>
    %c0_69 = arith.constant 0 : index
    %c0_70 = arith.constant 0 : index
    %164 = vector.load %arg19[%c0_69, %c0_70] : memref<32x32xbf16, #tpu.memory_space<vmem>>, vector<32x32xbf16>
    %165 = arith.truncf %163 : vector<16x32xf32> to vector<16x32xbf16>
    %cst_71 = arith.constant dense<0.000000e+00> : vector<16x32xf32>
    %166 = tpu.matmul %165, %164, %cst_71 {dimension_numbers = #tpu.dot_dimension_numbers<[1], [0], [0], [1], [0, 0, 1, 1], [], []>} : vector<16x32xbf16>, vector<32x32xbf16>, vector<16x32xf32> -> vector<16x32xf32>
    %167 = arith.truncf %166 : vector<16x32xf32> to vector<16x32xbf16>
    %c0_72 = arith.constant 0 : index
    %c0_73 = arith.constant 0 : index
    %c0_74 = arith.constant 0 : index
    %168 = vector.load %arg2[%c0_72, %c0_73, %c0_74] : memref<2x8x8xf32, #tpu.memory_space<vmem>>, vector<2x8x8xf32>
    %169 = arith.truncf %168 : vector<2x8x8xf32> to vector<2x8x8xbf16>
    %170 = vector.shape_cast %167 : vector<16x32xbf16> to vector<2x8x32xbf16>
    "tpu.trace_start"() <{level = 10 : i32, message = "bij,bjh->bih"}> : () -> ()
    %cst_75 = arith.constant dense<0.000000e+00> : vector<2x8x32xf32>
    %171 = tpu.matmul %169, %170, %cst_75 {dimension_numbers = #tpu.dot_dimension_numbers<[2], [1], [1], [2], [0, 0, 0, 1, 1, 2], [0], [0]>} : vector<2x8x8xbf16>, vector<2x8x32xbf16>, vector<2x8x32xf32> -> vector<2x8x32xf32>
    "tpu.trace_stop"() : () -> ()
    %172 = vector.shape_cast %171 : vector<2x8x32xf32> to vector<16x32xf32>
    %c0_76 = arith.constant 0 : index
    %c0_77 = arith.constant 0 : index
    %173 = vector.load %arg20[%c0_76, %c0_77] : memref<32x32xbf16, #tpu.memory_space<vmem>>, vector<32x32xbf16>
    %174 = arith.truncf %172 : vector<16x32xf32> to vector<16x32xbf16>
    %cst_78 = arith.constant dense<0.000000e+00> : vector<16x32xf32>
    %175 = tpu.matmul %174, %173, %cst_78 {dimension_numbers = #tpu.dot_dimension_numbers<[1], [0], [0], [1], [0, 0, 1, 1], [], []>} : vector<16x32xbf16>, vector<32x32xbf16>, vector<16x32xf32> -> vector<16x32xf32>
    %c0_79 = arith.constant 0 : index
    %c0_80 = arith.constant 0 : index
    %176 = vector.load %arg23[%c0_79, %c0_80] : memref<32x32xbf16, #tpu.memory_space<vmem>>, vector<32x32xbf16>
    %177 = arith.truncf %163 : vector<16x32xf32> to vector<16x32xbf16>
    %cst_81 = arith.constant dense<0.000000e+00> : vector<16x32xf32>
    %178 = tpu.matmul %177, %176, %cst_81 {dimension_numbers = #tpu.dot_dimension_numbers<[1], [0], [0], [1], [0, 0, 1, 1], [], []>} : vector<16x32xbf16>, vector<32x32xbf16>, vector<16x32xf32> -> vector<16x32xf32>
    %179 = arith.addf %175, %178 : vector<16x32xf32>
    %c0_82 = arith.constant 0 : index
    %c0_83 = arith.constant 0 : index
    %180 = vector.load %arg26[%c0_82, %c0_83] : memref<1x32xf32, #tpu.memory_space<vmem>>, vector<1x32xf32>
    %181 = vector.broadcast %180 : vector<1x32xf32> to vector<16x32xf32>
    %182 = arith.addf %179, %181 : vector<16x32xf32>
    %183 = arith.negf %182 : vector<16x32xf32>
    %184 = math.exp %183 : vector<16x32xf32>
    %cst_84 = arith.constant 1.000000e+00 : f32
    %185 = vector.broadcast %cst_84 : f32 to vector<16x32xf32>
    %186 = arith.addf %185, %184 : vector<16x32xf32>
    %187 = arith.divf %185, %186 : vector<16x32xf32>
    %c0_85 = arith.constant 0 : index
    %c0_86 = arith.constant 0 : index
    %188 = vector.load %arg21[%c0_85, %c0_86] : memref<32x32xbf16, #tpu.memory_space<vmem>>, vector<32x32xbf16>
    %189 = arith.truncf %172 : vector<16x32xf32> to vector<16x32xbf16>
    %cst_87 = arith.constant dense<0.000000e+00> : vector<16x32xf32>
    %190 = tpu.matmul %189, %188, %cst_87 {dimension_numbers = #tpu.dot_dimension_numbers<[1], [0], [0], [1], [0, 0, 1, 1], [], []>} : vector<16x32xbf16>, vector<32x32xbf16>, vector<16x32xf32> -> vector<16x32xf32>
    %c0_88 = arith.constant 0 : index
    %c0_89 = arith.constant 0 : index
    %191 = vector.load %arg24[%c0_88, %c0_89] : memref<32x32xbf16, #tpu.memory_space<vmem>>, vector<32x32xbf16>
    %192 = arith.truncf %163 : vector<16x32xf32> to vector<16x32xbf16>
    %cst_90 = arith.constant dense<0.000000e+00> : vector<16x32xf32>
    %193 = tpu.matmul %192, %191, %cst_90 {dimension_numbers = #tpu.dot_dimension_numbers<[1], [0], [0], [1], [0, 0, 1, 1], [], []>} : vector<16x32xbf16>, vector<32x32xbf16>, vector<16x32xf32> -> vector<16x32xf32>
    %194 = arith.addf %190, %193 : vector<16x32xf32>
    %c0_91 = arith.constant 0 : index
    %c0_92 = arith.constant 0 : index
    %195 = vector.load %arg27[%c0_91, %c0_92] : memref<1x32xf32, #tpu.memory_space<vmem>>, vector<1x32xf32>
    %196 = vector.broadcast %195 : vector<1x32xf32> to vector<16x32xf32>
    %197 = arith.addf %194, %196 : vector<16x32xf32>
    %198 = arith.negf %197 : vector<16x32xf32>
    %199 = math.exp %198 : vector<16x32xf32>
    %cst_93 = arith.constant 1.000000e+00 : f32
    %200 = vector.broadcast %cst_93 : f32 to vector<16x32xf32>
    %201 = arith.addf %200, %199 : vector<16x32xf32>
    %202 = arith.divf %200, %201 : vector<16x32xf32>
    %c0_94 = arith.constant 0 : index
    %c0_95 = arith.constant 0 : index
    %203 = vector.load %arg22[%c0_94, %c0_95] : memref<32x32xbf16, #tpu.memory_space<vmem>>, vector<32x32xbf16>
    %204 = arith.truncf %172 : vector<16x32xf32> to vector<16x32xbf16>
    %cst_96 = arith.constant dense<0.000000e+00> : vector<16x32xf32>
    %205 = tpu.matmul %204, %203, %cst_96 {dimension_numbers = #tpu.dot_dimension_numbers<[1], [0], [0], [1], [0, 0, 1, 1], [], []>} : vector<16x32xbf16>, vector<32x32xbf16>, vector<16x32xf32> -> vector<16x32xf32>
    %c0_97 = arith.constant 0 : index
    %c0_98 = arith.constant 0 : index
    %206 = vector.load %arg28[%c0_97, %c0_98] : memref<1x32xf32, #tpu.memory_space<vmem>>, vector<1x32xf32>
    %207 = vector.broadcast %206 : vector<1x32xf32> to vector<16x32xf32>
    %208 = arith.addf %205, %207 : vector<16x32xf32>
    %c0_99 = arith.constant 0 : index
    %c0_100 = arith.constant 0 : index
    %209 = vector.load %arg25[%c0_99, %c0_100] : memref<32x32xbf16, #tpu.memory_space<vmem>>, vector<32x32xbf16>
    %210 = arith.truncf %163 : vector<16x32xf32> to vector<16x32xbf16>
    %cst_101 = arith.constant dense<0.000000e+00> : vector<16x32xf32>
    %211 = tpu.matmul %210, %209, %cst_101 {dimension_numbers = #tpu.dot_dimension_numbers<[1], [0], [0], [1], [0, 0, 1, 1], [], []>} : vector<16x32xbf16>, vector<32x32xbf16>, vector<16x32xf32> -> vector<16x32xf32>
    %212 = arith.mulf %202, %211 : vector<16x32xf32>
    %213 = arith.addf %208, %212 : vector<16x32xf32>
    %214 = math.tanh %213 : vector<16x32xf32>
    %cst_102 = arith.constant 1.000000e+00 : f32
    %215 = vector.broadcast %cst_102 : f32 to vector<16x32xf32>
    %216 = arith.subf %215, %187 : vector<16x32xf32>
    %217 = arith.mulf %216, %214 : vector<16x32xf32>
    %218 = arith.mulf %187, %163 : vector<16x32xf32>
    %219 = arith.addf %217, %218 : vector<16x32xf32>
    %220 = vector.shape_cast %219 : vector<16x32xf32> to vector<2x8x32xf32>
    %221 = vector.extract_strided_slice %220 {offsets = [0, 0, 0], sizes = [2, 1, 32], strides = [1, 1, 1]} : vector<2x8x32xf32> to vector<2x1x32xf32>
    %222 = vector.shape_cast %221 : vector<2x1x32xf32> to vector<2x32xf32>
    %c0_103 = arith.constant 0 : index
    %c0_104 = arith.constant 0 : index
    %223 = vector.load %arg29[%c0_103, %c0_104] : memref<32x3xbf16, #tpu.memory_space<vmem>>, vector<32x3xbf16>
    %224 = arith.truncf %222 : vector<2x32xf32> to vector<2x32xbf16>
    %cst_105 = arith.constant dense<0.000000e+00> : vector<2x3xf32>
    %225 = tpu.matmul %224, %223, %cst_105 {dimension_numbers = #tpu.dot_dimension_numbers<[1], [0], [0], [1], [0, 0, 1, 1], [], []>} : vector<2x32xbf16>, vector<32x3xbf16>, vector<2x3xf32> -> vector<2x3xf32>
    %c0_106 = arith.constant 0 : index
    %c0_107 = arith.constant 0 : index
    %226 = vector.load %arg30[%c0_106, %c0_107] : memref<1x3xf32, #tpu.memory_space<vmem>>, vector<1x3xf32>
    %227 = vector.broadcast %226 : vector<1x3xf32> to vector<2x3xf32>
    %228 = arith.addf %225, %227 : vector<2x3xf32>
    %229 = vector.shape_cast %228 : vector<2x3xf32> to vector<2x1x3xf32>
    %c0_108 = arith.constant 0 : index
    %c0_109 = arith.constant 0 : index
    %c0_110 = arith.constant 0 : index
    %230 = vector.load %arg31[%c0_108, %c0_109, %c0_110] : memref<2x1x3xf32, #tpu.memory_space<vmem>>, vector<2x1x3xf32>
    tpu.vector_store %arg31[%c0_108, %c0_109, %c0_110], %229 {strides = array<i32>} : memref<2x1x3xf32, #tpu.memory_space<vmem>>, vector<2x1x3xf32>,
    return
  }
  func.func @transform_0(%arg0: i32) -> (i32, i32, i32) {
    %c0_i32 = arith.constant 0 : i32
    %c0_i32_0 = arith.constant 0 : i32
    %c0_i32_1 = arith.constant 0 : i32
    return %arg0, %c0_i32, %c0_i32_0 : i32, i32, i32
  }
  func.func @transform_1(%arg0: i32) -> (i32, i32, i32) {
    %c0_i32 = arith.constant 0 : i32
    %c0_i32_0 = arith.constant 0 : i32
    %c0_i32_1 = arith.constant 0 : i32
    return %arg0, %c0_i32, %c0_i32_0 : i32, i32, i32
  }
  func.func @transform_2(%arg0: i32) -> (i32, i32) {
    %c0_i32 = arith.constant 0 : i32
    %c0_i32_0 = arith.constant 0 : i32
    %c0_i32_1 = arith.constant 0 : i32
    return %c0_i32, %c0_i32_0 : i32, i32
  }
  func.func @transform_3(%arg0: i32) -> (i32, i32) {
    %c0_i32 = arith.constant 0 : i32
    %c0_i32_0 = arith.constant 0 : i32
    %c0_i32_1 = arith.constant 0 : i32
    return %c0_i32, %c0_i32_0 : i32, i32
  }
  func.func @transform_4(%arg0: i32) -> (i32, i32) {
    %c0_i32 = arith.constant 0 : i32
    %c0_i32_0 = arith.constant 0 : i32
    %c0_i32_1 = arith.constant 0 : i32
    return %c0_i32, %c0_i32_0 : i32, i32
  }
  func.func @transform_5(%arg0: i32) -> (i32, i32) {
    %c0_i32 = arith.constant 0 : i32
    %c0_i32_0 = arith.constant 0 : i32
    %c0_i32_1 = arith.constant 0 : i32
    return %c0_i32, %c0_i32_0 : i32, i32
  }
  func.func @transform_6(%arg0: i32) -> (i32, i32, i32) {
    %c0_i32 = arith.constant 0 : i32
    %c0_i32_0 = arith.constant 0 : i32
    %c0_i32_1 = arith.constant 0 : i32
    %c0_i32_2 = arith.constant 0 : i32
    return %c0_i32, %c0_i32_0, %c0_i32_1 : i32, i32, i32
  }
  func.func @transform_7(%arg0: i32) -> (i32, i32) {
    %c0_i32 = arith.constant 0 : i32
    %c0_i32_0 = arith.constant 0 : i32
    %c0_i32_1 = arith.constant 0 : i32
    return %c0_i32, %c0_i32_0 : i32, i32
  }
  func.func @transform_8(%arg0: i32) -> (i32, i32) {
    %c0_i32 = arith.constant 0 : i32
    %c0_i32_0 = arith.constant 0 : i32
    %c0_i32_1 = arith.constant 0 : i32
    return %c0_i32, %c0_i32_0 : i32, i32
  }
  func.func @transform_9(%arg0: i32) -> (i32, i32) {
    %c0_i32 = arith.constant 0 : i32
    %c0_i32_0 = arith.constant 0 : i32
    %c0_i32_1 = arith.constant 0 : i32
    return %c0_i32, %c0_i32_0 : i32, i32
  }
  func.func @transform_10(%arg0: i32) -> (i32, i32) {
    %c0_i32 = arith.constant 0 : i32
    %c0_i32_0 = arith.constant 0 : i32
    %c0_i32_1 = arith.constant 0 : i32
    return %c0_i32, %c0_i32_0 : i32, i32
  }
  func.func @transform_11(%arg0: i32) -> (i32, i32) {
    %c0_i32 = arith.constant 0 : i32
    %c0_i32_0 = arith.constant 0 : i32
    %c0_i32_1 = arith.constant 0 : i32
    return %c0_i32, %c0_i32_0 : i32, i32
  }
  func.func @transform_12(%arg0: i32) -> (i32, i32) {
    %c0_i32 = arith.constant 0 : i32
    %c0_i32_0 = arith.constant 0 : i32
    %c0_i32_1 = arith.constant 0 : i32
    return %c0_i32, %c0_i32_0 : i32, i32
  }
  func.func @transform_13(%arg0: i32) -> (i32, i32) {
    %c0_i32 = arith.constant 0 : i32
    %c0_i32_0 = arith.constant 0 : i32
    %c0_i32_1 = arith.constant 0 : i32
    return %c0_i32, %c0_i32_0 : i32, i32
  }
  func.func @transform_14(%arg0: i32) -> (i32, i32) {
    %c0_i32 = arith.constant 0 : i32
    %c0_i32_0 = arith.constant 0 : i32
    %c0_i32_1 = arith.constant 0 : i32
    return %c0_i32, %c0_i32_0 : i32, i32
  }
  func.func @transform_15(%arg0: i32) -> (i32, i32) {
    %c0_i32 = arith.constant 0 : i32
    %c0_i32_0 = arith.constant 0 : i32
    %c0_i32_1 = arith.constant 0 : i32
    return %c0_i32, %c0_i32_0 : i32, i32
  }
  func.func @transform_16(%arg0: i32) -> (i32, i32) {
    %c0_i32 = arith.constant 0 : i32
    %c0_i32_0 = arith.constant 0 : i32
    %c0_i32_1 = arith.constant 0 : i32
    return %c0_i32, %c0_i32_0 : i32, i32
  }
  func.func @transform_17(%arg0: i32) -> (i32, i32) {
    %c0_i32 = arith.constant 0 : i32
    %c0_i32_0 = arith.constant 0 : i32
    %c0_i32_1 = arith.constant 0 : i32
    return %c0_i32, %c0_i32_0 : i32, i32
  }
  func.func @transform_18(%arg0: i32) -> (i32, i32) {
    %c0_i32 = arith.constant 0 : i32
    %c0_i32_0 = arith.constant 0 : i32
    %c0_i32_1 = arith.constant 0 : i32
    return %c0_i32, %c0_i32_0 : i32, i32
  }
  func.func @transform_19(%arg0: i32) -> (i32, i32) {
    %c0_i32 = arith.constant 0 : i32
    %c0_i32_0 = arith.constant 0 : i32
    %c0_i32_1 = arith.constant 0 : i32
    return %c0_i32, %c0_i32_0 : i32, i32
  }
  func.func @transform_20(%arg0: i32) -> (i32, i32) {
    %c0_i32 = arith.constant 0 : i32
    %c0_i32_0 = arith.constant 0 : i32
    %c0_i32_1 = arith.constant 0 : i32
    return %c0_i32, %c0_i32_0 : i32, i32
  }
  func.func @transform_21(%arg0: i32) -> (i32, i32) {
    %c0_i32 = arith.constant 0 : i32
    %c0_i32_0 = arith.constant 0 : i32
    %c0_i32_1 = arith.constant 0 : i32
    return %c0_i32, %c0_i32_0 : i32, i32
  }
  func.func @transform_22(%arg0: i32) -> (i32, i32) {
    %c0_i32 = arith.constant 0 : i32
    %c0_i32_0 = arith.constant 0 : i32
    %c0_i32_1 = arith.constant 0 : i32
    return %c0_i32, %c0_i32_0 : i32, i32
  }
  func.func @transform_23(%arg0: i32) -> (i32, i32) {
    %c0_i32 = arith.constant 0 : i32
    %c0_i32_0 = arith.constant 0 : i32
    %c0_i32_1 = arith.constant 0 : i32
    return %c0_i32, %c0_i32_0 : i32, i32
  }
  func.func @transform_24(%arg0: i32) -> (i32, i32) {
    %c0_i32 = arith.constant 0 : i32
    %c0_i32_0 = arith.constant 0 : i32
    %c0_i32_1 = arith.constant 0 : i32
    return %c0_i32, %c0_i32_0 : i32, i32
  }
  func.func @transform_25(%arg0: i32) -> (i32, i32) {
    %c0_i32 = arith.constant 0 : i32
    %c0_i32_0 = arith.constant 0 : i32
    %c0_i32_1 = arith.constant 0 : i32
    return %c0_i32, %c0_i32_0 : i32, i32
  }
  func.func @transform_26(%arg0: i32) -> (i32, i32) {
    %c0_i32 = arith.constant 0 : i32
    %c0_i32_0 = arith.constant 0 : i32
    %c0_i32_1 = arith.constant 0 : i32
    return %c0_i32, %c0_i32_0 : i32, i32
  }
  func.func @transform_27(%arg0: i32) -> (i32, i32) {
    %c0_i32 = arith.constant 0 : i32
    %c0_i32_0 = arith.constant 0 : i32
    %c0_i32_1 = arith.constant 0 : i32
    return %c0_i32, %c0_i32_0 : i32, i32
  }
  func.func @transform_28(%arg0: i32) -> (i32, i32) {
    %c0_i32 = arith.constant 0 : i32
    %c0_i32_0 = arith.constant 0 : i32
    %c0_i32_1 = arith.constant 0 : i32
    return %c0_i32, %c0_i32_0 : i32, i32
  }
  func.func @transform_29(%arg0: i32) -> (i32, i32) {
    %c0_i32 = arith.constant 0 : i32
    %c0_i32_0 = arith.constant 0 : i32
    %c0_i32_1 = arith.constant 0 : i32
    return %c0_i32, %c0_i32_0 : i32, i32
  }
  func.func @transform_30(%arg0: i32) -> (i32, i32, i32) {
    %c0_i32 = arith.constant 0 : i32
    %c0_i32_0 = arith.constant 0 : i32
    %c0_i32_1 = arith.constant 0 : i32
    return %arg0, %c0_i32, %c0_i32_0 : i32, i32, i32
  }
}

</mosaic_0001>

<llo_original>
// kernel: tpu_custom_call.1
$region0: #{tpu_custom_call.1}
  #allocation0 [shape = 'u32[]', space=smem, size = 0x4, offset = 0x4, fixed_abs, tag = 'smem constant byte address 0x4 - core index']
  #allocation1 [shape = 'u32[144,128]{1,0:T(1,128)}', space=vmem, size = 0x12000, scoped, tag = 'internal scratch']
  %s0 = inlined_call_operand.smem [shape: u32[31], index: -1, kind: input, shape index: {}]
  %s1 = sld [smem:[%s0]]
  %s2 = scalar_lea.smem %s0, 1
  %s3 = sld [smem:[%s2]]
  %s4 = scalar_lea.smem %s0, 2
  %s5 = sld [smem:[%s4]]
  %s6 = scalar_lea.smem %s0, 3
  %s7 = sld [smem:[%s6]]
  %s8 = scalar_lea.smem %s0, 4
  %s9 = sld [smem:[%s8]]
  %s10 = scalar_lea.smem %s0, 5
  %s11 = sld [smem:[%s10]]
  %s12 = scalar_lea.smem %s0, 6
  %s13 = sld [smem:[%s12]]
  %s14 = scalar_lea.smem %s0, 7
  %s15 = sld [smem:[%s14]]
  %s16 = scalar_lea.smem %s0, 8
  %s17 = sld [smem:[%s16]]
  %s18 = scalar_lea.smem %s0, 9
  %s19 = sld [smem:[%s18]]
  %s20 = scalar_lea.smem %s0, 10
  %s21 = sld [smem:[%s20]]
  %s22 = scalar_lea.smem %s0, 11
  %s23 = sld [smem:[%s22]]
  %s24 = scalar_lea.smem %s0, 12
  %s25 = sld [smem:[%s24]]
  %s26 = scalar_lea.smem %s0, 13
  %s27 = sld [smem:[%s26]]
  %s28 = scalar_lea.smem %s0, 14
  %s29 = sld [smem:[%s28]]
  %s30 = scalar_lea.smem %s0, 15
  %s31 = sld [smem:[%s30]]
  %s32 = scalar_lea.smem %s0, 16
  %s33 = sld [smem:[%s32]]
  %s34 = scalar_lea.smem %s0, 17
  %s35 = sld [smem:[%s34]]
  %s36 = scalar_lea.smem %s0, 18
  %s37 = sld [smem:[%s36]]
  %s38 = scalar_lea.smem %s0, 19
  %s39 = sld [smem:[%s38]]
  %s40 = scalar_lea.smem %s0, 20
  %s41 = sld [smem:[%s40]]
  %s42 = scalar_lea.smem %s0, 21
  %s43 = sld [smem:[%s42]]
  %s44 = scalar_lea.smem %s0, 22
  %s45 = sld [smem:[%s44]]
  %s46 = scalar_lea.smem %s0, 23
  %s47 = sld [smem:[%s46]]
  %s48 = scalar_lea.smem %s0, 24
  %s49 = sld [smem:[%s48]]
  %s50 = scalar_lea.smem %s0, 25
  %s51 = sld [smem:[%s50]]
  %s52 = scalar_lea.smem %s0, 26
  %s53 = sld [smem:[%s52]]
  %s54 = scalar_lea.smem %s0, 27
  %s55 = sld [smem:[%s54]]
  %s56 = scalar_lea.smem %s0, 28
  %s57 = sld [smem:[%s56]]
  %s58 = scalar_lea.smem %s0, 29
  %s59 = sld [smem:[%s58]]
  %s60 = scalar_lea.smem %s0, 30
  %s61 = sld [smem:[%s60]]
  %s62 = sld [smem:[#allocation0]]
  $region225: #{tpu_custom_call.1} parent=0
    _
  %s64 = ssub.s32 1, %s62
  %s65 = scalar_select 0, %s64, %s62
  $region1: #{tpu_custom_call.1} parent=0
    #allocation2 [shape = 'u8[512]{0}', space=vmem, size = 0x400, scoped, tag = 'input window, operand 2, single buffered']
    #allocation3 [shape = 's32[2]{0}', space=sflag, size = 0x8, scoped, tag = 'scoped memory for tpu_custom_call.1']
    #allocation4 [shape = 'u8[512]{0}', space=vmem, size = 0x400, scoped, tag = 'input window, operand 3, single buffered']
    #allocation5 [shape = 's32[1]{0}', space=sflag, size = 0x4, scoped, tag = 'scoped memory for tpu_custom_call.1']
    #allocation6 [shape = 'u8[512]{0}', space=vmem, size = 0x400, scoped, tag = 'input window, operand 5, single buffered']
    #allocation7 [shape = 'u8[512]{0}', space=vmem, size = 0x400, scoped, tag = 'input window, operand 7, single buffered']
    #allocation8 [shape = 's32[1]{0}', space=sflag, size = 0x4, scoped, tag = 'scoped memory for tpu_custom_call.1']
    #allocation9 [shape = 'u8[512]{0}', space=vmem, size = 0x400, scoped, tag = 'input window, operand 8, single buffered']
    #allocation10 [shape = 'u8[512]{0}', space=vmem, size = 0x400, scoped, tag = 'input window, operand 9, single buffered']
    #allocation11 [shape = 's32[1]{0}', space=sflag, size = 0x4, scoped, tag = 'scoped memory for tpu_custom_call.1']
    #allocation12 [shape = 'u8[512]{0}', space=vmem, size = 0x400, scoped, tag = 'input window, operand 11, single buffered']
    #allocation13 [shape = 'u8[512]{0}', space=vmem, size = 0x400, scoped, tag = 'input window, operand 13, single buffered']
    #allocation14 [shape = 's32[1]{0}', space=sflag, size = 0x4, scoped, tag = 'scoped memory for tpu_custom_call.1']
    #allocation15 [shape = 'u8[512]{0}', space=vmem, size = 0x400, scoped, tag = 'input window, operand 14, single buffered']
    #allocation16 [shape = 'u8[512]{0}', space=vmem, size = 0x400, scoped, tag = 'input window, operand 15, single buffered']
    #allocation17 [shape = 's32[1]{0}', space=sflag, size = 0x4, scoped, tag = 'scoped memory for tpu_custom_call.1']
    #allocation18 [shape = 'u8[8192]{0}', space=vmem, size = 0x2000, scoped, tag = 'input window, operand 16, single buffered']
    #allocation19 [shape = 'u8[512]{0}', space=vmem, size = 0x400, scoped, tag = 'input window, operand 17, single buffered']
    #allocation20 [shape = 's32[1]{0}', space=sflag, size = 0x4, scoped, tag = 'scoped memory for tpu_custom_call.1']
    #allocation21 [shape = 'u8[8192]{0}', space=vmem, size = 0x2000, scoped, tag = 'input window, operand 19, single buffered']
    #allocation22 [shape = 'u8[8192]{0}', space=vmem, size = 0x2000, scoped, tag = 'input window, operand 20, single buffered']
    #allocation23 [shape = 's32[1]{0}', space=sflag, size = 0x4, scoped, tag = 'scoped memory for tpu_custom_call.1']
    #allocation24 [shape = 'u8[8192]{0}', space=vmem, size = 0x2000, scoped, tag = 'input window, operand 21, single buffered']
    #allocation25 [shape = 'u8[8192]{0}', space=vmem, size = 0x2000, scoped, tag = 'input window, operand 22, single buffered']
    #allocation26 [shape = 's32[1]{0}', space=sflag, size = 0x4, scoped, tag = 'scoped memory for tpu_custom_call.1']
    #allocation27 [shape = 'u8[8192]{0}', space=vmem, size = 0x2000, scoped, tag = 'input window, operand 23, single buffered']
    #allocation28 [shape = 'u8[8192]{0}', space=vmem, size = 0x2000, scoped, tag = 'input window, operand 24, single buffered']
    #allocation29 [shape = 's32[1]{0}', space=sflag, size = 0x4, scoped, tag = 'scoped memory for tpu_custom_call.1']
    %66 = vsyncpa [#allocation3], 0
    %67 = vsyncpa [#allocation5], 0
    %68 = vsyncpa [#allocation8], 0
    %69 = vsyncpa [#allocation11], 0
    %70 = vsyncpa [#allocation14], 0
    %71 = vsyncpa [#allocation17], 0
    %72 = vsyncpa [#allocation20], 0
    %73 = vsyncpa [#allocation23], 0
    %74 = vsyncpa [#allocation26], 0
    %75 = vsyncpa [#allocation29], 0
    loop: start=0, step=1, limit=4
    $region2: #{tpu_custom_call.1} parent=1 // loop_pre_header
      _
    $region3: #{tpu_custom_call.1} parent=1 // loop_header
      %s77 = sphi 0, %s81
      %p78 = scmp.ge.s32.totalorder %s77, 4
      %s87 = sphi 0, %s89
      %s90 = sphi 0, %s87
      %s91 = sphi 0, %s90
      %s107 = sphi 0, %s91
      %s113 = sphi 0, %s115
      %s116 = sphi 0, %s113
      %s117 = sphi 0, %s116
      %s133 = sphi 0, %s117
      %s137 = sphi 0, %s137
      %s139 = sphi 0, %s137
      %s140 = sphi 0, %s139
      %s154 = sphi 0, %s140
      %s158 = sphi 0, %s158
      %s160 = sphi 0, %s158
      %s161 = sphi 0, %s160
      %s175 = sphi 0, %s161
      %s179 = sphi 0, %s179
      %s181 = sphi 0, %s179
      %s182 = sphi 0, %s181
      %s196 = sphi 0, %s182
      %s200 = sphi 0, %s200
      %s202 = sphi 0, %s200
      %s203 = sphi 0, %s202
      %s217 = sphi 0, %s203
      %s221 = sphi 0, %s221
      %s223 = sphi 0, %s221
      %s224 = sphi 0, %s223
      %s238 = sphi 0, %s224
      %s242 = sphi 0, %s242
      %s244 = sphi 0, %s242
      %s245 = sphi 0, %s244
      %s259 = sphi 0, %s245
      %s263 = sphi 0, %s263
      %s265 = sphi 0, %s263
      %s266 = sphi 0, %s265
      %s280 = sphi 0, %s266
      %s284 = sphi 0, %s284
      %s286 = sphi 0, %s284
      %s287 = sphi 0, %s286
      %s301 = sphi 0, %s287
      %s305 = sphi 0, %s305
      %s307 = sphi 0, %s305
      %s308 = sphi 0, %s307
      %s322 = sphi 0, %s308
      %s326 = sphi 0, %s326
      %s328 = sphi 0, %s326
      %s329 = sphi 0, %s328
      %s343 = sphi 0, %s329
      %s347 = sphi 0, %s347
      %s349 = sphi 0, %s347
      %s350 = sphi 0, %s349
      %s364 = sphi 0, %s350
      %s368 = sphi 0, %s368
      %s370 = sphi 0, %s368
      %s371 = sphi 0, %s370
      %s385 = sphi 0, %s371
      %s389 = sphi 0, %s389
      %s391 = sphi 0, %s389
      %s392 = sphi 0, %s391
      %s406 = sphi 0, %s392
      %s410 = sphi 0, %s410
      %s412 = sphi 0, %s410
      %s413 = sphi 0, %s412
      %s427 = sphi 0, %s413
      %s431 = sphi 0, %s431
      %s433 = sphi 0, %s431
      %s434 = sphi 0, %s433
      %s448 = sphi 0, %s434
      %s452 = sphi 0, %s452
      %s454 = sphi 0, %s452
      %s455 = sphi 0, %s454
      %s469 = sphi 0, %s455
      %s473 = sphi 0, %s473
      %s475 = sphi 0, %s473
      %s476 = sphi 0, %s475
      %s490 = sphi 0, %s476
      %s494 = sphi 0, %s494
      %s496 = sphi 0, %s494
      %s497 = sphi 0, %s496
      %s511 = sphi 0, %s497
      %s515 = sphi 0, %s515
      %s517 = sphi 0, %s515
      %s518 = sphi 0, %s517
      %s532 = sphi 0, %s518
      %s536 = sphi 0, %s536
      %s538 = sphi 0, %s536
      %s539 = sphi 0, %s538
      %s553 = sphi 0, %s539
      %s557 = sphi 0, %s557
      %s559 = sphi 0, %s557
      %s560 = sphi 0, %s559
      %s574 = sphi 0, %s560
      %s578 = sphi 0, %s578
      %s580 = sphi 0, %s578
      %s581 = sphi 0, %s580
      %s595 = sphi 0, %s581
      %s599 = sphi 0, %s599
      %s601 = sphi 0, %s599
      %s602 = sphi 0, %s601
      %s616 = sphi 0, %s602
      %s620 = sphi 0, %s620
      %s622 = sphi 0, %s620
      %s623 = sphi 0, %s622
      %s637 = sphi 0, %s623
      %s641 = sphi 0, %s641
      %s643 = sphi 0, %s641
      %s644 = sphi 0, %s643
      %s658 = sphi 0, %s644
      %s662 = sphi 0, %s662
      %s664 = sphi 0, %s662
      %s665 = sphi 0, %s664
      %s679 = sphi 0, %s665
      %s683 = sphi 0, %s683
      %s685 = sphi 0, %s683
      %s686 = sphi 0, %s685
      %s700 = sphi 0, %s686
      %s704 = sphi 0, %s704
      %s706 = sphi 0, %s704
      %s707 = sphi 0, %s706
      %s721 = sphi 0, %s707
      %s727 = sphi 0, %s729
      %s730 = sphi 0, %s727
      %s731 = sphi 0, %s730
      %s747 = sphi 0, %s731
    $region4: #{tpu_custom_call.1} parent=1 // loop_header_branch
      %80 = sbr.rel (%p78) target = $region8
    $region5: #{tpu_custom_call.1} parent=1 // loop_body
      %s82 = ssub.s32 %s77, 1
      %s83 = ssub.s32 %s77, 2
      %s84 = sadd.s32 %s77, 1
      %s85 = ssub.s32 %s77, %s84
      %p86 = scmp.eq.s32.totalorder %s85, 0
      %s88 = sadd.s32 %s87, 1
      %s89 = scalar_select %p86, %s87, %s88
      %p92 = pneg %p86
      %p93 = scmp.eq.s32.totalorder %s77, 1
      %p94 = por %p92, %p93
      %p95 = scmp.ne.s32.totalorder %s87, %s90
      %p96 = scmp.eq.s32.totalorder %s77, 0
      %p97 = por %p95, %p96
      %p98 = scmp.ne.s32.totalorder %s87, %s90
      %p99 = scmp.eq.s32.totalorder %s82, 1
      %p100 = por %p98, %p99
      %p101 = scmp.ne.s32.totalorder %s90, %s91
      %p102 = scmp.eq.s32.totalorder %s82, 0
      %p103 = por %p101, %p102
      %p104 = scmp.ne.s32.totalorder %s90, %s91
      %p105 = scmp.eq.s32.totalorder %s83, 1
      %p106 = por %p104, %p105
      %p108 = scmp.ne.s32.totalorder %s91, %s107
      %p109 = scmp.eq.s32.totalorder %s83, 0
      %p110 = por %p108, %p109
      %s111 = ssub.s32 %s77, %s84
      %p112 = scmp.eq.s32.totalorder %s111, 0
      %s114 = sadd.s32 %s113, 1
      %s115 = scalar_select %p112, %s113, %s114
      %p118 = pneg %p112
      %p119 = scmp.eq.s32.totalorder %s77, 1
      %p120 = por %p118, %p119
      %p121 = scmp.ne.s32.totalorder %s113, %s116
      %p122 = scmp.eq.s32.totalorder %s77, 0
      %p123 = por %p121, %p122
      %p124 = scmp.ne.s32.totalorder %s113, %s116
      %p125 = scmp.eq.s32.totalorder %s82, 1
      %p126 = por %p124, %p125
      %p127 = scmp.ne.s32.totalorder %s116, %s117
      %p128 = scmp.eq.s32.totalorder %s82, 0
      %p129 = por %p127, %p128
      %p130 = scmp.ne.s32.totalorder %s116, %s117
      %p131 = scmp.eq.s32.totalorder %s83, 1
      %p132 = por %p130, %p131
      %p134 = scmp.ne.s32.totalorder %s117, %s133
      %p135 = scmp.eq.s32.totalorder %s83, 0
      %p136 = por %p134, %p135
      %s138 = sadd.s32 %s137, 1
      %p141 = scmp.eq.s32.totalorder %s77, 1
      %p142 = scmp.ne.s32.totalorder %s137, %s139
      %p143 = scmp.eq.s32.totalorder %s77, 0
      %p144 = por %p142, %p143
      %p145 = scmp.ne.s32.totalorder %s137, %s139
      %p146 = scmp.eq.s32.totalorder %s82, 1
      %p147 = por %p145, %p146
      %p148 = scmp.ne.s32.totalorder %s139, %s140
      %p149 = scmp.eq.s32.totalorder %s82, 0
      %p150 = por %p148, %p149
      %p151 = scmp.ne.s32.totalorder %s139, %s140
      %p152 = scmp.eq.s32.totalorder %s83, 1
      %p153 = por %p151, %p152
      %p155 = scmp.ne.s32.totalorder %s140, %s154
      %p156 = scmp.eq.s32.totalorder %s83, 0
      %p157 = por %p155, %p156
      %s159 = sadd.s32 %s158, 1
      %p162 = scmp.eq.s32.totalorder %s77, 1
      %p163 = scmp.ne.s32.totalorder %s158, %s160
      %p164 = scmp.eq.s32.totalorder %s77, 0
      %p165 = por %p163, %p164
      %p166 = scmp.ne.s32.totalorder %s158, %s160
      %p167 = scmp.eq.s32.totalorder %s82, 1
      %p168 = por %p166, %p167
      %p169 = scmp.ne.s32.totalorder %s160, %s161
      %p170 = scmp.eq.s32.totalorder %s82, 0
      %p171 = por %p169, %p170
      %p172 = scmp.ne.s32.totalorder %s160, %s161
      %p173 = scmp.eq.s32.totalorder %s83, 1
      %p174 = por %p172, %p173
      %p176 = scmp.ne.s32.totalorder %s161, %s175
      %p177 = scmp.eq.s32.totalorder %s83, 0
      %p178 = por %p176, %p177
      %s180 = sadd.s32 %s179, 1
      %p183 = scmp.eq.s32.totalorder %s77, 1
      %p184 = scmp.ne.s32.totalorder %s179, %s181
      %p185 = scmp.eq.s32.totalorder %s77, 0
      %p186 = por %p184, %p185
      %p187 = scmp.ne.s32.totalorder %s179, %s181
      %p188 = scmp.eq.s32.totalorder %s82, 1
      %p189 = por %p187, %p188
      %p190 = scmp.ne.s32.totalorder %s181, %s182
      %p191 = scmp.eq.s32.totalorder %s82, 0
      %p192 = por %p190, %p191
      %p193 = scmp.ne.s32.totalorder %s181, %s182
      %p194 = scmp.eq.s32.totalorder %s83, 1
      %p195 = por %p193, %p194
      %p197 = scmp.ne.s32.totalorder %s182, %s196
      %p198 = scmp.eq.s32.totalorder %s83, 0
      %p199 = por %p197, %p198
      %s201 = sadd.s32 %s200, 1
      %p204 = scmp.eq.s32.totalorder %s77, 1
      %p205 = scmp.ne.s32.totalorder %s200, %s202
      %p206 = scmp.eq.s32.totalorder %s77, 0
      %p207 = por %p205, %p206
      %p208 = scmp.ne.s32.totalorder %s200, %s202
      %p209 = scmp.eq.s32.totalorder %s82, 1
      %p210 = por %p208, %p209
      %p211 = scmp.ne.s32.totalorder %s202, %s203
      %p212 = scmp.eq.s32.totalorder %s82, 0
      %p213 = por %p211, %p212
      %p214 = scmp.ne.s32.totalorder %s202, %s203
      %p215 = scmp.eq.s32.totalorder %s83, 1
      %p216 = por %p214, %p215
      %p218 = scmp.ne.s32.totalorder %s203, %s217
      %p219 = scmp.eq.s32.totalorder %s83, 0
      %p220 = por %p218, %p219
      %s222 = sadd.s32 %s221, 1
      %p225 = scmp.eq.s32.totalorder %s77, 1
      %p226 = scmp.ne.s32.totalorder %s221, %s223
      %p227 = scmp.eq.s32.totalorder %s77, 0
      %p228 = por %p226, %p227
      %p229 = scmp.ne.s32.totalorder %s221, %s223
      %p230 = scmp.eq.s32.totalorder %s82, 1
      %p231 = por %p229, %p230
      %p232 = scmp.ne.s32.totalorder %s223, %s224
      %p233 = scmp.eq.s32.totalorder %s82, 0
      %p234 = por %p232, %p233
      %p235 = scmp.ne.s32.totalorder %s223, %s224
      %p236 = scmp.eq.s32.totalorder %s83, 1
      %p237 = por %p235, %p236
      %p239 = scmp.ne.s32.totalorder %s224, %s238
      %p240 = scmp.eq.s32.totalorder %s83, 0
      %p241 = por %p239, %p240
      %s243 = sadd.s32 %s242, 1
      %p246 = scmp.eq.s32.totalorder %s77, 1
      %p247 = scmp.ne.s32.totalorder %s242, %s244
      %p248 = scmp.eq.s32.totalorder %s77, 0
      %p249 = por %p247, %p248
      %p250 = scmp.ne.s32.totalorder %s242, %s244
      %p251 = scmp.eq.s32.totalorder %s82, 1
      %p252 = por %p250, %p251
      %p253 = scmp.ne.s32.totalorder %s244, %s245
      %p254 = scmp.eq.s32.totalorder %s82, 0
      %p255 = por %p253, %p254
      %p256 = scmp.ne.s32.totalorder %s244, %s245
      %p257 = scmp.eq.s32.totalorder %s83, 1
      %p258 = por %p256, %p257
      %p260 = scmp.ne.s32.totalorder %s245, %s259
      %p261 = scmp.eq.s32.totalorder %s83, 0
      %p262 = por %p260, %p261
      %s264 = sadd.s32 %s263, 1
      %p267 = scmp.eq.s32.totalorder %s77, 1
      %p268 = scmp.ne.s32.totalorder %s263, %s265
      %p269 = scmp.eq.s32.totalorder %s77, 0
      %p270 = por %p268, %p269
      %p271 = scmp.ne.s32.totalorder %s263, %s265
      %p272 = scmp.eq.s32.totalorder %s82, 1
      %p273 = por %p271, %p272
      %p274 = scmp.ne.s32.totalorder %s265, %s266
      %p275 = scmp.eq.s32.totalorder %s82, 0
      %p276 = por %p274, %p275
      %p277 = scmp.ne.s32.totalorder %s265, %s266
      %p278 = scmp.eq.s32.totalorder %s83, 1
      %p279 = por %p277, %p278
      %p281 = scmp.ne.s32.totalorder %s266, %s280
      %p282 = scmp.eq.s32.totalorder %s83, 0
      %p283 = por %p281, %p282
      %s285 = sadd.s32 %s284, 1
      %p288 = scmp.eq.s32.totalorder %s77, 1
      %p289 = scmp.ne.s32.totalorder %s284, %s286
      %p290 = scmp.eq.s32.totalorder %s77, 0
      %p291 = por %p289, %p290
      %p292 = scmp.ne.s32.totalorder %s284, %s286
      %p293 = scmp.eq.s32.totalorder %s82, 1
      %p294 = por %p292, %p293
      %p295 = scmp.ne.s32.totalorder %s286, %s287
      %p296 = scmp.eq.s32.totalorder %s82, 0
      %p297 = por %p295, %p296
      %p298 = scmp.ne.s32.totalorder %s286, %s287
      %p299 = scmp.eq.s32.totalorder %s83, 1
      %p300 = por %p298, %p299
      %p302 = scmp.ne.s32.totalorder %s287, %s301
      %p303 = scmp.eq.s32.totalorder %s83, 0
      %p304 = por %p302, %p303
      %s306 = sadd.s32 %s305, 1
      %p309 = scmp.eq.s32.totalorder %s77, 1
      %p310 = scmp.ne.s32.totalorder %s305, %s307
      %p311 = scmp.eq.s32.totalorder %s77, 0
      %p312 = por %p310, %p311
      %p313 = scmp.ne.s32.totalorder %s305, %s307
      %p314 = scmp.eq.s32.totalorder %s82, 1
      %p315 = por %p313, %p314
      %p316 = scmp.ne.s32.totalorder %s307, %s308
      %p317 = scmp.eq.s32.totalorder %s82, 0
      %p318 = por %p316, %p317
      %p319 = scmp.ne.s32.totalorder %s307, %s308
      %p320 = scmp.eq.s32.totalorder %s83, 1
      %p321 = por %p319, %p320
      %p323 = scmp.ne.s32.totalorder %s308, %s322
      %p324 = scmp.eq.s32.totalorder %s83, 0
      %p325 = por %p323, %p324
      %s327 = sadd.s32 %s326, 1
      %p330 = scmp.eq.s32.totalorder %s77, 1
      %p331 = scmp.ne.s32.totalorder %s326, %s328
      %p332 = scmp.eq.s32.totalorder %s77, 0
      %p333 = por %p331, %p332
      %p334 = scmp.ne.s32.totalorder %s326, %s328
      %p335 = scmp.eq.s32.totalorder %s82, 1
      %p336 = por %p334, %p335
      %p337 = scmp.ne.s32.totalorder %s328, %s329
      %p338 = scmp.eq.s32.totalorder %s82, 0
      %p339 = por %p337, %p338
      %p340 = scmp.ne.s32.totalorder %s328, %s329
      %p341 = scmp.eq.s32.totalorder %s83, 1
      %p342 = por %p340, %p341
      %p344 = scmp.ne.s32.totalorder %s329, %s343
      %p345 = scmp.eq.s32.totalorder %s83, 0
      %p346 = por %p344, %p345
      %s348 = sadd.s32 %s347, 1
      %p351 = scmp.eq.s32.totalorder %s77, 1
      %p352 = scmp.ne.s32.totalorder %s347, %s349
      %p353 = scmp.eq.s32.totalorder %s77, 0
      %p354 = por %p352, %p353
      %p355 = scmp.ne.s32.totalorder %s347, %s349
      %p356 = scmp.eq.s32.totalorder %s82, 1
      %p357 = por %p355, %p356
      %p358 = scmp.ne.s32.totalorder %s349, %s350
      %p359 = scmp.eq.s32.totalorder %s82, 0
      %p360 = por %p358, %p359
      %p361 = scmp.ne.s32.totalorder %s349, %s350
      %p362 = scmp.eq.s32.totalorder %s83, 1
      %p363 = por %p361, %p362
      %p365 = scmp.ne.s32.totalorder %s350, %s364
      %p366 = scmp.eq.s32.totalorder %s83, 0
      %p367 = por %p365, %p366
      %s369 = sadd.s32 %s368, 1
      %p372 = scmp.eq.s32.totalorder %s77, 1
      %p373 = scmp.ne.s32.totalorder %s368, %s370
      %p374 = scmp.eq.s32.totalorder %s77, 0
      %p375 = por %p373, %p374
      %p376 = scmp.ne.s32.totalorder %s368, %s370
      %p377 = scmp.eq.s32.totalorder %s82, 1
      %p378 = por %p376, %p377
      %p379 = scmp.ne.s32.totalorder %s370, %s371
      %p380 = scmp.eq.s32.totalorder %s82, 0
      %p381 = por %p379, %p380
      %p382 = scmp.ne.s32.totalorder %s370, %s371
      %p383 = scmp.eq.s32.totalorder %s83, 1
      %p384 = por %p382, %p383
      %p386 = scmp.ne.s32.totalorder %s371, %s385
      %p387 = scmp.eq.s32.totalorder %s83, 0
      %p388 = por %p386, %p387
      %s390 = sadd.s32 %s389, 1
      %p393 = scmp.eq.s32.totalorder %s77, 1
      %p394 = scmp.ne.s32.totalorder %s389, %s391
      %p395 = scmp.eq.s32.totalorder %s77, 0
      %p396 = por %p394, %p395
      %p397 = scmp.ne.s32.totalorder %s389, %s391
      %p398 = scmp.eq.s32.totalorder %s82, 1
      %p399 = por %p397, %p398
      %p400 = scmp.ne.s32.totalorder %s391, %s392
      %p401 = scmp.eq.s32.totalorder %s82, 0
      %p402 = por %p400, %p401
      %p403 = scmp.ne.s32.totalorder %s391, %s392
      %p404 = scmp.eq.s32.totalorder %s83, 1
      %p405 = por %p403, %p404
      %p407 = scmp.ne.s32.totalorder %s392, %s406
      %p408 = scmp.eq.s32.totalorder %s83, 0
      %p409 = por %p407, %p408
      %s411 = sadd.s32 %s410, 1
      %p414 = scmp.eq.s32.totalorder %s77, 1
      %p415 = scmp.ne.s32.totalorder %s410, %s412
      %p416 = scmp.eq.s32.totalorder %s77, 0
      %p417 = por %p415, %p416
      %p418 = scmp.ne.s32.totalorder %s410, %s412
      %p419 = scmp.eq.s32.totalorder %s82, 1
      %p420 = por %p418, %p419
      %p421 = scmp.ne.s32.totalorder %s412, %s413
      %p422 = scmp.eq.s32.totalorder %s82, 0
      %p423 = por %p421, %p422
      %p424 = scmp.ne.s32.totalorder %s412, %s413
      %p425 = scmp.eq.s32.totalorder %s83, 1
      %p426 = por %p424, %p425
      %p428 = scmp.ne.s32.totalorder %s413, %s427
      %p429 = scmp.eq.s32.totalorder %s83, 0
      %p430 = por %p428, %p429
      %s432 = sadd.s32 %s431, 1
      %p435 = scmp.eq.s32.totalorder %s77, 1
      %p436 = scmp.ne.s32.totalorder %s431, %s433
      %p437 = scmp.eq.s32.totalorder %s77, 0
      %p438 = por %p436, %p437
      %p439 = scmp.ne.s32.totalorder %s431, %s433
      %p440 = scmp.eq.s32.totalorder %s82, 1
      %p441 = por %p439, %p440
      %p442 = scmp.ne.s32.totalorder %s433, %s434
      %p443 = scmp.eq.s32.totalorder %s82, 0
      %p444 = por %p442, %p443
      %p445 = scmp.ne.s32.totalorder %s433, %s434
      %p446 = scmp.eq.s32.totalorder %s83, 1
      %p447 = por %p445, %p446
      %p449 = scmp.ne.s32.totalorder %s434, %s448
      %p450 = scmp.eq.s32.totalorder %s83, 0
      %p451 = por %p449, %p450
      %s453 = sadd.s32 %s452, 1
      %p456 = scmp.eq.s32.totalorder %s77, 1
      %p457 = scmp.ne.s32.totalorder %s452, %s454
      %p458 = scmp.eq.s32.totalorder %s77, 0
      %p459 = por %p457, %p458
      %p460 = scmp.ne.s32.totalorder %s452, %s454
      %p461 = scmp.eq.s32.totalorder %s82, 1
      %p462 = por %p460, %p461
      %p463 = scmp.ne.s32.totalorder %s454, %s455
      %p464 = scmp.eq.s32.totalorder %s82, 0
      %p465 = por %p463, %p464
      %p466 = scmp.ne.s32.totalorder %s454, %s455
      %p467 = scmp.eq.s32.totalorder %s83, 1
      %p468 = por %p466, %p467
      %p470 = scmp.ne.s32.totalorder %s455, %s469
      %p471 = scmp.eq.s32.totalorder %s83, 0
      %p472 = por %p470, %p471
      %s474 = sadd.s32 %s473, 1
      %p477 = scmp.eq.s32.totalorder %s77, 1
      %p478 = scmp.ne.s32.totalorder %s473, %s475
      %p479 = scmp.eq.s32.totalorder %s77, 0
      %p480 = por %p478, %p479
      %p481 = scmp.ne.s32.totalorder %s473, %s475
      %p482 = scmp.eq.s32.totalorder %s82, 1
      %p483 = por %p481, %p482
      %p484 = scmp.ne.s32.totalorder %s475, %s476
      %p485 = scmp.eq.s32.totalorder %s82, 0
      %p486 = por %p484, %p485
      %p487 = scmp.ne.s32.totalorder %s475, %s476
      %p488 = scmp.eq.s32.totalorder %s83, 1
      %p489 = por %p487, %p488
      %p491 = scmp.ne.s32.totalorder %s476, %s490
      %p492 = scmp.eq.s32.totalorder %s83, 0
      %p493 = por %p491, %p492
      %s495 = sadd.s32 %s494, 1
      %p498 = scmp.eq.s32.totalorder %s77, 1
      %p499 = scmp.ne.s32.totalorder %s494, %s496
      %p500 = scmp.eq.s32.totalorder %s77, 0
      %p501 = por %p499, %p500
      %p502 = scmp.ne.s32.totalorder %s494, %s496
      %p503 = scmp.eq.s32.totalorder %s82, 1
      %p504 = por %p502, %p503
      %p505 = scmp.ne.s32.totalorder %s496, %s497
      %p506 = scmp.eq.s32.totalorder %s82, 0
      %p507 = por %p505, %p506
      %p508 = scmp.ne.s32.totalorder %s496, %s497
      %p509 = scmp.eq.s32.totalorder %s83, 1
      %p510 = por %p508, %p509
      %p512 = scmp.ne.s32.totalorder %s497, %s511
      %p513 = scmp.eq.s32.totalorder %s83, 0
      %p514 = por %p512, %p513
      %s516 = sadd.s32 %s515, 1
      %p519 = scmp.eq.s32.totalorder %s77, 1
      %p520 = scmp.ne.s32.totalorder %s515, %s517
      %p521 = scmp.eq.s32.totalorder %s77, 0
      %p522 = por %p520, %p521
      %p523 = scmp.ne.s32.totalorder %s515, %s517
      %p524 = scmp.eq.s32.totalorder %s82, 1
      %p525 = por %p523, %p524
      %p526 = scmp.ne.s32.totalorder %s517, %s518
      %p527 = scmp.eq.s32.totalorder %s82, 0
      %p528 = por %p526, %p527
      %p529 = scmp.ne.s32.totalorder %s517, %s518
      %p530 = scmp.eq.s32.totalorder %s83, 1
      %p531 = por %p529, %p530
      %p533 = scmp.ne.s32.totalorder %s518, %s532
      %p534 = scmp.eq.s32.totalorder %s83, 0
      %p535 = por %p533, %p534
      %s537 = sadd.s32 %s536, 1
      %p540 = scmp.eq.s32.totalorder %s77, 1
      %p541 = scmp.ne.s32.totalorder %s536, %s538
      %p542 = scmp.eq.s32.totalorder %s77, 0
      %p543 = por %p541, %p542
      %p544 = scmp.ne.s32.totalorder %s536, %s538
      %p545 = scmp.eq.s32.totalorder %s82, 1
      %p546 = por %p544, %p545
      %p547 = scmp.ne.s32.totalorder %s538, %s539
      %p548 = scmp.eq.s32.totalorder %s82, 0
      %p549 = por %p547, %p548
      %p550 = scmp.ne.s32.totalorder %s538, %s539
      %p551 = scmp.eq.s32.totalorder %s83, 1
      %p552 = por %p550, %p551
      %p554 = scmp.ne.s32.totalorder %s539, %s553
      %p555 = scmp.eq.s32.totalorder %s83, 0
      %p556 = por %p554, %p555
      %s558 = sadd.s32 %s557, 1
      %p561 = scmp.eq.s32.totalorder %s77, 1
      %p562 = scmp.ne.s32.totalorder %s557, %s559
      %p563 = scmp.eq.s32.totalorder %s77, 0
      %p564 = por %p562, %p563
      %p565 = scmp.ne.s32.totalorder %s557, %s559
      %p566 = scmp.eq.s32.totalorder %s82, 1
      %p567 = por %p565, %p566
      %p568 = scmp.ne.s32.totalorder %s559, %s560
      %p569 = scmp.eq.s32.totalorder %s82, 0
      %p570 = por %p568, %p569
      %p571 = scmp.ne.s32.totalorder %s559, %s560
      %p572 = scmp.eq.s32.totalorder %s83, 1
      %p573 = por %p571, %p572
      %p575 = scmp.ne.s32.totalorder %s560, %s574
      %p576 = scmp.eq.s32.totalorder %s83, 0
      %p577 = por %p575, %p576
      %s579 = sadd.s32 %s578, 1
      %p582 = scmp.eq.s32.totalorder %s77, 1
      %p583 = scmp.ne.s32.totalorder %s578, %s580
      %p584 = scmp.eq.s32.totalorder %s77, 0
      %p585 = por %p583, %p584
      %p586 = scmp.ne.s32.totalorder %s578, %s580
      %p587 = scmp.eq.s32.totalorder %s82, 1
      %p588 = por %p586, %p587
      %p589 = scmp.ne.s32.totalorder %s580, %s581
      %p590 = scmp.eq.s32.totalorder %s82, 0
      %p591 = por %p589, %p590
      %p592 = scmp.ne.s32.totalorder %s580, %s581
      %p593 = scmp.eq.s32.totalorder %s83, 1
      %p594 = por %p592, %p593
      %p596 = scmp.ne.s32.totalorder %s581, %s595
      %p597 = scmp.eq.s32.totalorder %s83, 0
      %p598 = por %p596, %p597
      %s600 = sadd.s32 %s599, 1
      %p603 = scmp.eq.s32.totalorder %s77, 1
      %p604 = scmp.ne.s32.totalorder %s599, %s601
      %p605 = scmp.eq.s32.totalorder %s77, 0
      %p606 = por %p604, %p605
      %p607 = scmp.ne.s32.totalorder %s599, %s601
      %p608 = scmp.eq.s32.totalorder %s82, 1
      %p609 = por %p607, %p608
      %p610 = scmp.ne.s32.totalorder %s601, %s602
      %p611 = scmp.eq.s32.totalorder %s82, 0
      %p612 = por %p610, %p611
      %p613 = scmp.ne.s32.totalorder %s601, %s602
      %p614 = scmp.eq.s32.totalorder %s83, 1
      %p615 = por %p613, %p614
      %p617 = scmp.ne.s32.totalorder %s602, %s616
      %p618 = scmp.eq.s32.totalorder %s83, 0
      %p619 = por %p617, %p618
      %s621 = sadd.s32 %s620, 1
      %p624 = scmp.eq.s32.totalorder %s77, 1
      %p625 = scmp.ne.s32.totalorder %s620, %s622
      %p626 = scmp.eq.s32.totalorder %s77, 0
      %p627 = por %p625, %p626
      %p628 = scmp.ne.s32.totalorder %s620, %s622
      %p629 = scmp.eq.s32.totalorder %s82, 1
      %p630 = por %p628, %p629
      %p631 = scmp.ne.s32.totalorder %s622, %s623
      %p632 = scmp.eq.s32.totalorder %s82, 0
      %p633 = por %p631, %p632
      %p634 = scmp.ne.s32.totalorder %s622, %s623
      %p635 = scmp.eq.s32.totalorder %s83, 1
      %p636 = por %p634, %p635
      %p638 = scmp.ne.s32.totalorder %s623, %s637
      %p639 = scmp.eq.s32.totalorder %s83, 0
      %p640 = por %p638, %p639
      %s642 = sadd.s32 %s641, 1
      %p645 = scmp.eq.s32.totalorder %s77, 1
      %p646 = scmp.ne.s32.totalorder %s641, %s643
      %p647 = scmp.eq.s32.totalorder %s77, 0
      %p648 = por %p646, %p647
      %p649 = scmp.ne.s32.totalorder %s641, %s643
      %p650 = scmp.eq.s32.totalorder %s82, 1
      %p651 = por %p649, %p650
      %p652 = scmp.ne.s32.totalorder %s643, %s644
      %p653 = scmp.eq.s32.totalorder %s82, 0
      %p654 = por %p652, %p653
      %p655 = scmp.ne.s32.totalorder %s643, %s644
      %p656 = scmp.eq.s32.totalorder %s83, 1
      %p657 = por %p655, %p656
      %p659 = scmp.ne.s32.totalorder %s644, %s658
      %p660 = scmp.eq.s32.totalorder %s83, 0
      %p661 = por %p659, %p660
      %s663 = sadd.s32 %s662, 1
      %p666 = scmp.eq.s32.totalorder %s77, 1
      %p667 = scmp.ne.s32.totalorder %s662, %s664
      %p668 = scmp.eq.s32.totalorder %s77, 0
      %p669 = por %p667, %p668
      %p670 = scmp.ne.s32.totalorder %s662, %s664
      %p671 = scmp.eq.s32.totalorder %s82, 1
      %p672 = por %p670, %p671
      %p673 = scmp.ne.s32.totalorder %s664, %s665
      %p674 = scmp.eq.s32.totalorder %s82, 0
      %p675 = por %p673, %p674
      %p676 = scmp.ne.s32.totalorder %s664, %s665
      %p677 = scmp.eq.s32.totalorder %s83, 1
      %p678 = por %p676, %p677
      %p680 = scmp.ne.s32.totalorder %s665, %s679
      %p681 = scmp.eq.s32.totalorder %s83, 0
      %p682 = por %p680, %p681
      %s684 = sadd.s32 %s683, 1
      %p687 = scmp.eq.s32.totalorder %s77, 1
      %p688 = scmp.ne.s32.totalorder %s683, %s685
      %p689 = scmp.eq.s32.totalorder %s77, 0
      %p690 = por %p688, %p689
      %p691 = scmp.ne.s32.totalorder %s683, %s685
      %p692 = scmp.eq.s32.totalorder %s82, 1
      %p693 = por %p691, %p692
      %p694 = scmp.ne.s32.totalorder %s685, %s686
      %p695 = scmp.eq.s32.totalorder %s82, 0
      %p696 = por %p694, %p695
      %p697 = scmp.ne.s32.totalorder %s685, %s686
      %p698 = scmp.eq.s32.totalorder %s83, 1
      %p699 = por %p697, %p698
      %p701 = scmp.ne.s32.totalorder %s686, %s700
      %p702 = scmp.eq.s32.totalorder %s83, 0
      %p703 = por %p701, %p702
      %s705 = sadd.s32 %s704, 1
      %p708 = scmp.eq.s32.totalorder %s77, 1
      %p709 = scmp.ne.s32.totalorder %s704, %s706
      %p710 = scmp.eq.s32.totalorder %s77, 0
      %p711 = por %p709, %p710
      %p712 = scmp.ne.s32.totalorder %s704, %s706
      %p713 = scmp.eq.s32.totalorder %s82, 1
      %p714 = por %p712, %p713
      %p715 = scmp.ne.s32.totalorder %s706, %s707
      %p716 = scmp.eq.s32.totalorder %s82, 0
      %p717 = por %p715, %p716
      %p718 = scmp.ne.s32.totalorder %s706, %s707
      %p719 = scmp.eq.s32.totalorder %s83, 1
      %p720 = por %p718, %p719
      %p722 = scmp.ne.s32.totalorder %s707, %s721
      %p723 = scmp.eq.s32.totalorder %s83, 0
      %p724 = por %p722, %p723
      %s725 = ssub.s32 %s77, %s84
      %p726 = scmp.eq.s32.totalorder %s725, 0
      %s728 = sadd.s32 %s727, 1
      %s729 = scalar_select %p726, %s727, %s728
      %p732 = pneg %p726
      %p733 = scmp.eq.s32.totalorder %s77, 1
      %p734 = por %p732, %p733
      %p735 = scmp.ne.s32.totalorder %s727, %s730
      %p736 = scmp.eq.s32.totalorder %s77, 0
      %p737 = por %p735, %p736
      %p738 = scmp.ne.s32.totalorder %s727, %s730
      %p739 = scmp.eq.s32.totalorder %s82, 1
      %p740 = por %p738, %p739
      %p741 = scmp.ne.s32.totalorder %s730, %s731
      %p742 = scmp.eq.s32.totalorder %s82, 0
      %p743 = por %p741, %p742
      %p744 = scmp.ne.s32.totalorder %s730, %s731
      %p745 = scmp.eq.s32.totalorder %s83, 1
      %p746 = por %p744, %p745
      %p748 = scmp.ne.s32.totalorder %s731, %s747
      %p749 = scmp.eq.s32.totalorder %s83, 0
      %p750 = por %p748, %p749
      %p751 = scmp.le.s32.totalorder 1, %s77
      %p752 = scmp.lt.s32.totalorder %s77, 3
      %p753 = pnand %p751, %p752
      %p754 = pneg %p753
      // Predicated region
      $region9: #{tpu_custom_call.1} parent=5 // pred_check
        _
      $region10: #{tpu_custom_call.1} parent=5 // pred_check_branch
        %756 = sbr.rel (%p753) target = $region12
      $region11: #{tpu_custom_call.1} parent=5 // pred_region
        %s757 = ssub.s32 %s77, 1
        // Predicated region
        $region13: #{tpu_custom_call.1} parent=11 // pred_check
          %p758 = pneg %p150
        $region14: #{tpu_custom_call.1} parent=11 // pred_check_branch
          %760 = sbr.rel (%p758) target = $region16
        $region15: #{tpu_custom_call.1} parent=11 // pred_region
          %s762 = ssub.s32 16, 16
          %763 = vsyncadd [#allocation3], %s762
          %s765 = sshll.u32 [#allocation2], 4
          %s766 = int_to_ptr.vmem [resolvable:$true] %s765
          %768 = dma.hbm_to_vmem [thread:$0]  %s5, 16, %s766, [#allocation3]
        $region16: #{tpu_custom_call.1} parent=11 // pred_fallthru
          _
        // Predicated region
        $region17: #{tpu_custom_call.1} parent=11 // pred_check
          %p769 = pneg %p171
        $region18: #{tpu_custom_call.1} parent=11 // pred_check_branch
          %771 = sbr.rel (%p769) target = $region20
        $region19: #{tpu_custom_call.1} parent=11 // pred_region
          %s773 = ssub.s32 16, 16
          %774 = vsyncadd [#allocation5], %s773
          %s776 = sshll.u32 [#allocation4], 4
          %s777 = int_to_ptr.vmem [resolvable:$true] %s776
          %779 = dma.hbm_to_vmem [thread:$0]  %s7, 16, %s777, [#allocation5]
        $region20: #{tpu_custom_call.1} parent=11 // pred_fallthru
          _
        // Predicated region
        $region21: #{tpu_custom_call.1} parent=11 // pred_check
          %p780 = pneg %p192
        $region22: #{tpu_custom_call.1} parent=11 // pred_check_branch
          %782 = sbr.rel (%p780) target = $region24
        $region23: #{tpu_custom_call.1} parent=11 // pred_region
          _
        $region24: #{tpu_custom_call.1} parent=11 // pred_fallthru
          _
        // Predicated region
        $region25: #{tpu_custom_call.1} parent=11 // pred_check
          %p783 = pneg %p213
        $region26: #{tpu_custom_call.1} parent=11 // pred_check_branch
          %785 = sbr.rel (%p783) target = $region28
        $region27: #{tpu_custom_call.1} parent=11 // pred_region
          %s787 = ssub.s32 16, 16
          %788 = vsyncadd [#allocation5], %s787
          %s790 = sshll.u32 [#allocation6], 4
          %s791 = int_to_ptr.vmem [resolvable:$true] %s790
          %793 = dma.hbm_to_vmem [thread:$0]  %s11, 16, %s791, [#allocation5]
        $region28: #{tpu_custom_call.1} parent=11 // pred_fallthru
          _
        // Predicated region
        $region29: #{tpu_custom_call.1} parent=11 // pred_check
          %p794 = pneg %p234
        $region30: #{tpu_custom_call.1} parent=11 // pred_check_branch
          %796 = sbr.rel (%p794) target = $region32
        $region31: #{tpu_custom_call.1} parent=11 // pred_region
          _
        $region32: #{tpu_custom_call.1} parent=11 // pred_fallthru
          _
        // Predicated region
        $region33: #{tpu_custom_call.1} parent=11 // pred_check
          %p797 = pneg %p255
        $region34: #{tpu_custom_call.1} parent=11 // pred_check_branch
          %799 = sbr.rel (%p797) target = $region36
        $region35: #{tpu_custom_call.1} parent=11 // pred_region
          %s801 = ssub.s32 16, 16
          %802 = vsyncadd [#allocation8], %s801
          %s804 = sshll.u32 [#allocation7], 4
          %s805 = int_to_ptr.vmem [resolvable:$true] %s804
          %807 = dma.hbm_to_vmem [thread:$0]  %s15, 16, %s805, [#allocation8]
        $region36: #{tpu_custom_call.1} parent=11 // pred_fallthru
          _
        // Predicated region
        $region37: #{tpu_custom_call.1} parent=11 // pred_check
          %p808 = pneg %p276
        $region38: #{tpu_custom_call.1} parent=11 // pred_check_branch
          %810 = sbr.rel (%p808) target = $region40
        $region39: #{tpu_custom_call.1} parent=11 // pred_region
          %s812 = ssub.s32 16, 16
          %813 = vsyncadd [#allocation8], %s812
          %s815 = sshll.u32 [#allocation9], 4
          %s816 = int_to_ptr.vmem [resolvable:$true] %s815
          %818 = dma.hbm_to_vmem [thread:$0]  %s17, 16, %s816, [#allocation8]
        $region40: #{tpu_custom_call.1} parent=11 // pred_fallthru
          _
        // Predicated region
        $region41: #{tpu_custom_call.1} parent=11 // pred_check
          %p819 = pneg %p297
        $region42: #{tpu_custom_call.1} parent=11 // pred_check_branch
          %821 = sbr.rel (%p819) target = $region44
        $region43: #{tpu_custom_call.1} parent=11 // pred_region
          %s823 = ssub.s32 16, 16
          %824 = vsyncadd [#allocation11], %s823
          %s826 = sshll.u32 [#allocation10], 4
          %s827 = int_to_ptr.vmem [resolvable:$true] %s826
          %829 = dma.hbm_to_vmem [thread:$0]  %s19, 16, %s827, [#allocation11]
        $region44: #{tpu_custom_call.1} parent=11 // pred_fallthru
          _
        // Predicated region
        $region45: #{tpu_custom_call.1} parent=11 // pred_check
          %p830 = pneg %p318
        $region46: #{tpu_custom_call.1} parent=11 // pred_check_branch
          %832 = sbr.rel (%p830) target = $region48
        $region47: #{tpu_custom_call.1} parent=11 // pred_region
          _
        $region48: #{tpu_custom_call.1} parent=11 // pred_fallthru
          _
        // Predicated region
        $region49: #{tpu_custom_call.1} parent=11 // pred_check
          %p833 = pneg %p339
        $region50: #{tpu_custom_call.1} parent=11 // pred_check_branch
          %835 = sbr.rel (%p833) target = $region52
        $region51: #{tpu_custom_call.1} parent=11 // pred_region
          %s837 = ssub.s32 16, 16
          %838 = vsyncadd [#allocation11], %s837
          %s840 = sshll.u32 [#allocation12], 4
          %s841 = int_to_ptr.vmem [resolvable:$true] %s840
          %843 = dma.hbm_to_vmem [thread:$0]  %s23, 16, %s841, [#allocation11]
        $region52: #{tpu_custom_call.1} parent=11 // pred_fallthru
          _
        // Predicated region
        $region53: #{tpu_custom_call.1} parent=11 // pred_check
          %p844 = pneg %p360
        $region54: #{tpu_custom_call.1} parent=11 // pred_check_branch
          %846 = sbr.rel (%p844) target = $region56
        $region55: #{tpu_custom_call.1} parent=11 // pred_region
          _
        $region56: #{tpu_custom_call.1} parent=11 // pred_fallthru
          _
        // Predicated region
        $region57: #{tpu_custom_call.1} parent=11 // pred_check
          %p847 = pneg %p381
        $region58: #{tpu_custom_call.1} parent=11 // pred_check_branch
          %849 = sbr.rel (%p847) target = $region60
        $region59: #{tpu_custom_call.1} parent=11 // pred_region
          %s851 = ssub.s32 16, 16
          %852 = vsyncadd [#allocation14], %s851
          %s854 = sshll.u32 [#allocation13], 4
          %s855 = int_to_ptr.vmem [resolvable:$true] %s854
          %857 = dma.hbm_to_vmem [thread:$0]  %s27, 16, %s855, [#allocation14]
        $region60: #{tpu_custom_call.1} parent=11 // pred_fallthru
          _
        // Predicated region
        $region61: #{tpu_custom_call.1} parent=11 // pred_check
          %p858 = pneg %p402
        $region62: #{tpu_custom_call.1} parent=11 // pred_check_branch
          %860 = sbr.rel (%p858) target = $region64
        $region63: #{tpu_custom_call.1} parent=11 // pred_region
          %s862 = ssub.s32 16, 16
          %863 = vsyncadd [#allocation14], %s862
          %s865 = sshll.u32 [#allocation15], 4
          %s866 = int_to_ptr.vmem [resolvable:$true] %s865
          %868 = dma.hbm_to_vmem [thread:$0]  %s29, 16, %s866, [#allocation14]
        $region64: #{tpu_custom_call.1} parent=11 // pred_fallthru
          _
        // Predicated region
        $region65: #{tpu_custom_call.1} parent=11 // pred_check
          %p869 = pneg %p423
        $region66: #{tpu_custom_call.1} parent=11 // pred_check_branch
          %871 = sbr.rel (%p869) target = $region68
        $region67: #{tpu_custom_call.1} parent=11 // pred_region
          %s873 = ssub.s32 16, 16
          %874 = vsyncadd [#allocation17], %s873
          %s876 = sshll.u32 [#allocation16], 4
          %s877 = int_to_ptr.vmem [resolvable:$true] %s876
          %879 = dma.hbm_to_vmem [thread:$0]  %s31, 16, %s877, [#allocation17]
        $region68: #{tpu_custom_call.1} parent=11 // pred_fallthru
          _
        // Predicated region
        $region69: #{tpu_custom_call.1} parent=11 // pred_check
          %p880 = pneg %p444
        $region70: #{tpu_custom_call.1} parent=11 // pred_check_branch
          %882 = sbr.rel (%p880) target = $region72
        $region71: #{tpu_custom_call.1} parent=11 // pred_region
          %s884 = ssub.s32 256, 256
          %885 = vsyncadd [#allocation17], %s884
          %s886 = sshll.u32 [#allocation18], 4
          %s887 = int_to_ptr.vmem [resolvable:$true] %s886
          %892 = dma.hbm_to_vmem [thread:$0]  %s33, 256, %s887, [#allocation17], 64, 64, 4
        $region72: #{tpu_custom_call.1} parent=11 // pred_fallthru
          _
        // Predicated region
        $region73: #{tpu_custom_call.1} parent=11 // pred_check
          %p893 = pneg %p465
        $region74: #{tpu_custom_call.1} parent=11 // pred_check_branch
          %895 = sbr.rel (%p893) target = $region76
        $region75: #{tpu_custom_call.1} parent=11 // pred_region
          %s897 = ssub.s32 16, 16
          %898 = vsyncadd [#allocation20], %s897
          %s900 = sshll.u32 [#allocation19], 4
          %s901 = int_to_ptr.vmem [resolvable:$true] %s900
          %903 = dma.hbm_to_vmem [thread:$0]  %s35, 16, %s901, [#allocation20]
        $region76: #{tpu_custom_call.1} parent=11 // pred_fallthru
          _
        // Predicated region
        $region77: #{tpu_custom_call.1} parent=11 // pred_check
          %p904 = pneg %p486
        $region78: #{tpu_custom_call.1} parent=11 // pred_check_branch
          %906 = sbr.rel (%p904) target = $region80
        $region79: #{tpu_custom_call.1} parent=11 // pred_region
          _
        $region80: #{tpu_custom_call.1} parent=11 // pred_fallthru
          _
        // Predicated region
        $region81: #{tpu_custom_call.1} parent=11 // pred_check
          %p907 = pneg %p507
        $region82: #{tpu_custom_call.1} parent=11 // pred_check_branch
          %909 = sbr.rel (%p907) target = $region84
        $region83: #{tpu_custom_call.1} parent=11 // pred_region
          %s911 = ssub.s32 256, 256
          %912 = vsyncadd [#allocation20], %s911
          %s913 = sshll.u32 [#allocation21], 4
          %s914 = int_to_ptr.vmem [resolvable:$true] %s913
          %919 = dma.hbm_to_vmem [thread:$0]  %s39, 256, %s914, [#allocation20], 64, 64, 4
        $region84: #{tpu_custom_call.1} parent=11 // pred_fallthru
          _
        // Predicated region
        $region85: #{tpu_custom_call.1} parent=11 // pred_check
          %p920 = pneg %p528
        $region86: #{tpu_custom_call.1} parent=11 // pred_check_branch
          %922 = sbr.rel (%p920) target = $region88
        $region87: #{tpu_custom_call.1} parent=11 // pred_region
          %s924 = ssub.s32 256, 256
          %925 = vsyncadd [#allocation23], %s924
          %s926 = sshll.u32 [#allocation22], 4
          %s927 = int_to_ptr.vmem [resolvable:$true] %s926
          %932 = dma.hbm_to_vmem [thread:$0]  %s41, 256, %s927, [#allocation23], 64, 64, 4
        $region88: #{tpu_custom_call.1} parent=11 // pred_fallthru
          _
        // Predicated region
        $region89: #{tpu_custom_call.1} parent=11 // pred_check
          %p933 = pneg %p549
        $region90: #{tpu_custom_call.1} parent=11 // pred_check_branch
          %935 = sbr.rel (%p933) target = $region92
        $region91: #{tpu_custom_call.1} parent=11 // pred_region
          %s937 = ssub.s32 256, 256
          %938 = vsyncadd [#allocation23], %s937
          %s939 = sshll.u32 [#allocation24], 4
          %s940 = int_to_ptr.vmem [resolvable:$true] %s939
          %945 = dma.hbm_to_vmem [thread:$0]  %s43, 256, %s940, [#allocation23], 64, 64, 4
        $region92: #{tpu_custom_call.1} parent=11 // pred_fallthru
          _
        // Predicated region
        $region93: #{tpu_custom_call.1} parent=11 // pred_check
          %p946 = pneg %p570
        $region94: #{tpu_custom_call.1} parent=11 // pred_check_branch
          %948 = sbr.rel (%p946) target = $region96
        $region95: #{tpu_custom_call.1} parent=11 // pred_region
          %s950 = ssub.s32 256, 256
          %951 = vsyncadd [#allocation26], %s950
          %s952 = sshll.u32 [#allocation25], 4
          %s953 = int_to_ptr.vmem [resolvable:$true] %s952
          %958 = dma.hbm_to_vmem [thread:$0]  %s45, 256, %s953, [#allocation26], 64, 64, 4
        $region96: #{tpu_custom_call.1} parent=11 // pred_fallthru
          _
        // Predicated region
        $region97: #{tpu_custom_call.1} parent=11 // pred_check
          %p959 = pneg %p591
        $region98: #{tpu_custom_call.1} parent=11 // pred_check_branch
          %961 = sbr.rel (%p959) target = $region100
        $region99: #{tpu_custom_call.1} parent=11 // pred_region
          %s963 = ssub.s32 256, 256
          %964 = vsyncadd [#allocation26], %s963
          %s965 = sshll.u32 [#allocation27], 4
          %s966 = int_to_ptr.vmem [resolvable:$true] %s965
          %971 = dma.hbm_to_vmem [thread:$0]  %s47, 256, %s966, [#allocation26], 64, 64, 4
        $region100: #{tpu_custom_call.1} parent=11 // pred_fallthru
          _
        // Predicated region
        $region101: #{tpu_custom_call.1} parent=11 // pred_check
          %p972 = pneg %p612
        $region102: #{tpu_custom_call.1} parent=11 // pred_check_branch
          %974 = sbr.rel (%p972) target = $region104
        $region103: #{tpu_custom_call.1} parent=11 // pred_region
          %s976 = ssub.s32 256, 256
          %977 = vsyncadd [#allocation29], %s976
          %s978 = sshll.u32 [#allocation28], 4
          %s979 = int_to_ptr.vmem [resolvable:$true] %s978
          %984 = dma.hbm_to_vmem [thread:$0]  %s49, 256, %s979, [#allocation29], 64, 64, 4
        $region104: #{tpu_custom_call.1} parent=11 // pred_fallthru
          _
        // Predicated region
        $region105: #{tpu_custom_call.1} parent=11 // pred_check
          %p985 = pneg %p633
        $region106: #{tpu_custom_call.1} parent=11 // pred_check_branch
          %987 = sbr.rel (%p985) target = $region108
        $region107: #{tpu_custom_call.1} parent=11 // pred_region
          _
        $region108: #{tpu_custom_call.1} parent=11 // pred_fallthru
          _
        // Predicated region
        $region109: #{tpu_custom_call.1} parent=11 // pred_check
          %p988 = pneg %p654
        $region110: #{tpu_custom_call.1} parent=11 // pred_check_branch
          %990 = sbr.rel (%p988) target = $region112
        $region111: #{tpu_custom_call.1} parent=11 // pred_region
          _
        $region112: #{tpu_custom_call.1} parent=11 // pred_fallthru
          _
        // Predicated region
        $region113: #{tpu_custom_call.1} parent=11 // pred_check
          %p991 = pneg %p675
        $region114: #{tpu_custom_call.1} parent=11 // pred_check_branch
          %993 = sbr.rel (%p991) target = $region116
        $region115: #{tpu_custom_call.1} parent=11 // pred_region
          _
        $region116: #{tpu_custom_call.1} parent=11 // pred_fallthru
          _
        // Predicated region
        $region117: #{tpu_custom_call.1} parent=11 // pred_check
          %p994 = pneg %p696
        $region118: #{tpu_custom_call.1} parent=11 // pred_check_branch
          %996 = sbr.rel (%p994) target = $region120
        $region119: #{tpu_custom_call.1} parent=11 // pred_region
          _
        $region120: #{tpu_custom_call.1} parent=11 // pred_fallthru
          _
        // Predicated region
        $region121: #{tpu_custom_call.1} parent=11 // pred_check
          %p997 = pneg %p717
        $region122: #{tpu_custom_call.1} parent=11 // pred_check_branch
          %999 = sbr.rel (%p997) target = $region124
        $region123: #{tpu_custom_call.1} parent=11 // pred_region
          _
        $region124: #{tpu_custom_call.1} parent=11 // pred_fallthru
          _
      $region12: #{tpu_custom_call.1} parent=5 // pred_fallthru
        _
      %p1000 = scmp.lt.s32.totalorder %s77, 2
      // Predicated region
      $region125: #{tpu_custom_call.1} parent=5 // pred_check
        %p1001 = pneg %p1000
      $region126: #{tpu_custom_call.1} parent=5 // pred_check_branch
        %1003 = sbr.rel (%p1001) target = $region128
      $region127: #{tpu_custom_call.1} parent=5 // pred_region
        // Predicated region
        $region129: #{tpu_custom_call.1} parent=127 // pred_check
          %p1004 = pneg %p97
        $region130: #{tpu_custom_call.1} parent=127 // pred_check_branch
          %1006 = sbr.rel (%p1004) target = $region132
        $region131: #{tpu_custom_call.1} parent=127 // pred_region
          %s1007 = smul.u32 2, %s77
          %p1008 = scmp.lt.s32.totalorder %s1007, 3
          %s1009 = scalar_select %p1008, %s1007, 3
          %s1010 = smul.addr %s1009, 8
          %s1011 = scalar_lea.vmem %s1, %s1010
          %s1012 = smul.u32 2, %s77
        $region132: #{tpu_custom_call.1} parent=127 // pred_fallthru
          _
        // Predicated region
        $region133: #{tpu_custom_call.1} parent=127 // pred_check
          %p1013 = pneg %p123
        $region134: #{tpu_custom_call.1} parent=127 // pred_check_branch
          %1015 = sbr.rel (%p1013) target = $region136
        $region135: #{tpu_custom_call.1} parent=127 // pred_region
          %s1016 = smul.u32 2, %s77
          %p1017 = scmp.lt.s32.totalorder %s1016, 3
          %s1018 = scalar_select %p1017, %s1016, 3
          %s1019 = smul.addr %s1018, 8
          %s1020 = scalar_lea.vmem %s3, %s1019
          %s1021 = smul.u32 2, %s77
        $region136: #{tpu_custom_call.1} parent=127 // pred_fallthru
          _
      $region128: #{tpu_custom_call.1} parent=5 // pred_fallthru
        _
      %p1022 = scmp.le.s32.totalorder 1, %s77
      %p1023 = scmp.lt.s32.totalorder %s77, 3
      %p1024 = pnand %p1022, %p1023
      %p1025 = pneg %p1024
      // Predicated region
      $region137: #{tpu_custom_call.1} parent=5 // pred_check
        _
      $region138: #{tpu_custom_call.1} parent=5 // pred_check_branch
        %1027 = sbr.rel (%p1024) target = $region140
      $region139: #{tpu_custom_call.1} parent=5 // pred_region
        %s1028 = ssub.s32 %s77, 1
        // Predicated region
        $region141: #{tpu_custom_call.1} parent=139 // pred_check
          %p1029 = pneg %p150
        $region142: #{tpu_custom_call.1} parent=139 // pred_check_branch
          %1031 = sbr.rel (%p1029) target = $region144
        $region143: #{tpu_custom_call.1} parent=139 // pred_region
          %1032 = dma.done [#allocation3], 16
        $region144: #{tpu_custom_call.1} parent=139 // pred_fallthru
          _
        // Predicated region
        $region145: #{tpu_custom_call.1} parent=139 // pred_check
          %p1033 = pneg %p171
        $region146: #{tpu_custom_call.1} parent=139 // pred_check_branch
          %1035 = sbr.rel (%p1033) target = $region148
        $region147: #{tpu_custom_call.1} parent=139 // pred_region
          %1036 = dma.done [#allocation5], 16
        $region148: #{tpu_custom_call.1} parent=139 // pred_fallthru
          _
        // Predicated region
        $region149: #{tpu_custom_call.1} parent=139 // pred_check
          %p1037 = pneg %p213
        $region150: #{tpu_custom_call.1} parent=139 // pred_check_branch
          %1039 = sbr.rel (%p1037) target = $region152
        $region151: #{tpu_custom_call.1} parent=139 // pred_region
          %1040 = dma.done [#allocation5], 16
        $region152: #{tpu_custom_call.1} parent=139 // pred_fallthru
          _
        // Predicated region
        $region153: #{tpu_custom_call.1} parent=139 // pred_check
          %p1041 = pneg %p255
        $region154: #{tpu_custom_call.1} parent=139 // pred_check_branch
          %1043 = sbr.rel (%p1041) target = $region156
        $region155: #{tpu_custom_call.1} parent=139 // pred_region
          %1044 = dma.done [#allocation8], 16
        $region156: #{tpu_custom_call.1} parent=139 // pred_fallthru
          _
        // Predicated region
        $region157: #{tpu_custom_call.1} parent=139 // pred_check
          %p1045 = pneg %p276
        $region158: #{tpu_custom_call.1} parent=139 // pred_check_branch
          %1047 = sbr.rel (%p1045) target = $region160
        $region159: #{tpu_custom_call.1} parent=139 // pred_region
          %1048 = dma.done [#allocation8], 16
        $region160: #{tpu_custom_call.1} parent=139 // pred_fallthru
          _
        // Predicated region
        $region161: #{tpu_custom_call.1} parent=139 // pred_check
          %p1049 = pneg %p297
        $region162: #{tpu_custom_call.1} parent=139 // pred_check_branch
          %1051 = sbr.rel (%p1049) target = $region164
        $region163: #{tpu_custom_call.1} parent=139 // pred_region
          %1052 = dma.done [#allocation11], 16
        $region164: #{tpu_custom_call.1} parent=139 // pred_fallthru
          _
        // Predicated region
        $region165: #{tpu_custom_call.1} parent=139 // pred_check
          %p1053 = pneg %p339
        $region166: #{tpu_custom_call.1} parent=139 // pred_check_branch
          %1055 = sbr.rel (%p1053) target = $region168
        $region167: #{tpu_custom_call.1} parent=139 // pred_region
          %1056 = dma.done [#allocation11], 16
        $region168: #{tpu_custom_call.1} parent=139 // pred_fallthru
          _
        // Predicated region
        $region169: #{tpu_custom_call.1} parent=139 // pred_check
          %p1057 = pneg %p381
        $region170: #{tpu_custom_call.1} parent=139 // pred_check_branch
          %1059 = sbr.rel (%p1057) target = $region172
        $region171: #{tpu_custom_call.1} parent=139 // pred_region
          %1060 = dma.done [#allocation14], 16
        $region172: #{tpu_custom_call.1} parent=139 // pred_fallthru
          _
        // Predicated region
        $region173: #{tpu_custom_call.1} parent=139 // pred_check
          %p1061 = pneg %p402
        $region174: #{tpu_custom_call.1} parent=139 // pred_check_branch
          %1063 = sbr.rel (%p1061) target = $region176
        $region175: #{tpu_custom_call.1} parent=139 // pred_region
          %1064 = dma.done [#allocation14], 16
        $region176: #{tpu_custom_call.1} parent=139 // pred_fallthru
          _
        // Predicated region
        $region177: #{tpu_custom_call.1} parent=139 // pred_check
          %p1065 = pneg %p423
        $region178: #{tpu_custom_call.1} parent=139 // pred_check_branch
          %1067 = sbr.rel (%p1065) target = $region180
        $region179: #{tpu_custom_call.1} parent=139 // pred_region
          %1068 = dma.done [#allocation17], 16
        $region180: #{tpu_custom_call.1} parent=139 // pred_fallthru
          _
        // Predicated region
        $region181: #{tpu_custom_call.1} parent=139 // pred_check
          %p1069 = pneg %p444
        $region182: #{tpu_custom_call.1} parent=139 // pred_check_branch
          %1071 = sbr.rel (%p1069) target = $region184
        $region183: #{tpu_custom_call.1} parent=139 // pred_region
          %1072 = dma.done [#allocation17], 256
        $region184: #{tpu_custom_call.1} parent=139 // pred_fallthru
          _
        // Predicated region
        $region185: #{tpu_custom_call.1} parent=139 // pred_check
          %p1073 = pneg %p465
        $region186: #{tpu_custom_call.1} parent=139 // pred_check_branch
          %1075 = sbr.rel (%p1073) target = $region188
        $region187: #{tpu_custom_call.1} parent=139 // pred_region
          %1076 = dma.done [#allocation20], 16
        $region188: #{tpu_custom_call.1} parent=139 // pred_fallthru
          _
        // Predicated region
        $region189: #{tpu_custom_call.1} parent=139 // pred_check
          %p1077 = pneg %p507
        $region190: #{tpu_custom_call.1} parent=139 // pred_check_branch
          %1079 = sbr.rel (%p1077) target = $region192
        $region191: #{tpu_custom_call.1} parent=139 // pred_region
          %1080 = dma.done [#allocation20], 256
        $region192: #{tpu_custom_call.1} parent=139 // pred_fallthru
          _
        // Predicated region
        $region193: #{tpu_custom_call.1} parent=139 // pred_check
          %p1081 = pneg %p528
        $region194: #{tpu_custom_call.1} parent=139 // pred_check_branch
          %1083 = sbr.rel (%p1081) target = $region196
        $region195: #{tpu_custom_call.1} parent=139 // pred_region
          %1084 = dma.done [#allocation23], 256
        $region196: #{tpu_custom_call.1} parent=139 // pred_fallthru
          _
        // Predicated region
        $region197: #{tpu_custom_call.1} parent=139 // pred_check
          %p1085 = pneg %p549
        $region198: #{tpu_custom_call.1} parent=139 // pred_check_branch
          %1087 = sbr.rel (%p1085) target = $region200
        $region199: #{tpu_custom_call.1} parent=139 // pred_region
          %1088 = dma.done [#allocation23], 256
        $region200: #{tpu_custom_call.1} parent=139 // pred_fallthru
          _
        // Predicated region
        $region201: #{tpu_custom_call.1} parent=139 // pred_check
          %p1089 = pneg %p570
        $region202: #{tpu_custom_call.1} parent=139 // pred_check_branch
          %1091 = sbr.rel (%p1089) target = $region204
        $region203: #{tpu_custom_call.1} parent=139 // pred_region
          %1092 = dma.done [#allocation26], 256
        $region204: #{tpu_custom_call.1} parent=139 // pred_fallthru
          _
        // Predicated region
        $region205: #{tpu_custom_call.1} parent=139 // pred_check
          %p1093 = pneg %p591
        $region206: #{tpu_custom_call.1} parent=139 // pred_check_branch
          %1095 = sbr.rel (%p1093) target = $region208
        $region207: #{tpu_custom_call.1} parent=139 // pred_region
          %1096 = dma.done [#allocation26], 256
        $region208: #{tpu_custom_call.1} parent=139 // pred_fallthru
          _
        // Predicated region
        $region209: #{tpu_custom_call.1} parent=139 // pred_check
          %p1097 = pneg %p612
        $region210: #{tpu_custom_call.1} parent=139 // pred_check_branch
          %1099 = sbr.rel (%p1097) target = $region212
        $region211: #{tpu_custom_call.1} parent=139 // pred_region
          %1100 = dma.done [#allocation29], 256
        $region212: #{tpu_custom_call.1} parent=139 // pred_fallthru
          _
        %s1101 = smul.u32 2, %s82
        %p1102 = scmp.lt.s32.totalorder %s1101, 3
        %s1103 = scalar_select %p1102, %s1101, 3
        %s1104 = smul.addr %s1103, 8
        %s1105 = scalar_lea.vmem %s1, %s1104
        %p1106 = pneg %p103
        %p1107 = pneg %p100
        %s1108 = smul.u32 2, %s82
        %p1109 = scmp.lt.s32.totalorder %s1108, 3
        %s1110 = scalar_select %p1109, %s1108, 3
        %s1111 = smul.addr %s1110, 8
        %s1112 = scalar_lea.vmem %s3, %s1111
        %p1113 = pneg %p129
        %p1114 = pneg %p126
        %p1115 = pneg %p150
        %p1116 = pneg %p147
        %p1117 = pneg %p171
        %p1118 = pneg %p168
        %p1119 = pneg %p192
        %p1120 = pneg %p189
        %p1121 = pneg %p213
        %p1122 = pneg %p210
        %p1123 = pneg %p234
        %p1124 = pneg %p231
        %p1125 = pneg %p255
        %p1126 = pneg %p252
        %p1127 = pneg %p276
        %p1128 = pneg %p273
        %p1129 = pneg %p297
        %p1130 = pneg %p294
        %p1131 = pneg %p318
        %p1132 = pneg %p315
        %p1133 = pneg %p339
        %p1134 = pneg %p336
        %p1135 = pneg %p360
        %p1136 = pneg %p357
        %p1137 = pneg %p381
        %p1138 = pneg %p378
        %p1139 = pneg %p402
        %p1140 = pneg %p399
        %p1141 = pneg %p423
        %p1142 = pneg %p420
        %p1143 = pneg %p444
        %p1144 = pneg %p441
        %p1145 = pneg %p465
        %p1146 = pneg %p462
        %p1147 = pneg %p486
        %p1148 = pneg %p483
        %p1149 = pneg %p507
        %p1150 = pneg %p504
        %p1151 = pneg %p528
        %p1152 = pneg %p525
        %p1153 = pneg %p549
        %p1154 = pneg %p546
        %p1155 = pneg %p570
        %p1156 = pneg %p567
        %p1157 = pneg %p591
        %p1158 = pneg %p588
        %p1159 = pneg %p612
        %p1160 = pneg %p609
        %p1161 = pneg %p633
        %p1162 = pneg %p630
        %p1163 = pneg %p654
        %p1164 = pneg %p651
        %p1165 = pneg %p675
        %p1166 = pneg %p672
        %p1167 = pneg %p696
        %p1168 = pneg %p693
        %p1169 = pneg %p717
        %p1170 = pneg %p714
        %p1171 = pneg %p743
        %p1172 = pneg %p740
        %s1173 = smul.u32 2, %s82
        %p1174 = scmp.lt.s32.totalorder %s1173, 3
        %s1175 = scalar_select %p1174, %s1173, 3
        %s1176 = scalar_lea.vmem %s61, %s1175
        %s1177 = smul.u32 2, %s82
        %p1178 = scmp.lt.s32.totalorder %s1177, 3
        %s1179 = scalar_select %p1178, %s1177, 3
        %s1180 = smul.addr %s1179, 8
        %s1181 = scalar_lea.vmem %s1, %s1180
        %s1182 = smul.u32 2, %s82
        %s1183 = smul.u32 2, %s82
        %p1184 = scmp.lt.s32.totalorder %s1183, 3
        %s1185 = scalar_select %p1184, %s1183, 3
        %s1186 = smul.addr %s1185, 8
        %s1187 = scalar_lea.vmem %s3, %s1186
        %s1188 = smul.u32 2, %s82
        %s1189 = smul.u32 2, %s82
        %p1190 = scmp.lt.s32.totalorder %s1189, 3
        %s1191 = scalar_select %p1190, %s1189, 3
        %s1192 = scalar_lea.vmem %s61, %s1191
        %s1193 = smul.u32 2, %s82
        %v1195 = vld [vmem:[%s1181] sm:$0xff]
        %v1196 = vld [vmem:[%s1181 + $0x8] sm:$0xff]
        %v1197 = vld [vmem:[#allocation2] sm:$0x1]
        %v1198 = vld [vmem:[#allocation4] sm:$0x1]
        %vm1199 = vcmask 261120
        %v1200 = vsel %vm1199, %v1195, 0.0
        %1201 = vadd.xlane.f32.xlu0 %v1200
        %v1202 = vpop.xlane.xlu0 %1201
        %v1203 = vsel %vm1199, %v1196, 0.0
        %1204 = vadd.xlane.f32.xlu0 %v1203
        %v1205 = vpop.xlane.xlu0 %1204
        %v1206 = vrcp.pop 32.0
        %v1207 = vmul.f32 %v1202, %v1206
        %v1208 = vmul.f32 %v1205, %v1206
        %v1209 = vsub.f32 %v1195, %v1207
        %v1210 = vsub.f32 %v1196, %v1208
        %v1211 = vmul.f32 %v1209, %v1209
        %v1212 = vmul.f32 %v1210, %v1210
        %v1213 = vsel %vm1199, %v1211, 0.0
        %1214 = vadd.xlane.f32.xlu0 %v1213
        %v1215 = vpop.xlane.xlu0 %1214
        %v1216 = vsel %vm1199, %v1212, 0.0
        %1217 = vadd.xlane.f32.xlu0 %v1216
        %v1218 = vpop.xlane.xlu0 %1217
        %v1219 = vmul.f32 %v1215, %v1206
        %v1220 = vmul.f32 %v1218, %v1206
        %v1221 = vadd.f32 %v1219, 1e-12
        %v1222 = vadd.f32 %v1220, 1e-12
        %v1223 = vrsqrt.pop %v1221
        %v1224 = vrsqrt.pop %v1222
        %v1225 = vmul.f32 %v1209, %v1223
        %v1226 = vmul.f32 %v1210, %v1224
        %v1228 = vlaneseq
        %v1229 = vshrl.u32 %v1228, 7
        %v1230 = vsub.s32 0, %v1229
        %v1231 = vrot.slane %v1197, %v1230
        %v1233 = vmul.f32 %v1225, %v1231
        %v1234 = vmul.f32 %v1226, %v1231
        %v1236 = vlaneseq
        %v1237 = vshrl.u32 %v1236, 7
        %v1238 = vsub.s32 0, %v1237
        %v1239 = vrot.slane %v1198, %v1238
        %v1241 = vadd.f32 %v1233, %v1239
        %v1242 = vadd.f32 %v1234, %v1239
        %v1243 = vld [vmem:[%s9] sm:$0xf]
        %v1244 = vld [vmem:[%s9 + $0x4] sm:$0xf]
        %v1245 = vld [vmem:[%s9 + $0x8] sm:$0xf]
        %v1246 = vld [vmem:[%s9 + $0xc] sm:$0xf]
        %v1247 = vpack.c.bf16 %v1242, %v1241
        %v1248 = vld [vmem:[#allocation6] sm:$0x1]
        %v1250 = vlaneseq
        %v1251 = vshrl.u32 %v1250, 7
        %v1252 = vsub.s32 0, %v1251
        %v1253 = vrot.slane %v1248, %v1252
        %v1259 = vunpack.c.l.b16 %v1243
        %v1260 = vunpack.c.l.b16 %v1244
        %v1261 = vunpack.c.l.b16 %v1245
        %v1262 = vunpack.c.l.b16 %v1246
        %v1263 = vpack.c.b16 %v1260, %v1259
        %v1264 = vpack.c.b16 %v1262, %v1261
        %v1268 = vsel %vm1199, %v1247, 0
        %1270 = vmatprep.subr.bf16.mxu0 0
        %1271 = vmatpush1.bf16.msra.mxu0 0
        %1272 = vmatprep.subr.bf16.mxu0 0
        %1273 = vmatpush1.bf16.msra.mxu0 0
        %1274 = vmatprep.subr.bf16.mxu0 0
        %1275 = vmatpush1.bf16.msra.mxu0 0
        %1276 = vmatprep.subr.bf16.mxu0 0
        %1277 = vmatpush1.bf16.msra.mxu0 0
        %1278 = vmatprep.subr.bf16.mxu0 0
        %1279 = vmatpush1.bf16.msra.mxu0 0
        %1280 = vmatprep.subr.bf16.mxu0 0
        %1281 = vmatpush1.bf16.msra.mxu0 0
        %1282 = vmatprep.subr.bf16.mxu0 0
        %1283 = vmatpush1.bf16.msra.mxu0 %v1264
        %1284 = vmatprep.subr.bf16.mxu0 0
        %1285 = vmatpush1.bf16.msra.mxu0 %v1263
        %1286 = vmatprep.subr.bf16.mxu0 0
        %1287 = vmatpush2.bf16.msra.mxu0 0
        %1288 = vmatprep.subr.bf16.mxu0 0
        %1289 = vmatpush2.bf16.msra.mxu0 0
        %1290 = vmatprep.subr.bf16.mxu0 0
        %1291 = vmatpush2.bf16.msra.mxu0 0
        %1292 = vmatprep.subr.bf16.mxu0 0
        %1293 = vmatpush2.bf16.msra.mxu0 0
        %1294 = vmatprep.subr.bf16.mxu0 0
        %1295 = vmatpush2.bf16.msra.mxu0 0
        %1296 = vmatprep.subr.bf16.mxu0 0
        %1297 = vmatpush2.bf16.msra.mxu0 0
        %1298 = vmatprep.subr.bf16.mxu0 0
        %1299 = vmatpush2.bf16.msra.mxu0 0
        %1300 = vmatprep.subr.bf16.mxu0 0
        %1301 = vmatpush2.bf16.msra.mxu0 0
        %1302 = vmatprep.mubr.bf16.mxu0 0
        %1303 = vmatmul.mubr.bf16.gmra.mxu0 %v1268
        %v1304 = vpop.f32.mrf.mxu0
        %v1305 = vadd.f32 %v1253, %v1304
        %v1306 = vpop.f32.mrf.mxu0
        %v1307 = vpop.f32.mrf.mxu0
        %v1308 = vadd.f32 %v1253, %v1307
        %v1309 = vpop.f32.mrf.mxu0
        %1310 = vdwg.mxu0
        %v1311 = vpack.c.bf16 %v1308, %v1305
        %v1313 = vunpack.c.l.b16 %v1311
        %v1314 = vunpack.c.h.b16 %v1311
        %v1315 = vpack.c.b16 %v1313, %v1313
        %v1316 = vpack.c.b16 %v1314, %v1314
        %1317 = vrot.lane.b32.xlu0 %v1315, 96
        %v1318 = vpop.permute.xlu0 %1317
        %vm1319 = vcmask 130048
        %v1321 = vsel %vm1319, %v1315, 0
        %v1324 = vsel %vm1319, %v1318, 0
        %1326 = vmatprep.subr.bf16.mxu0 0
        %1327 = vmatpush1.bf16.xpose.msra.mxu0 0
        %1328 = vmatprep.subr.bf16.mxu0 0
        %1329 = vmatpush1.bf16.xpose.msra.mxu0 0
        %1330 = vmatprep.subr.bf16.mxu0 0
        %1331 = vmatpush1.bf16.xpose.msra.mxu0 0
        %1332 = vmatprep.subr.bf16.mxu0 0
        %1333 = vmatpush1.bf16.xpose.msra.mxu0 0
        %1334 = vmatprep.subr.bf16.mxu0 0
        %1335 = vmatpush1.bf16.xpose.msra.mxu0 0
        %1336 = vmatprep.subr.bf16.mxu0 0
        %1337 = vmatpush1.bf16.xpose.msra.mxu0 0
        %1338 = vmatprep.subr.bf16.mxu0 0
        %1339 = vmatpush1.bf16.xpose.msra.mxu0 0
        %1340 = vmatprep.subr.bf16.mxu0 0
        %1341 = vmatpush1.bf16.xpose.msra.mxu0 %v1324
        %1342 = vmatprep.subr.bf16.mxu0 0
        %1343 = vmatpush2.bf16.xpose.msra.mxu0 0
        %1344 = vmatprep.subr.bf16.mxu0 0
        %1345 = vmatpush2.bf16.xpose.msra.mxu0 0
        %1346 = vmatprep.subr.bf16.mxu0 0
        %1347 = vmatpush2.bf16.xpose.msra.mxu0 0
        %1348 = vmatprep.subr.bf16.mxu0 0
        %1349 = vmatpush2.bf16.xpose.msra.mxu0 0
        %1350 = vmatprep.subr.bf16.mxu0 0
        %1351 = vmatpush2.bf16.xpose.msra.mxu0 0
        %1352 = vmatprep.subr.bf16.mxu0 0
        %1353 = vmatpush2.bf16.xpose.msra.mxu0 0
        %1354 = vmatprep.subr.bf16.mxu0 0
        %1355 = vmatpush2.bf16.xpose.msra.mxu0 0
        %1356 = vmatprep.subr.bf16.mxu0 0
        %1357 = vmatpush2.bf16.xpose.msra.mxu0 0
        %1358 = vmatprep.mubr.bf16.mxu0 0
        %1359 = vmatmul.mubr.bf16.gmra.mxu0 %v1321
        %v1360 = vpop.f32.mrf.mxu0
        %v1361 = vadd.f32 0.0, %v1360
        %v1362 = vpop.f32.mrf.mxu0
        %v1363 = vpop.f32.mrf.mxu0
        %v1364 = vpop.f32.mrf.mxu0
        %1365 = vdwg.mxu0
        %1366 = vrot.lane.b32.xlu0 %v1316, 96
        %v1367 = vpop.permute.xlu0 %1366
        %v1369 = vsel %vm1319, %v1316, 0
        %v1372 = vsel %vm1319, %v1367, 0
        %1374 = vmatprep.subr.bf16.mxu0 0
        %1375 = vmatpush1.bf16.xpose.msra.mxu0 0
        %1376 = vmatprep.subr.bf16.mxu0 0
        %1377 = vmatpush1.bf16.xpose.msra.mxu0 0
        %1378 = vmatprep.subr.bf16.mxu0 0
        %1379 = vmatpush1.bf16.xpose.msra.mxu0 0
        %1380 = vmatprep.subr.bf16.mxu0 0
        %1381 = vmatpush1.bf16.xpose.msra.mxu0 0
        %1382 = vmatprep.subr.bf16.mxu0 0
        %1383 = vmatpush1.bf16.xpose.msra.mxu0 0
        %1384 = vmatprep.subr.bf16.mxu0 0
        %1385 = vmatpush1.bf16.xpose.msra.mxu0 0
        %1386 = vmatprep.subr.bf16.mxu0 0
        %1387 = vmatpush1.bf16.xpose.msra.mxu0 0
        %1388 = vmatprep.subr.bf16.mxu0 0
        %1389 = vmatpush1.bf16.xpose.msra.mxu0 %v1372
        %1390 = vmatprep.subr.bf16.mxu0 0
        %1391 = vmatpush2.bf16.xpose.msra.mxu0 0
        %1392 = vmatprep.subr.bf16.mxu0 0
        %1393 = vmatpush2.bf16.xpose.msra.mxu0 0
        %1394 = vmatprep.subr.bf16.mxu0 0
        %1395 = vmatpush2.bf16.xpose.msra.mxu0 0
        %1396 = vmatprep.subr.bf16.mxu0 0
        %1397 = vmatpush2.bf16.xpose.msra.mxu0 0
        %1398 = vmatprep.subr.bf16.mxu0 0
        %1399 = vmatpush2.bf16.xpose.msra.mxu0 0
        %1400 = vmatprep.subr.bf16.mxu0 0
        %1401 = vmatpush2.bf16.xpose.msra.mxu0 0
        %1402 = vmatprep.subr.bf16.mxu0 0
        %1403 = vmatpush2.bf16.xpose.msra.mxu0 0
        %1404 = vmatprep.subr.bf16.mxu0 0
        %1405 = vmatpush2.bf16.xpose.msra.mxu0 0
        %1406 = vmatprep.mubr.bf16.mxu0 0
        %1407 = vmatmul.mubr.bf16.gmra.mxu0 %v1369
        %v1408 = vpop.f32.mrf.mxu0
        %v1409 = vadd.f32 0.0, %v1408
        %v1410 = vpop.f32.mrf.mxu0
        %v1411 = vpop.f32.mrf.mxu0
        %v1412 = vpop.f32.mrf.mxu0
        %1413 = vdwg.mxu0
        %vm1414 = vcmask 64512
        %v1415 = vsel %vm1414, %v1361, -inf
        %1416 = vmax.xlane.f32.xlu0 %v1415
        %v1417 = vpop.xlane.xlu0 %1416
        %v1418 = vsel %vm1414, %v1409, -inf
        %1419 = vmax.xlane.f32.xlu0 %v1418
        %v1420 = vpop.xlane.xlu0 %1419
        %v1421 = vsub.f32 %v1361, %v1417
        %v1422 = vsub.f32 %v1409, %v1420
        %v1423 = vmul.f32 %v1421, 1.442695
        %v1424 = vpow.pop %v1423
        %v1425 = vmul.f32 %v1422, 1.442695
        %v1426 = vpow.pop %v1425
        %v1427 = vsel %vm1414, %v1424, 0.0
        %1428 = vadd.xlane.f32.xlu0 %v1427
        %v1429 = vpop.xlane.xlu0 %1428
        %v1430 = vsel %vm1414, %v1426, 0.0
        %1431 = vadd.xlane.f32.xlu0 %v1430
        %v1432 = vpop.xlane.xlu0 %1431
        %v1433 = vrcp.pop %v1429
        %v1434 = vmul.f32 %v1424, %v1433
        %v1435 = vrcp.pop %v1432
        %v1436 = vmul.f32 %v1426, %v1435
        %v1437 = vpack.c.bf16 %v1434, %v1434
        %v1438 = vpack.c.bf16 %v1436, %v1436
        %1439 = vrot.lane.b32.xlu0 %v1315, 64
        %v1440 = vpop.permute.xlu0 %1439
        %v1442 = vsel %vm1414, %v1437, 0
        %vm1444 = vcmask 1043456
        %v1446 = vsel %vm1444, %v1440, 0
        %1448 = vmatprep.subr.bf16.mxu0 0
        %1449 = vmatpush1.bf16.msra.mxu0 0
        %1450 = vmatprep.subr.bf16.mxu0 0
        %1451 = vmatpush1.bf16.msra.mxu0 0
        %1452 = vmatprep.subr.bf16.mxu0 0
        %1453 = vmatpush1.bf16.msra.mxu0 0
        %1454 = vmatprep.subr.bf16.mxu0 0
        %1455 = vmatpush1.bf16.msra.mxu0 0
        %1456 = vmatprep.subr.bf16.mxu0 0
        %1457 = vmatpush1.bf16.msra.mxu0 0
        %1458 = vmatprep.subr.bf16.mxu0 0
        %1459 = vmatpush1.bf16.msra.mxu0 0
        %1460 = vmatprep.subr.bf16.mxu0 0
        %1461 = vmatpush1.bf16.msra.mxu0 0
        %1462 = vmatprep.subr.bf16.mxu0 0
        %1463 = vmatpush1.bf16.msra.mxu0 %v1446
        %1464 = vmatprep.subr.bf16.mxu0 0
        %1465 = vmatpush2.bf16.msra.mxu0 0
        %1466 = vmatprep.subr.bf16.mxu0 0
        %1467 = vmatpush2.bf16.msra.mxu0 0
        %1468 = vmatprep.subr.bf16.mxu0 0
        %1469 = vmatpush2.bf16.msra.mxu0 0
        %1470 = vmatprep.subr.bf16.mxu0 0
        %1471 = vmatpush2.bf16.msra.mxu0 0
        %1472 = vmatprep.subr.bf16.mxu0 0
        %1473 = vmatpush2.bf16.msra.mxu0 0
        %1474 = vmatprep.subr.bf16.mxu0 0
        %1475 = vmatpush2.bf16.msra.mxu0 0
        %1476 = vmatprep.subr.bf16.mxu0 0
        %1477 = vmatpush2.bf16.msra.mxu0 0
        %1478 = vmatprep.subr.bf16.mxu0 0
        %1479 = vmatpush2.bf16.msra.mxu0 0
        %1480 = vmatprep.mubr.bf16.mxu0 0
        %1481 = vmatmul.mubr.bf16.gmra.mxu0 %v1442
        %v1482 = vpop.f32.mrf.mxu0
        %v1483 = vadd.f32 0.0, %v1482
        %v1484 = vpop.f32.mrf.mxu0
        %v1485 = vpop.f32.mrf.mxu0
        %v1486 = vpop.f32.mrf.mxu0
        %1487 = vdwg.mxu0
        %1488 = vrot.lane.b32.xlu0 %v1316, 64
        %v1489 = vpop.permute.xlu0 %1488
        %v1491 = vsel %vm1414, %v1438, 0
        %v1494 = vsel %vm1444, %v1489, 0
        %1496 = vmatprep.subr.bf16.mxu0 0
        %1497 = vmatpush1.bf16.msra.mxu0 0
        %1498 = vmatprep.subr.bf16.mxu0 0
        %1499 = vmatpush1.bf16.msra.mxu0 0
        %1500 = vmatprep.subr.bf16.mxu0 0
        %1501 = vmatpush1.bf16.msra.mxu0 0
        %1502 = vmatprep.subr.bf16.mxu0 0
        %1503 = vmatpush1.bf16.msra.mxu0 0
        %1504 = vmatprep.subr.bf16.mxu0 0
        %1505 = vmatpush1.bf16.msra.mxu0 0
        %1506 = vmatprep.subr.bf16.mxu0 0
        %1507 = vmatpush1.bf16.msra.mxu0 0
        %1508 = vmatprep.subr.bf16.mxu0 0
        %1509 = vmatpush1.bf16.msra.mxu0 0
        %1510 = vmatprep.subr.bf16.mxu0 0
        %1511 = vmatpush1.bf16.msra.mxu0 %v1494
        %1512 = vmatprep.subr.bf16.mxu0 0
        %1513 = vmatpush2.bf16.msra.mxu0 0
        %1514 = vmatprep.subr.bf16.mxu0 0
        %1515 = vmatpush2.bf16.msra.mxu0 0
        %1516 = vmatprep.subr.bf16.mxu0 0
        %1517 = vmatpush2.bf16.msra.mxu0 0
        %1518 = vmatprep.subr.bf16.mxu0 0
        %1519 = vmatpush2.bf16.msra.mxu0 0
        %1520 = vmatprep.subr.bf16.mxu0 0
        %1521 = vmatpush2.bf16.msra.mxu0 0
        %1522 = vmatprep.subr.bf16.mxu0 0
        %1523 = vmatpush2.bf16.msra.mxu0 0
        %1524 = vmatprep.subr.bf16.mxu0 0
        %1525 = vmatpush2.bf16.msra.mxu0 0
        %1526 = vmatprep.subr.bf16.mxu0 0
        %1527 = vmatpush2.bf16.msra.mxu0 0
        %1528 = vmatprep.mubr.bf16.mxu0 0
        %1529 = vmatmul.mubr.bf16.gmra.mxu0 %v1491
        %v1530 = vpop.f32.mrf.mxu0
        %v1531 = vadd.f32 0.0, %v1530
        %v1532 = vpop.f32.mrf.mxu0
        %v1533 = vpop.f32.mrf.mxu0
        %v1534 = vpop.f32.mrf.mxu0
        %1535 = vdwg.mxu0
        %v1536 = vpack.c.bf16 %v1531, %v1483
        %v1537 = vld [vmem:[%s13] sm:$0xf]
        %v1538 = vld [vmem:[%s13 + $0x4] sm:$0xf]
        %1539 = vrot.lane.b32.xlu0 %v1315, 112
        %v1540 = vpop.permute.xlu0 %1539
        %1541 = vrot.lane.b32.xlu0 %v1315, 80
        %v1542 = vpop.permute.xlu0 %1541
        %v1544 = vsel %vm1319, %v1540, 0
        %v1547 = vsel %vm1319, %v1542, 0
        %1549 = vmatprep.subr.bf16.mxu0 0
        %1550 = vmatpush1.bf16.xpose.msra.mxu0 0
        %1551 = vmatprep.subr.bf16.mxu0 0
        %1552 = vmatpush1.bf16.xpose.msra.mxu0 0
        %1553 = vmatprep.subr.bf16.mxu0 0
        %1554 = vmatpush1.bf16.xpose.msra.mxu0 0
        %1555 = vmatprep.subr.bf16.mxu0 0
        %1556 = vmatpush1.bf16.xpose.msra.mxu0 0
        %1557 = vmatprep.subr.bf16.mxu0 0
        %1558 = vmatpush1.bf16.xpose.msra.mxu0 0
        %1559 = vmatprep.subr.bf16.mxu0 0
        %1560 = vmatpush1.bf16.xpose.msra.mxu0 0
        %1561 = vmatprep.subr.bf16.mxu0 0
        %1562 = vmatpush1.bf16.xpose.msra.mxu0 0
        %1563 = vmatprep.subr.bf16.mxu0 0
        %1564 = vmatpush1.bf16.xpose.msra.mxu0 %v1547
        %1565 = vmatprep.subr.bf16.mxu0 0
        %1566 = vmatpush2.bf16.xpose.msra.mxu0 0
        %1567 = vmatprep.subr.bf16.mxu0 0
        %1568 = vmatpush2.bf16.xpose.msra.mxu0 0
        %1569 = vmatprep.subr.bf16.mxu0 0
        %1570 = vmatpush2.bf16.xpose.msra.mxu0 0
        %1571 = vmatprep.subr.bf16.mxu0 0
        %1572 = vmatpush2.bf16.xpose.msra.mxu0 0
        %1573 = vmatprep.subr.bf16.mxu0 0
        %1574 = vmatpush2.bf16.xpose.msra.mxu0 0
        %1575 = vmatprep.subr.bf16.mxu0 0
        %1576 = vmatpush2.bf16.xpose.msra.mxu0 0
        %1577 = vmatprep.subr.bf16.mxu0 0
        %1578 = vmatpush2.bf16.xpose.msra.mxu0 0
        %1579 = vmatprep.subr.bf16.mxu0 0
        %1580 = vmatpush2.bf16.xpose.msra.mxu0 0
        %1581 = vmatprep.mubr.bf16.mxu0 0
        %1582 = vmatmul.mubr.bf16.gmra.mxu0 %v1544
        %v1583 = vpop.f32.mrf.mxu0
        %v1584 = vadd.f32 0.0, %v1583
        %v1585 = vpop.f32.mrf.mxu0
        %v1586 = vpop.f32.mrf.mxu0
        %v1587 = vpop.f32.mrf.mxu0
        %1588 = vdwg.mxu0
        %1589 = vrot.lane.b32.xlu0 %v1316, 112
        %v1590 = vpop.permute.xlu0 %1589
        %1591 = vrot.lane.b32.xlu0 %v1316, 80
        %v1592 = vpop.permute.xlu0 %1591
        %v1594 = vsel %vm1319, %v1590, 0
        %v1597 = vsel %vm1319, %v1592, 0
        %1599 = vmatprep.subr.bf16.mxu0 0
        %1600 = vmatpush1.bf16.xpose.msra.mxu0 0
        %1601 = vmatprep.subr.bf16.mxu0 0
        %1602 = vmatpush1.bf16.xpose.msra.mxu0 0
        %1603 = vmatprep.subr.bf16.mxu0 0
        %1604 = vmatpush1.bf16.xpose.msra.mxu0 0
        %1605 = vmatprep.subr.bf16.mxu0 0
        %1606 = vmatpush1.bf16.xpose.msra.mxu0 0
        %1607 = vmatprep.subr.bf16.mxu0 0
        %1608 = vmatpush1.bf16.xpose.msra.mxu0 0
        %1609 = vmatprep.subr.bf16.mxu0 0
        %1610 = vmatpush1.bf16.xpose.msra.mxu0 0
        %1611 = vmatprep.subr.bf16.mxu0 0
        %1612 = vmatpush1.bf16.xpose.msra.mxu0 0
        %1613 = vmatprep.subr.bf16.mxu0 0
        %1614 = vmatpush1.bf16.xpose.msra.mxu0 %v1597
        %1615 = vmatprep.subr.bf16.mxu0 0
        %1616 = vmatpush2.bf16.xpose.msra.mxu0 0
        %1617 = vmatprep.subr.bf16.mxu0 0
        %1618 = vmatpush2.bf16.xpose.msra.mxu0 0
        %1619 = vmatprep.subr.bf16.mxu0 0
        %1620 = vmatpush2.bf16.xpose.msra.mxu0 0
        %1621 = vmatprep.subr.bf16.mxu0 0
        %1622 = vmatpush2.bf16.xpose.msra.mxu0 0
        %1623 = vmatprep.subr.bf16.mxu0 0
        %1624 = vmatpush2.bf16.xpose.msra.mxu0 0
        %1625 = vmatprep.subr.bf16.mxu0 0
        %1626 = vmatpush2.bf16.xpose.msra.mxu0 0
        %1627 = vmatprep.subr.bf16.mxu0 0
        %1628 = vmatpush2.bf16.xpose.msra.mxu0 0
        %1629 = vmatprep.subr.bf16.mxu0 0
        %1630 = vmatpush2.bf16.xpose.msra.mxu0 0
        %1631 = vmatprep.mubr.bf16.mxu0 0
        %1632 = vmatmul.mubr.bf16.gmra.mxu0 %v1594
        %v1633 = vpop.f32.mrf.mxu0
        %v1634 = vadd.f32 0.0, %v1633
        %v1635 = vpop.f32.mrf.mxu0
        %v1636 = vpop.f32.mrf.mxu0
        %v1637 = vpop.f32.mrf.mxu0
        %1638 = vdwg.mxu0
        %v1639 = vsel %vm1414, %v1584, -inf
        %1640 = vmax.xlane.f32.xlu0 %v1639
        %v1641 = vpop.xlane.xlu0 %1640
        %v1642 = vsel %vm1414, %v1634, -inf
        %1643 = vmax.xlane.f32.xlu0 %v1642
        %v1644 = vpop.xlane.xlu0 %1643
        %v1645 = vsub.f32 %v1584, %v1641
        %v1646 = vsub.f32 %v1634, %v1644
        %v1647 = vmul.f32 %v1645, 1.442695
        %v1648 = vpow.pop %v1647
        %v1649 = vmul.f32 %v1646, 1.442695
        %v1650 = vpow.pop %v1649
        %v1651 = vsel %vm1414, %v1648, 0.0
        %1652 = vadd.xlane.f32.xlu0 %v1651
        %v1653 = vpop.xlane.xlu0 %1652
        %v1654 = vsel %vm1414, %v1650, 0.0
        %1655 = vadd.xlane.f32.xlu0 %v1654
        %v1656 = vpop.xlane.xlu0 %1655
        %v1657 = vrcp.pop %v1653
        %v1658 = vmul.f32 %v1648, %v1657
        %v1659 = vrcp.pop %v1656
        %v1660 = vmul.f32 %v1650, %v1659
        %v1661 = vpack.c.bf16 %v1658, %v1658
        %v1662 = vpack.c.bf16 %v1660, %v1660
        %1663 = vrot.lane.b32.xlu0 %v1315, 48
        %v1664 = vpop.permute.xlu0 %1663
        %v1666 = vsel %vm1414, %v1661, 0
        %v1669 = vsel %vm1444, %v1664, 0
        %1671 = vmatprep.subr.bf16.mxu0 0
        %1672 = vmatpush1.bf16.msra.mxu0 0
        %1673 = vmatprep.subr.bf16.mxu0 0
        %1674 = vmatpush1.bf16.msra.mxu0 0
        %1675 = vmatprep.subr.bf16.mxu0 0
        %1676 = vmatpush1.bf16.msra.mxu0 0
        %1677 = vmatprep.subr.bf16.mxu0 0
        %1678 = vmatpush1.bf16.msra.mxu0 0
        %1679 = vmatprep.subr.bf16.mxu0 0
        %1680 = vmatpush1.bf16.msra.mxu0 0
        %1681 = vmatprep.subr.bf16.mxu0 0
        %1682 = vmatpush1.bf16.msra.mxu0 0
        %1683 = vmatprep.subr.bf16.mxu0 0
        %1684 = vmatpush1.bf16.msra.mxu0 0
        %1685 = vmatprep.subr.bf16.mxu0 0
        %1686 = vmatpush1.bf16.msra.mxu0 %v1669
        %1687 = vmatprep.subr.bf16.mxu0 0
        %1688 = vmatpush2.bf16.msra.mxu0 0
        %1689 = vmatprep.subr.bf16.mxu0 0
        %1690 = vmatpush2.bf16.msra.mxu0 0
        %1691 = vmatprep.subr.bf16.mxu0 0
        %1692 = vmatpush2.bf16.msra.mxu0 0
        %1693 = vmatprep.subr.bf16.mxu0 0
        %1694 = vmatpush2.bf16.msra.mxu0 0
        %1695 = vmatprep.subr.bf16.mxu0 0
        %1696 = vmatpush2.bf16.msra.mxu0 0
        %1697 = vmatprep.subr.bf16.mxu0 0
        %1698 = vmatpush2.bf16.msra.mxu0 0
        %1699 = vmatprep.subr.bf16.mxu0 0
        %1700 = vmatpush2.bf16.msra.mxu0 0
        %1701 = vmatprep.subr.bf16.mxu0 0
        %1702 = vmatpush2.bf16.msra.mxu0 0
        %1703 = vmatprep.mubr.bf16.mxu0 0
        %1704 = vmatmul.mubr.bf16.gmra.mxu0 %v1666
        %v1705 = vpop.f32.mrf.mxu0
        %v1706 = vadd.f32 0.0, %v1705
        %v1707 = vpop.f32.mrf.mxu0
        %v1708 = vpop.f32.mrf.mxu0
        %v1709 = vpop.f32.mrf.mxu0
        %1710 = vdwg.mxu0
        %1711 = vrot.lane.b32.xlu0 %v1316, 48
        %v1712 = vpop.permute.xlu0 %1711
        %v1714 = vsel %vm1414, %v1662, 0
        %v1717 = vsel %vm1444, %v1712, 0
        %1719 = vmatprep.subr.bf16.mxu0 0
        %1720 = vmatpush1.bf16.msra.mxu0 0
        %1721 = vmatprep.subr.bf16.mxu0 0
        %1722 = vmatpush1.bf16.msra.mxu0 0
        %1723 = vmatprep.subr.bf16.mxu0 0
        %1724 = vmatpush1.bf16.msra.mxu0 0
        %1725 = vmatprep.subr.bf16.mxu0 0
        %1726 = vmatpush1.bf16.msra.mxu0 0
        %1727 = vmatprep.subr.bf16.mxu0 0
        %1728 = vmatpush1.bf16.msra.mxu0 0
        %1729 = vmatprep.subr.bf16.mxu0 0
        %1730 = vmatpush1.bf16.msra.mxu0 0
        %1731 = vmatprep.subr.bf16.mxu0 0
        %1732 = vmatpush1.bf16.msra.mxu0 0
        %1733 = vmatprep.subr.bf16.mxu0 0
        %1734 = vmatpush1.bf16.msra.mxu0 %v1717
        %1735 = vmatprep.subr.bf16.mxu0 0
        %1736 = vmatpush2.bf16.msra.mxu0 0
        %1737 = vmatprep.subr.bf16.mxu0 0
        %1738 = vmatpush2.bf16.msra.mxu0 0
        %1739 = vmatprep.subr.bf16.mxu0 0
        %1740 = vmatpush2.bf16.msra.mxu0 0
        %1741 = vmatprep.subr.bf16.mxu0 0
        %1742 = vmatpush2.bf16.msra.mxu0 0
        %1743 = vmatprep.subr.bf16.mxu0 0
        %1744 = vmatpush2.bf16.msra.mxu0 0
        %1745 = vmatprep.subr.bf16.mxu0 0
        %1746 = vmatpush2.bf16.msra.mxu0 0
        %1747 = vmatprep.subr.bf16.mxu0 0
        %1748 = vmatpush2.bf16.msra.mxu0 0
        %1749 = vmatprep.subr.bf16.mxu0 0
        %1750 = vmatpush2.bf16.msra.mxu0 0
        %1751 = vmatprep.mubr.bf16.mxu0 0
        %1752 = vmatmul.mubr.bf16.gmra.mxu0 %v1714
        %v1753 = vpop.f32.mrf.mxu0
        %v1754 = vadd.f32 0.0, %v1753
        %v1755 = vpop.f32.mrf.mxu0
        %v1756 = vpop.f32.mrf.mxu0
        %v1757 = vpop.f32.mrf.mxu0
        %1758 = vdwg.mxu0
        %v1759 = vpack.c.bf16 %v1754, %v1706
        %s1760 = scalar_lea.vmem %s13, 8
        %v1761 = vld [vmem:[%s1760] sm:$0xf]
        %v1762 = vld [vmem:[%s1760 + $0x4] sm:$0xf]
        %v1765 = vunpack.c.l.b16 %v1761
        %v1766 = vunpack.c.l.b16 %v1762
        %v1767 = vpack.c.b16 %v1766, %v1765
        %v1770 = vsel %vm1319, %v1759, 0
        %1772 = vmatprep.subr.bf16.mxu0 0
        %1773 = vmatpush1.bf16.msra.mxu0 0
        %1774 = vmatprep.subr.bf16.mxu0 0
        %1775 = vmatpush1.bf16.msra.mxu0 0
        %1776 = vmatprep.subr.bf16.mxu0 0
        %1777 = vmatpush1.bf16.msra.mxu0 0
        %1778 = vmatprep.subr.bf16.mxu0 0
        %1779 = vmatpush1.bf16.msra.mxu0 0
        %1780 = vmatprep.subr.bf16.mxu0 0
        %1781 = vmatpush1.bf16.msra.mxu0 0
        %1782 = vmatprep.subr.bf16.mxu0 0
        %1783 = vmatpush1.bf16.msra.mxu0 0
        %1784 = vmatprep.subr.bf16.mxu0 0
        %1785 = vmatpush1.bf16.msra.mxu0 0
        %1786 = vmatprep.subr.bf16.mxu0 0
        %1787 = vmatpush1.bf16.msra.mxu0 %v1767
        %1788 = vmatprep.subr.bf16.mxu0 0
        %1789 = vmatpush2.bf16.msra.mxu0 0
        %1790 = vmatprep.subr.bf16.mxu0 0
        %1791 = vmatpush2.bf16.msra.mxu0 0
        %1792 = vmatprep.subr.bf16.mxu0 0
        %1793 = vmatpush2.bf16.msra.mxu0 0
        %1794 = vmatprep.subr.bf16.mxu0 0
        %1795 = vmatpush2.bf16.msra.mxu0 0
        %1796 = vmatprep.subr.bf16.mxu0 0
        %1797 = vmatpush2.bf16.msra.mxu0 0
        %1798 = vmatprep.subr.bf16.mxu0 0
        %1799 = vmatpush2.bf16.msra.mxu0 0
        %1800 = vmatprep.subr.bf16.mxu0 0
        %1801 = vmatpush2.bf16.msra.mxu0 0
        %1802 = vmatprep.subr.bf16.mxu0 0
        %1803 = vmatpush2.bf16.msra.mxu0 0
        %1804 = vmatprep.mubr.bf16.mxu0 0
        %1805 = vmatmul.mubr.bf16.gmra.mxu0 %v1770
        %v1806 = vpop.f32.mrf.mxu0
        %v1807 = vadd.f32 0.0, %v1806
        %v1808 = vpop.f32.mrf.mxu0
        %v1809 = vpop.f32.mrf.mxu0
        %v1810 = vadd.f32 0.0, %v1809
        %v1811 = vpop.f32.mrf.mxu0
        %1812 = vdwg.mxu0
        %v1815 = vunpack.c.l.b16 %v1537
        %v1816 = vunpack.c.l.b16 %v1538
        %v1817 = vpack.c.b16 %v1816, %v1815
        %v1820 = vsel %vm1319, %v1536, 0
        %1822 = vmatprep.subr.bf16.mxu0 0
        %1823 = vmatpush1.bf16.msra.mxu0 0
        %1824 = vmatprep.subr.bf16.mxu0 0
        %1825 = vmatpush1.bf16.msra.mxu0 0
        %1826 = vmatprep.subr.bf16.mxu0 0
        %1827 = vmatpush1.bf16.msra.mxu0 0
        %1828 = vmatprep.subr.bf16.mxu0 0
        %1829 = vmatpush1.bf16.msra.mxu0 0
        %1830 = vmatprep.subr.bf16.mxu0 0
        %1831 = vmatpush1.bf16.msra.mxu0 0
        %1832 = vmatprep.subr.bf16.mxu0 0
        %1833 = vmatpush1.bf16.msra.mxu0 0
        %1834 = vmatprep.subr.bf16.mxu0 0
        %1835 = vmatpush1.bf16.msra.mxu0 0
        %1836 = vmatprep.subr.bf16.mxu0 0
        %1837 = vmatpush1.bf16.msra.mxu0 %v1817
        %1838 = vmatprep.subr.bf16.mxu0 0
        %1839 = vmatpush2.bf16.msra.mxu0 0
        %1840 = vmatprep.subr.bf16.mxu0 0
        %1841 = vmatpush2.bf16.msra.mxu0 0
        %1842 = vmatprep.subr.bf16.mxu0 0
        %1843 = vmatpush2.bf16.msra.mxu0 0
        %1844 = vmatprep.subr.bf16.mxu0 0
        %1845 = vmatpush2.bf16.msra.mxu0 0
        %1846 = vmatprep.subr.bf16.mxu0 0
        %1847 = vmatpush2.bf16.msra.mxu0 0
        %1848 = vmatprep.subr.bf16.mxu0 0
        %1849 = vmatpush2.bf16.msra.mxu0 0
        %1850 = vmatprep.subr.bf16.mxu0 0
        %1851 = vmatpush2.bf16.msra.mxu0 0
        %1852 = vmatprep.subr.bf16.mxu0 0
        %1853 = vmatpush2.bf16.msra.mxu0 0
        %1854 = vmatprep.mubr.bf16.mxu0 0
        %1855 = vmatmul.mubr.bf16.gmra.mxu0 %v1820
        %v1856 = vpop.f32.mrf.mxu0
        %v1857 = vadd.f32 %v1807, %v1856
        %v1858 = vpop.f32.mrf.mxu0
        %v1859 = vpop.f32.mrf.mxu0
        %v1860 = vadd.f32 %v1810, %v1859
        %v1861 = vpop.f32.mrf.mxu0
        %1862 = vdwg.mxu0
        %v1863 = vld [vmem:[#allocation7] sm:$0x1]
        %v1865 = vlaneseq
        %v1866 = vshrl.u32 %v1865, 7
        %v1867 = vsub.s32 0, %v1866
        %v1868 = vrot.slane %v1863, %v1867
        %v1870 = vadd.f32 %v1857, %v1868
        %v1871 = vadd.f32 %v1860, %v1868
        %v1872 = vadd.f32 %v1241, %v1870
        %v1873 = vadd.f32 %v1242, %v1871
        %v1874 = vld [vmem:[#allocation9] sm:$0x1]
        %v1875 = vld [vmem:[#allocation10] sm:$0x1]
        %v1876 = vsel %vm1199, %v1872, 0.0
        %1877 = vadd.xlane.f32.xlu0 %v1876
        %v1878 = vpop.xlane.xlu0 %1877
        %v1879 = vsel %vm1199, %v1873, 0.0
        %1880 = vadd.xlane.f32.xlu0 %v1879
        %v1881 = vpop.xlane.xlu0 %1880
        %v1882 = vmul.f32 %v1878, %v1206
        %v1883 = vmul.f32 %v1881, %v1206
        %v1884 = vsub.f32 %v1872, %v1882
        %v1885 = vsub.f32 %v1873, %v1883
        %v1886 = vmul.f32 %v1884, %v1884
        %v1887 = vmul.f32 %v1885, %v1885
        %v1888 = vsel %vm1199, %v1886, 0.0
        %1889 = vadd.xlane.f32.xlu0 %v1888
        %v1890 = vpop.xlane.xlu0 %1889
        %v1891 = vsel %vm1199, %v1887, 0.0
        %1892 = vadd.xlane.f32.xlu0 %v1891
        %v1893 = vpop.xlane.xlu0 %1892
        %v1894 = vmul.f32 %v1890, %v1206
        %v1895 = vmul.f32 %v1893, %v1206
        %v1896 = vadd.f32 %v1894, 1e-12
        %v1897 = vadd.f32 %v1895, 1e-12
        %v1898 = vrsqrt.pop %v1896
        %v1899 = vrsqrt.pop %v1897
        %v1900 = vmul.f32 %v1884, %v1898
        %v1901 = vmul.f32 %v1885, %v1899
        %v1903 = vlaneseq
        %v1904 = vshrl.u32 %v1903, 7
        %v1905 = vsub.s32 0, %v1904
        %v1906 = vrot.slane %v1874, %v1905
        %v1908 = vmul.f32 %v1900, %v1906
        %v1909 = vmul.f32 %v1901, %v1906
        %v1911 = vlaneseq
        %v1912 = vshrl.u32 %v1911, 7
        %v1913 = vsub.s32 0, %v1912
        %v1914 = vrot.slane %v1875, %v1913
        %v1916 = vadd.f32 %v1908, %v1914
        %v1917 = vadd.f32 %v1909, %v1914
        %v1918 = vld [vmem:[%s21] sm:$0xf]
        %v1919 = vld [vmem:[%s21 + $0x4] sm:$0xf]
        %v1920 = vld [vmem:[%s21 + $0x8] sm:$0xf]
        %v1921 = vld [vmem:[%s21 + $0xc] sm:$0xf]
        %v1922 = vpack.c.bf16 %v1917, %v1916
        %v1923 = vld [vmem:[#allocation12] sm:$0x1]
        %v1925 = vlaneseq
        %v1926 = vshrl.u32 %v1925, 7
        %v1927 = vsub.s32 0, %v1926
        %v1928 = vrot.slane %v1923, %v1927
        %v1934 = vunpack.c.l.b16 %v1918
        %v1935 = vunpack.c.l.b16 %v1919
        %v1936 = vunpack.c.l.b16 %v1920
        %v1937 = vunpack.c.l.b16 %v1921
        %v1938 = vpack.c.b16 %v1935, %v1934
        %v1939 = vpack.c.b16 %v1937, %v1936
        %v1943 = vsel %vm1199, %v1922, 0
        %1945 = vmatprep.subr.bf16.mxu0 0
        %1946 = vmatpush1.bf16.msra.mxu0 0
        %1947 = vmatprep.subr.bf16.mxu0 0
        %1948 = vmatpush1.bf16.msra.mxu0 0
        %1949 = vmatprep.subr.bf16.mxu0 0
        %1950 = vmatpush1.bf16.msra.mxu0 0
        %1951 = vmatprep.subr.bf16.mxu0 0
        %1952 = vmatpush1.bf16.msra.mxu0 0
        %1953 = vmatprep.subr.bf16.mxu0 0
        %1954 = vmatpush1.bf16.msra.mxu0 0
        %1955 = vmatprep.subr.bf16.mxu0 0
        %1956 = vmatpush1.bf16.msra.mxu0 0
        %1957 = vmatprep.subr.bf16.mxu0 0
        %1958 = vmatpush1.bf16.msra.mxu0 %v1939
        %1959 = vmatprep.subr.bf16.mxu0 0
        %1960 = vmatpush1.bf16.msra.mxu0 %v1938
        %1961 = vmatprep.subr.bf16.mxu0 0
        %1962 = vmatpush2.bf16.msra.mxu0 0
        %1963 = vmatprep.subr.bf16.mxu0 0
        %1964 = vmatpush2.bf16.msra.mxu0 0
        %1965 = vmatprep.subr.bf16.mxu0 0
        %1966 = vmatpush2.bf16.msra.mxu0 0
        %1967 = vmatprep.subr.bf16.mxu0 0
        %1968 = vmatpush2.bf16.msra.mxu0 0
        %1969 = vmatprep.subr.bf16.mxu0 0
        %1970 = vmatpush2.bf16.msra.mxu0 0
        %1971 = vmatprep.subr.bf16.mxu0 0
        %1972 = vmatpush2.bf16.msra.mxu0 0
        %1973 = vmatprep.subr.bf16.mxu0 0
        %1974 = vmatpush2.bf16.msra.mxu0 0
        %1975 = vmatprep.subr.bf16.mxu0 0
        %1976 = vmatpush2.bf16.msra.mxu0 0
        %1977 = vmatprep.mubr.bf16.mxu0 0
        %1978 = vmatmul.mubr.bf16.gmra.mxu0 %v1943
        %v1979 = vpop.f32.mrf.mxu0
        %v1980 = vadd.f32 %v1928, %v1979
        %v1981 = vpop.f32.mrf.mxu0
        %v1982 = vpop.f32.mrf.mxu0
        %v1983 = vadd.f32 %v1928, %v1982
        %v1984 = vpop.f32.mrf.mxu0
        %1985 = vdwg.mxu0
        %v1986 = vmul.f32 %v1980, %v1980
        %v1987 = vmul.f32 %v1983, %v1983
        %v1988 = vmul.f32 %v1980, %v1986
        %v1989 = vmul.f32 %v1983, %v1987
        %v1990 = vmul.f32 %v1988, 0.044715
        %v1991 = vmul.f32 %v1989, 0.044715
        %v1992 = vadd.f32 %v1980, %v1990
        %v1993 = vadd.f32 %v1983, %v1991
        %v1994 = vmul.f32 %v1992, 0.7978846
        %v1995 = vmul.f32 %v1993, 0.7978846
        %v1996 = vtanh.pop %v1994
        %v1997 = vtanh.pop %v1995
        %v1998 = vadd.f32 %v1996, 1.0
        %v1999 = vadd.f32 %v1997, 1.0
        %v2000 = vmul.f32 %v1998, 0.5
        %v2001 = vmul.f32 %v1999, 0.5
        %v2002 = vmul.f32 %v1980, %v2000
        %v2003 = vmul.f32 %v1983, %v2001
        %v2004 = vld [vmem:[%s25] sm:$0xf]
        %v2005 = vld [vmem:[%s25 + $0x4] sm:$0xf]
        %v2006 = vld [vmem:[%s25 + $0x8] sm:$0xf]
        %v2007 = vld [vmem:[%s25 + $0xc] sm:$0xf]
        %v2008 = vld [vmem:[%s25 + $0x10] sm:$0xf]
        %v2009 = vld [vmem:[%s25 + $0x14] sm:$0xf]
        %v2010 = vld [vmem:[%s25 + $0x18] sm:$0xf]
        %v2011 = vld [vmem:[%s25 + $0x1c] sm:$0xf]
        %v2012 = vld [vmem:[%s25 + $0x20] sm:$0xf]
        %v2013 = vld [vmem:[%s25 + $0x24] sm:$0xf]
        %v2014 = vld [vmem:[%s25 + $0x28] sm:$0xf]
        %v2015 = vld [vmem:[%s25 + $0x2c] sm:$0xf]
        %v2016 = vld [vmem:[%s25 + $0x30] sm:$0xf]
        %v2017 = vld [vmem:[%s25 + $0x34] sm:$0xf]
        %v2018 = vld [vmem:[%s25 + $0x38] sm:$0xf]
        %v2019 = vld [vmem:[%s25 + $0x3c] sm:$0xf]
        %v2020 = vpack.c.bf16 %v2003, %v2002
        %v2021 = vld [vmem:[#allocation13] sm:$0x1]
        %v2023 = vlaneseq
        %v2024 = vshrl.u32 %v2023, 7
        %v2025 = vsub.s32 0, %v2024
        %v2026 = vrot.slane %v2021, %v2025
        %v2044 = vunpack.c.l.b16 %v2004
        %v2045 = vunpack.c.l.b16 %v2005
        %v2046 = vunpack.c.l.b16 %v2006
        %v2047 = vunpack.c.l.b16 %v2007
        %v2048 = vunpack.c.l.b16 %v2008
        %v2049 = vunpack.c.l.b16 %v2009
        %v2050 = vunpack.c.l.b16 %v2010
        %v2051 = vunpack.c.l.b16 %v2011
        %v2052 = vunpack.c.l.b16 %v2012
        %v2053 = vunpack.c.l.b16 %v2013
        %v2054 = vunpack.c.l.b16 %v2014
        %v2055 = vunpack.c.l.b16 %v2015
        %v2056 = vunpack.c.l.b16 %v2016
        %v2057 = vunpack.c.l.b16 %v2017
        %v2058 = vunpack.c.l.b16 %v2018
        %v2059 = vunpack.c.l.b16 %v2019
        %v2060 = vpack.c.b16 %v2045, %v2044
        %v2061 = vpack.c.b16 %v2047, %v2046
        %v2062 = vpack.c.b16 %v2049, %v2048
        %v2063 = vpack.c.b16 %v2051, %v2050
        %v2064 = vpack.c.b16 %v2053, %v2052
        %v2065 = vpack.c.b16 %v2055, %v2054
        %v2066 = vpack.c.b16 %v2057, %v2056
        %v2067 = vpack.c.b16 %v2059, %v2058
        %2076 = vmatprep.subr.bf16.mxu0 0
        %2077 = vmatpush1.bf16.msra.mxu0 %v2067
        %2078 = vmatprep.subr.bf16.mxu0 0
        %2079 = vmatpush1.bf16.msra.mxu0 %v2066
        %2080 = vmatprep.subr.bf16.mxu0 0
        %2081 = vmatpush1.bf16.msra.mxu0 %v2065
        %2082 = vmatprep.subr.bf16.mxu0 0
        %2083 = vmatpush1.bf16.msra.mxu0 %v2064
        %2084 = vmatprep.subr.bf16.mxu0 0
        %2085 = vmatpush1.bf16.msra.mxu0 %v2063
        %2086 = vmatprep.subr.bf16.mxu0 0
        %2087 = vmatpush1.bf16.msra.mxu0 %v2062
        %2088 = vmatprep.subr.bf16.mxu0 0
        %2089 = vmatpush1.bf16.msra.mxu0 %v2061
        %2090 = vmatprep.subr.bf16.mxu0 0
        %2091 = vmatpush1.bf16.msra.mxu0 %v2060
        %2092 = vmatprep.subr.bf16.mxu0 0
        %2093 = vmatpush2.bf16.msra.mxu0 0
        %2094 = vmatprep.subr.bf16.mxu0 0
        %2095 = vmatpush2.bf16.msra.mxu0 0
        %2096 = vmatprep.subr.bf16.mxu0 0
        %2097 = vmatpush2.bf16.msra.mxu0 0
        %2098 = vmatprep.subr.bf16.mxu0 0
        %2099 = vmatpush2.bf16.msra.mxu0 0
        %2100 = vmatprep.subr.bf16.mxu0 0
        %2101 = vmatpush2.bf16.msra.mxu0 0
        %2102 = vmatprep.subr.bf16.mxu0 0
        %2103 = vmatpush2.bf16.msra.mxu0 0
        %2104 = vmatprep.subr.bf16.mxu0 0
        %2105 = vmatpush2.bf16.msra.mxu0 0
        %2106 = vmatprep.subr.bf16.mxu0 0
        %2107 = vmatpush2.bf16.msra.mxu0 0
        %2108 = vmatprep.mubr.bf16.mxu0 0
        %2109 = vmatmul.mubr.bf16.gmra.mxu0 %v2020
        %v2110 = vpop.f32.mrf.mxu0
        %v2111 = vadd.f32 %v2026, %v2110
        %v2112 = vpop.f32.mrf.mxu0
        %v2113 = vpop.f32.mrf.mxu0
        %v2114 = vadd.f32 %v2026, %v2113
        %v2115 = vpop.f32.mrf.mxu0
        %2116 = vdwg.mxu0
        %v2117 = vadd.f32 %v1916, %v2111
        %v2118 = vadd.f32 %v1917, %v2114
        %v2119 = vld [vmem:[#allocation15] sm:$0x1]
        %v2120 = vld [vmem:[#allocation16] sm:$0x1]
        %v2121 = vsel %vm1199, %v2117, 0.0
        %2122 = vadd.xlane.f32.xlu0 %v2121
        %v2123 = vpop.xlane.xlu0 %2122
        %v2124 = vsel %vm1199, %v2118, 0.0
        %2125 = vadd.xlane.f32.xlu0 %v2124
        %v2126 = vpop.xlane.xlu0 %2125
        %v2127 = vmul.f32 %v2123, %v1206
        %v2128 = vmul.f32 %v2126, %v1206
        %v2129 = vsub.f32 %v2117, %v2127
        %v2130 = vsub.f32 %v2118, %v2128
        %v2131 = vmul.f32 %v2129, %v2129
        %v2132 = vmul.f32 %v2130, %v2130
        %v2133 = vsel %vm1199, %v2131, 0.0
        %2134 = vadd.xlane.f32.xlu0 %v2133
        %v2135 = vpop.xlane.xlu0 %2134
        %v2136 = vsel %vm1199, %v2132, 0.0
        %2137 = vadd.xlane.f32.xlu0 %v2136
        %v2138 = vpop.xlane.xlu0 %2137
        %v2139 = vmul.f32 %v2135, %v1206
        %v2140 = vmul.f32 %v2138, %v1206
        %v2141 = vadd.f32 %v2139, 1e-12
        %v2142 = vadd.f32 %v2140, 1e-12
        %v2143 = vrsqrt.pop %v2141
        %v2144 = vrsqrt.pop %v2142
        %v2145 = vmul.f32 %v2129, %v2143
        %v2146 = vmul.f32 %v2130, %v2144
        %v2148 = vlaneseq
        %v2149 = vshrl.u32 %v2148, 7
        %v2150 = vsub.s32 0, %v2149
        %v2151 = vrot.slane %v2119, %v2150
        %v2153 = vmul.f32 %v2145, %v2151
        %v2154 = vmul.f32 %v2146, %v2151
        %v2156 = vlaneseq
        %v2157 = vshrl.u32 %v2156, 7
        %v2158 = vsub.s32 0, %v2157
        %v2159 = vrot.slane %v2120, %v2158
        %v2161 = vadd.f32 %v2153, %v2159
        %v2162 = vadd.f32 %v2154, %v2159
        %v2163 = vld [vmem:[#allocation18] sm:$0xf]
        %v2164 = vld [vmem:[#allocation18 + $0x4] sm:$0xf]
        %v2165 = vld [vmem:[#allocation18 + $0x8] sm:$0xf]
        %v2166 = vld [vmem:[#allocation18 + $0xc] sm:$0xf]
        %v2167 = vpack.c.bf16 %v2162, %v2161
        %v2168 = vld [vmem:[#allocation19] sm:$0x1]
        %v2170 = vlaneseq
        %v2171 = vshrl.u32 %v2170, 7
        %v2172 = vsub.s32 0, %v2171
        %v2173 = vrot.slane %v2168, %v2172
        %v2179 = vunpack.c.l.b16 %v2163
        %v2180 = vunpack.c.l.b16 %v2164
        %v2181 = vunpack.c.l.b16 %v2165
        %v2182 = vunpack.c.l.b16 %v2166
        %v2183 = vpack.c.b16 %v2180, %v2179
        %v2184 = vpack.c.b16 %v2182, %v2181
        %v2188 = vsel %vm1199, %v2167, 0
        %2190 = vmatprep.subr.bf16.mxu0 0
        %2191 = vmatpush1.bf16.msra.mxu0 0
        %2192 = vmatprep.subr.bf16.mxu0 0
        %2193 = vmatpush1.bf16.msra.mxu0 0
        %2194 = vmatprep.subr.bf16.mxu0 0
        %2195 = vmatpush1.bf16.msra.mxu0 0
        %2196 = vmatprep.subr.bf16.mxu0 0
        %2197 = vmatpush1.bf16.msra.mxu0 0
        %2198 = vmatprep.subr.bf16.mxu0 0
        %2199 = vmatpush1.bf16.msra.mxu0 0
        %2200 = vmatprep.subr.bf16.mxu0 0
        %2201 = vmatpush1.bf16.msra.mxu0 0
        %2202 = vmatprep.subr.bf16.mxu0 0
        %2203 = vmatpush1.bf16.msra.mxu0 %v2184
        %2204 = vmatprep.subr.bf16.mxu0 0
        %2205 = vmatpush1.bf16.msra.mxu0 %v2183
        %2206 = vmatprep.subr.bf16.mxu0 0
        %2207 = vmatpush2.bf16.msra.mxu0 0
        %2208 = vmatprep.subr.bf16.mxu0 0
        %2209 = vmatpush2.bf16.msra.mxu0 0
        %2210 = vmatprep.subr.bf16.mxu0 0
        %2211 = vmatpush2.bf16.msra.mxu0 0
        %2212 = vmatprep.subr.bf16.mxu0 0
        %2213 = vmatpush2.bf16.msra.mxu0 0
        %2214 = vmatprep.subr.bf16.mxu0 0
        %2215 = vmatpush2.bf16.msra.mxu0 0
        %2216 = vmatprep.subr.bf16.mxu0 0
        %2217 = vmatpush2.bf16.msra.mxu0 0
        %2218 = vmatprep.subr.bf16.mxu0 0
        %2219 = vmatpush2.bf16.msra.mxu0 0
        %2220 = vmatprep.subr.bf16.mxu0 0
        %2221 = vmatpush2.bf16.msra.mxu0 0
        %2222 = vmatprep.mubr.bf16.mxu0 0
        %2223 = vmatmul.mubr.bf16.gmra.mxu0 %v2188
        %v2224 = vpop.f32.mrf.mxu0
        %v2225 = vadd.f32 %v2173, %v2224
        %v2226 = vpop.f32.mrf.mxu0
        %v2227 = vpop.f32.mrf.mxu0
        %v2228 = vadd.f32 %v2173, %v2227
        %v2229 = vpop.f32.mrf.mxu0
        %2230 = vdwg.mxu0
        %v2231 = vld [vmem:[%s37] sm:$0xf]
        %v2232 = vld [vmem:[%s37 + $0x4] sm:$0xf]
        %v2233 = vld [vmem:[%s37 + $0x8] sm:$0xf]
        %v2234 = vld [vmem:[%s37 + $0xc] sm:$0xf]
        %v2235 = vpack.c.bf16 %v2228, %v2225
        %v2240 = vunpack.c.l.b16 %v2231
        %v2241 = vunpack.c.l.b16 %v2232
        %v2242 = vunpack.c.l.b16 %v2233
        %v2243 = vunpack.c.l.b16 %v2234
        %v2244 = vpack.c.b16 %v2241, %v2240
        %v2245 = vpack.c.b16 %v2243, %v2242
        %v2249 = vsel %vm1199, %v2235, 0
        %2251 = vmatprep.subr.bf16.mxu0 0
        %2252 = vmatpush1.bf16.msra.mxu0 0
        %2253 = vmatprep.subr.bf16.mxu0 0
        %2254 = vmatpush1.bf16.msra.mxu0 0
        %2255 = vmatprep.subr.bf16.mxu0 0
        %2256 = vmatpush1.bf16.msra.mxu0 0
        %2257 = vmatprep.subr.bf16.mxu0 0
        %2258 = vmatpush1.bf16.msra.mxu0 0
        %2259 = vmatprep.subr.bf16.mxu0 0
        %2260 = vmatpush1.bf16.msra.mxu0 0
        %2261 = vmatprep.subr.bf16.mxu0 0
        %2262 = vmatpush1.bf16.msra.mxu0 0
        %2263 = vmatprep.subr.bf16.mxu0 0
        %2264 = vmatpush1.bf16.msra.mxu0 %v2245
        %2265 = vmatprep.subr.bf16.mxu0 0
        %2266 = vmatpush1.bf16.msra.mxu0 %v2244
        %2267 = vmatprep.subr.bf16.mxu0 0
        %2268 = vmatpush2.bf16.msra.mxu0 0
        %2269 = vmatprep.subr.bf16.mxu0 0
        %2270 = vmatpush2.bf16.msra.mxu0 0
        %2271 = vmatprep.subr.bf16.mxu0 0
        %2272 = vmatpush2.bf16.msra.mxu0 0
        %2273 = vmatprep.subr.bf16.mxu0 0
        %2274 = vmatpush2.bf16.msra.mxu0 0
        %2275 = vmatprep.subr.bf16.mxu0 0
        %2276 = vmatpush2.bf16.msra.mxu0 0
        %2277 = vmatprep.subr.bf16.mxu0 0
        %2278 = vmatpush2.bf16.msra.mxu0 0
        %2279 = vmatprep.subr.bf16.mxu0 0
        %2280 = vmatpush2.bf16.msra.mxu0 0
        %2281 = vmatprep.subr.bf16.mxu0 0
        %2282 = vmatpush2.bf16.msra.mxu0 0
        %2283 = vmatprep.mubr.bf16.mxu0 0
        %2284 = vmatmul.mubr.bf16.gmra.mxu0 %v2249
        %v2285 = vpop.f32.mrf.mxu0
        %v2286 = vadd.f32 0.0, %v2285
        %v2287 = vpop.f32.mrf.mxu0
        %v2288 = vpop.f32.mrf.mxu0
        %v2289 = vadd.f32 0.0, %v2288
        %v2290 = vpop.f32.mrf.mxu0
        %2291 = vdwg.mxu0
        %v2292 = vpack.c.bf16 %v2289, %v2286
        %v2293 = vld [vmem:[%s1187] sm:$0xff]
        %v2294 = vld [vmem:[%s1187 + $0x8] sm:$0xff]
        %v2295 = vpack.c.bf16 %v2293, %v2293
        %v2296 = vpack.c.bf16 %v2294, %v2294
        %v2298 = vunpack.c.l.b16 %v2292
        %v2299 = vunpack.c.h.b16 %v2292
        %v2300 = vpack.c.b16 %v2298, %v2298
        %v2301 = vpack.c.b16 %v2299, %v2299
        %v2303 = vsel %vm1414, %v2295, 0
        %v2306 = vsel %vm1444, %v2300, 0
        %2308 = vmatprep.subr.bf16.mxu0 0
        %2309 = vmatpush1.bf16.msra.mxu0 0
        %2310 = vmatprep.subr.bf16.mxu0 0
        %2311 = vmatpush1.bf16.msra.mxu0 0
        %2312 = vmatprep.subr.bf16.mxu0 0
        %2313 = vmatpush1.bf16.msra.mxu0 0
        %2314 = vmatprep.subr.bf16.mxu0 0
        %2315 = vmatpush1.bf16.msra.mxu0 0
        %2316 = vmatprep.subr.bf16.mxu0 0
        %2317 = vmatpush1.bf16.msra.mxu0 0
        %2318 = vmatprep.subr.bf16.mxu0 0
        %2319 = vmatpush1.bf16.msra.mxu0 0
        %2320 = vmatprep.subr.bf16.mxu0 0
        %2321 = vmatpush1.bf16.msra.mxu0 0
        %2322 = vmatprep.subr.bf16.mxu0 0
        %2323 = vmatpush1.bf16.msra.mxu0 %v2306
        %2324 = vmatprep.subr.bf16.mxu0 0
        %2325 = vmatpush2.bf16.msra.mxu0 0
        %2326 = vmatprep.subr.bf16.mxu0 0
        %2327 = vmatpush2.bf16.msra.mxu0 0
        %2328 = vmatprep.subr.bf16.mxu0 0
        %2329 = vmatpush2.bf16.msra.mxu0 0
        %2330 = vmatprep.subr.bf16.mxu0 0
        %2331 = vmatpush2.bf16.msra.mxu0 0
        %2332 = vmatprep.subr.bf16.mxu0 0
        %2333 = vmatpush2.bf16.msra.mxu0 0
        %2334 = vmatprep.subr.bf16.mxu0 0
        %2335 = vmatpush2.bf16.msra.mxu0 0
        %2336 = vmatprep.subr.bf16.mxu0 0
        %2337 = vmatpush2.bf16.msra.mxu0 0
        %2338 = vmatprep.subr.bf16.mxu0 0
        %2339 = vmatpush2.bf16.msra.mxu0 0
        %2340 = vmatprep.mubr.bf16.mxu0 0
        %2341 = vmatmul.mubr.bf16.gmra.mxu0 %v2303
        %v2342 = vpop.f32.mrf.mxu0
        %v2343 = vadd.f32 0.0, %v2342
        %v2344 = vpop.f32.mrf.mxu0
        %v2345 = vpop.f32.mrf.mxu0
        %v2346 = vpop.f32.mrf.mxu0
        %2347 = vdwg.mxu0
        %v2349 = vsel %vm1414, %v2296, 0
        %v2352 = vsel %vm1444, %v2301, 0
        %2354 = vmatprep.subr.bf16.mxu0 0
        %2355 = vmatpush1.bf16.msra.mxu0 0
        %2356 = vmatprep.subr.bf16.mxu0 0
        %2357 = vmatpush1.bf16.msra.mxu0 0
        %2358 = vmatprep.subr.bf16.mxu0 0
        %2359 = vmatpush1.bf16.msra.mxu0 0
        %2360 = vmatprep.subr.bf16.mxu0 0
        %2361 = vmatpush1.bf16.msra.mxu0 0
        %2362 = vmatprep.subr.bf16.mxu0 0
        %2363 = vmatpush1.bf16.msra.mxu0 0
        %2364 = vmatprep.subr.bf16.mxu0 0
        %2365 = vmatpush1.bf16.msra.mxu0 0
        %2366 = vmatprep.subr.bf16.mxu0 0
        %2367 = vmatpush1.bf16.msra.mxu0 0
        %2368 = vmatprep.subr.bf16.mxu0 0
        %2369 = vmatpush1.bf16.msra.mxu0 %v2352
        %2370 = vmatprep.subr.bf16.mxu0 0
        %2371 = vmatpush2.bf16.msra.mxu0 0
        %2372 = vmatprep.subr.bf16.mxu0 0
        %2373 = vmatpush2.bf16.msra.mxu0 0
        %2374 = vmatprep.subr.bf16.mxu0 0
        %2375 = vmatpush2.bf16.msra.mxu0 0
        %2376 = vmatprep.subr.bf16.mxu0 0
        %2377 = vmatpush2.bf16.msra.mxu0 0
        %2378 = vmatprep.subr.bf16.mxu0 0
        %2379 = vmatpush2.bf16.msra.mxu0 0
        %2380 = vmatprep.subr.bf16.mxu0 0
        %2381 = vmatpush2.bf16.msra.mxu0 0
        %2382 = vmatprep.subr.bf16.mxu0 0
        %2383 = vmatpush2.bf16.msra.mxu0 0
        %2384 = vmatprep.subr.bf16.mxu0 0
        %2385 = vmatpush2.bf16.msra.mxu0 0
        %2386 = vmatprep.mubr.bf16.mxu0 0
        %2387 = vmatmul.mubr.bf16.gmra.mxu0 %v2349
        %v2388 = vpop.f32.mrf.mxu0
        %v2389 = vadd.f32 0.0, %v2388
        %v2390 = vpop.f32.mrf.mxu0
        %v2391 = vpop.f32.mrf.mxu0
        %v2392 = vpop.f32.mrf.mxu0
        %2393 = vdwg.mxu0
        %v2394 = vld [vmem:[#allocation21] sm:$0xf]
        %v2395 = vld [vmem:[#allocation21 + $0x4] sm:$0xf]
        %v2396 = vld [vmem:[#allocation21 + $0x8] sm:$0xf]
        %v2397 = vld [vmem:[#allocation21 + $0xc] sm:$0xf]
        %v2398 = vpack.c.bf16 %v2389, %v2343
        %v2399 = vld [vmem:[#allocation25] sm:$0xf]
        %v2400 = vld [vmem:[#allocation25 + $0x4] sm:$0xf]
        %v2401 = vld [vmem:[#allocation25 + $0x8] sm:$0xf]
        %v2402 = vld [vmem:[#allocation25 + $0xc] sm:$0xf]
        %v2407 = vunpack.c.l.b16 %v2399
        %v2408 = vunpack.c.l.b16 %v2400
        %v2409 = vunpack.c.l.b16 %v2401
        %v2410 = vunpack.c.l.b16 %v2402
        %v2411 = vpack.c.b16 %v2408, %v2407
        %v2412 = vpack.c.b16 %v2410, %v2409
        %2415 = vmatprep.subr.bf16.mxu0 0
        %2416 = vmatpush1.bf16.msra.mxu0 0
        %2417 = vmatprep.subr.bf16.mxu0 0
        %2418 = vmatpush1.bf16.msra.mxu0 0
        %2419 = vmatprep.subr.bf16.mxu0 0
        %2420 = vmatpush1.bf16.msra.mxu0 0
        %2421 = vmatprep.subr.bf16.mxu0 0
        %2422 = vmatpush1.bf16.msra.mxu0 0
        %2423 = vmatprep.subr.bf16.mxu0 0
        %2424 = vmatpush1.bf16.msra.mxu0 0
        %2425 = vmatprep.subr.bf16.mxu0 0
        %2426 = vmatpush1.bf16.msra.mxu0 0
        %2427 = vmatprep.subr.bf16.mxu0 0
        %2428 = vmatpush1.bf16.msra.mxu0 %v2412
        %2429 = vmatprep.subr.bf16.mxu0 0
        %2430 = vmatpush1.bf16.msra.mxu0 %v2411
        %2431 = vmatprep.subr.bf16.mxu0 0
        %2432 = vmatpush2.bf16.msra.mxu0 0
        %2433 = vmatprep.subr.bf16.mxu0 0
        %2434 = vmatpush2.bf16.msra.mxu0 0
        %2435 = vmatprep.subr.bf16.mxu0 0
        %2436 = vmatpush2.bf16.msra.mxu0 0
        %2437 = vmatprep.subr.bf16.mxu0 0
        %2438 = vmatpush2.bf16.msra.mxu0 0
        %2439 = vmatprep.subr.bf16.mxu0 0
        %2440 = vmatpush2.bf16.msra.mxu0 0
        %2441 = vmatprep.subr.bf16.mxu0 0
        %2442 = vmatpush2.bf16.msra.mxu0 0
        %2443 = vmatprep.subr.bf16.mxu0 0
        %2444 = vmatpush2.bf16.msra.mxu0 0
        %2445 = vmatprep.subr.bf16.mxu0 0
        %2446 = vmatpush2.bf16.msra.mxu0 0
        %2447 = vmatprep.mubr.bf16.mxu0 0
        %2448 = vmatmul.mubr.bf16.gmra.mxu0 %v2249
        %v2449 = vpop.f32.mrf.mxu0
        %v2450 = vadd.f32 0.0, %v2449
        %v2451 = vpop.f32.mrf.mxu0
        %v2452 = vpop.f32.mrf.mxu0
        %v2453 = vadd.f32 0.0, %v2452
        %v2454 = vpop.f32.mrf.mxu0
        %2455 = vdwg.mxu0
        %v2460 = vunpack.c.l.b16 %v2394
        %v2461 = vunpack.c.l.b16 %v2395
        %v2462 = vunpack.c.l.b16 %v2396
        %v2463 = vunpack.c.l.b16 %v2397
        %v2464 = vpack.c.b16 %v2461, %v2460
        %v2465 = vpack.c.b16 %v2463, %v2462
        %v2469 = vsel %vm1199, %v2398, 0
        %2471 = vmatprep.subr.bf16.mxu0 0
        %2472 = vmatpush1.bf16.msra.mxu0 0
        %2473 = vmatprep.subr.bf16.mxu0 0
        %2474 = vmatpush1.bf16.msra.mxu0 0
        %2475 = vmatprep.subr.bf16.mxu0 0
        %2476 = vmatpush1.bf16.msra.mxu0 0
        %2477 = vmatprep.subr.bf16.mxu0 0
        %2478 = vmatpush1.bf16.msra.mxu0 0
        %2479 = vmatprep.subr.bf16.mxu0 0
        %2480 = vmatpush1.bf16.msra.mxu0 0
        %2481 = vmatprep.subr.bf16.mxu0 0
        %2482 = vmatpush1.bf16.msra.mxu0 0
        %2483 = vmatprep.subr.bf16.mxu0 0
        %2484 = vmatpush1.bf16.msra.mxu0 %v2465
        %2485 = vmatprep.subr.bf16.mxu0 0
        %2486 = vmatpush1.bf16.msra.mxu0 %v2464
        %2487 = vmatprep.subr.bf16.mxu0 0
        %2488 = vmatpush2.bf16.msra.mxu0 0
        %2489 = vmatprep.subr.bf16.mxu0 0
        %2490 = vmatpush2.bf16.msra.mxu0 0
        %2491 = vmatprep.subr.bf16.mxu0 0
        %2492 = vmatpush2.bf16.msra.mxu0 0
        %2493 = vmatprep.subr.bf16.mxu0 0
        %2494 = vmatpush2.bf16.msra.mxu0 0
        %2495 = vmatprep.subr.bf16.mxu0 0
        %2496 = vmatpush2.bf16.msra.mxu0 0
        %2497 = vmatprep.subr.bf16.mxu0 0
        %2498 = vmatpush2.bf16.msra.mxu0 0
        %2499 = vmatprep.subr.bf16.mxu0 0
        %2500 = vmatpush2.bf16.msra.mxu0 0
        %2501 = vmatprep.subr.bf16.mxu0 0
        %2502 = vmatpush2.bf16.msra.mxu0 0
        %2503 = vmatprep.mubr.bf16.mxu0 0
        %2504 = vmatmul.mubr.bf16.gmra.mxu0 %v2469
        %v2505 = vpop.f32.mrf.mxu0
        %v2506 = vadd.f32 %v2450, %v2505
        %v2507 = vpop.f32.mrf.mxu0
        %v2508 = vpop.f32.mrf.mxu0
        %v2509 = vadd.f32 %v2453, %v2508
        %v2510 = vpop.f32.mrf.mxu0
        %2511 = vdwg.mxu0
        %v2512 = vld [vmem:[%s51] sm:$0x1]
        %v2514 = vlaneseq
        %v2515 = vshrl.u32 %v2514, 7
        %v2516 = vsub.s32 0, %v2515
        %v2517 = vrot.slane %v2512, %v2516
        %v2519 = vadd.f32 %v2506, %v2517
        %v2520 = vadd.f32 %v2509, %v2517
        %v2521 = vxor.u32 %v2519, 2147483648
        %v2522 = vxor.u32 %v2520, 2147483648
        %v2523 = vmul.f32 %v2521, 1.442695
        %v2524 = vpow.pop %v2523
        %v2525 = vmul.f32 %v2522, 1.442695
        %v2526 = vpow.pop %v2525
        %v2527 = vadd.f32 %v2524, 1.0
        %v2528 = vadd.f32 %v2526, 1.0
        %v2529 = vrcp.pop %v2527
        %v2530 = vmul.f32 1.0, %v2529
        %v2531 = vrcp.pop %v2528
        %v2532 = vmul.f32 1.0, %v2531
        %v2533 = vld [vmem:[#allocation22] sm:$0xf]
        %v2534 = vld [vmem:[#allocation22 + $0x4] sm:$0xf]
        %v2535 = vld [vmem:[#allocation22 + $0x8] sm:$0xf]
        %v2536 = vld [vmem:[#allocation22 + $0xc] sm:$0xf]
        %v2537 = vld [vmem:[#allocation27] sm:$0xf]
        %v2538 = vld [vmem:[#allocation27 + $0x4] sm:$0xf]
        %v2539 = vld [vmem:[#allocation27 + $0x8] sm:$0xf]
        %v2540 = vld [vmem:[#allocation27 + $0xc] sm:$0xf]
        %v2545 = vunpack.c.l.b16 %v2537
        %v2546 = vunpack.c.l.b16 %v2538
        %v2547 = vunpack.c.l.b16 %v2539
        %v2548 = vunpack.c.l.b16 %v2540
        %v2549 = vpack.c.b16 %v2546, %v2545
        %v2550 = vpack.c.b16 %v2548, %v2547
        %2553 = vmatprep.subr.bf16.mxu0 0
        %2554 = vmatpush1.bf16.msra.mxu0 0
        %2555 = vmatprep.subr.bf16.mxu0 0
        %2556 = vmatpush1.bf16.msra.mxu0 0
        %2557 = vmatprep.subr.bf16.mxu0 0
        %2558 = vmatpush1.bf16.msra.mxu0 0
        %2559 = vmatprep.subr.bf16.mxu0 0
        %2560 = vmatpush1.bf16.msra.mxu0 0
        %2561 = vmatprep.subr.bf16.mxu0 0
        %2562 = vmatpush1.bf16.msra.mxu0 0
        %2563 = vmatprep.subr.bf16.mxu0 0
        %2564 = vmatpush1.bf16.msra.mxu0 0
        %2565 = vmatprep.subr.bf16.mxu0 0
        %2566 = vmatpush1.bf16.msra.mxu0 %v2550
        %2567 = vmatprep.subr.bf16.mxu0 0
        %2568 = vmatpush1.bf16.msra.mxu0 %v2549
        %2569 = vmatprep.subr.bf16.mxu0 0
        %2570 = vmatpush2.bf16.msra.mxu0 0
        %2571 = vmatprep.subr.bf16.mxu0 0
        %2572 = vmatpush2.bf16.msra.mxu0 0
        %2573 = vmatprep.subr.bf16.mxu0 0
        %2574 = vmatpush2.bf16.msra.mxu0 0
        %2575 = vmatprep.subr.bf16.mxu0 0
        %2576 = vmatpush2.bf16.msra.mxu0 0
        %2577 = vmatprep.subr.bf16.mxu0 0
        %2578 = vmatpush2.bf16.msra.mxu0 0
        %2579 = vmatprep.subr.bf16.mxu0 0
        %2580 = vmatpush2.bf16.msra.mxu0 0
        %2581 = vmatprep.subr.bf16.mxu0 0
        %2582 = vmatpush2.bf16.msra.mxu0 0
        %2583 = vmatprep.subr.bf16.mxu0 0
        %2584 = vmatpush2.bf16.msra.mxu0 0
        %2585 = vmatprep.mubr.bf16.mxu0 0
        %2586 = vmatmul.mubr.bf16.gmra.mxu0 %v2249
        %v2587 = vpop.f32.mrf.mxu0
        %v2588 = vadd.f32 0.0, %v2587
        %v2589 = vpop.f32.mrf.mxu0
        %v2590 = vpop.f32.mrf.mxu0
        %v2591 = vadd.f32 0.0, %v2590
        %v2592 = vpop.f32.mrf.mxu0
        %2593 = vdwg.mxu0
        %v2598 = vunpack.c.l.b16 %v2533
        %v2599 = vunpack.c.l.b16 %v2534
        %v2600 = vunpack.c.l.b16 %v2535
        %v2601 = vunpack.c.l.b16 %v2536
        %v2602 = vpack.c.b16 %v2599, %v2598
        %v2603 = vpack.c.b16 %v2601, %v2600
        %2606 = vmatprep.subr.bf16.mxu0 0
        %2607 = vmatpush1.bf16.msra.mxu0 0
        %2608 = vmatprep.subr.bf16.mxu0 0
        %2609 = vmatpush1.bf16.msra.mxu0 0
        %2610 = vmatprep.subr.bf16.mxu0 0
        %2611 = vmatpush1.bf16.msra.mxu0 0
        %2612 = vmatprep.subr.bf16.mxu0 0
        %2613 = vmatpush1.bf16.msra.mxu0 0
        %2614 = vmatprep.subr.bf16.mxu0 0
        %2615 = vmatpush1.bf16.msra.mxu0 0
        %2616 = vmatprep.subr.bf16.mxu0 0
        %2617 = vmatpush1.bf16.msra.mxu0 0
        %2618 = vmatprep.subr.bf16.mxu0 0
        %2619 = vmatpush1.bf16.msra.mxu0 %v2603
        %2620 = vmatprep.subr.bf16.mxu0 0
        %2621 = vmatpush1.bf16.msra.mxu0 %v2602
        %2622 = vmatprep.subr.bf16.mxu0 0
        %2623 = vmatpush2.bf16.msra.mxu0 0
        %2624 = vmatprep.subr.bf16.mxu0 0
        %2625 = vmatpush2.bf16.msra.mxu0 0
        %2626 = vmatprep.subr.bf16.mxu0 0
        %2627 = vmatpush2.bf16.msra.mxu0 0
        %2628 = vmatprep.subr.bf16.mxu0 0
        %2629 = vmatpush2.bf16.msra.mxu0 0
        %2630 = vmatprep.subr.bf16.mxu0 0
        %2631 = vmatpush2.bf16.msra.mxu0 0
        %2632 = vmatprep.subr.bf16.mxu0 0
        %2633 = vmatpush2.bf16.msra.mxu0 0
        %2634 = vmatprep.subr.bf16.mxu0 0
        %2635 = vmatpush2.bf16.msra.mxu0 0
        %2636 = vmatprep.subr.bf16.mxu0 0
        %2637 = vmatpush2.bf16.msra.mxu0 0
        %2638 = vmatprep.mubr.bf16.mxu0 0
        %2639 = vmatmul.mubr.bf16.gmra.mxu0 %v2469
        %v2640 = vpop.f32.mrf.mxu0
        %v2641 = vadd.f32 %v2588, %v2640
        %v2642 = vpop.f32.mrf.mxu0
        %v2643 = vpop.f32.mrf.mxu0
        %v2644 = vadd.f32 %v2591, %v2643
        %v2645 = vpop.f32.mrf.mxu0
        %2646 = vdwg.mxu0
        %v2647 = vld [vmem:[%s53] sm:$0x1]
        %v2649 = vlaneseq
        %v2650 = vshrl.u32 %v2649, 7
        %v2651 = vsub.s32 0, %v2650
        %v2652 = vrot.slane %v2647, %v2651
        %v2654 = vadd.f32 %v2641, %v2652
        %v2655 = vadd.f32 %v2644, %v2652
        %v2656 = vxor.u32 %v2654, 2147483648
        %v2657 = vxor.u32 %v2655, 2147483648
        %v2658 = vmul.f32 %v2656, 1.442695
        %v2659 = vpow.pop %v2658
        %v2660 = vmul.f32 %v2657, 1.442695
        %v2661 = vpow.pop %v2660
        %v2662 = vadd.f32 %v2659, 1.0
        %v2663 = vadd.f32 %v2661, 1.0
        %v2664 = vrcp.pop %v2662
        %v2665 = vmul.f32 1.0, %v2664
        %v2666 = vrcp.pop %v2663
        %v2667 = vmul.f32 1.0, %v2666
        %v2668 = vld [vmem:[#allocation24] sm:$0xf]
        %v2669 = vld [vmem:[#allocation24 + $0x4] sm:$0xf]
        %v2670 = vld [vmem:[#allocation24 + $0x8] sm:$0xf]
        %v2671 = vld [vmem:[#allocation24 + $0xc] sm:$0xf]
        %v2672 = vld [vmem:[%s55] sm:$0x1]
        %v2674 = vlaneseq
        %v2675 = vshrl.u32 %v2674, 7
        %v2676 = vsub.s32 0, %v2675
        %v2677 = vrot.slane %v2672, %v2676
        %v2683 = vunpack.c.l.b16 %v2668
        %v2684 = vunpack.c.l.b16 %v2669
        %v2685 = vunpack.c.l.b16 %v2670
        %v2686 = vunpack.c.l.b16 %v2671
        %v2687 = vpack.c.b16 %v2684, %v2683
        %v2688 = vpack.c.b16 %v2686, %v2685
        %2691 = vmatprep.subr.bf16.mxu0 0
        %2692 = vmatpush1.bf16.msra.mxu0 0
        %2693 = vmatprep.subr.bf16.mxu0 0
        %2694 = vmatpush1.bf16.msra.mxu0 0
        %2695 = vmatprep.subr.bf16.mxu0 0
        %2696 = vmatpush1.bf16.msra.mxu0 0
        %2697 = vmatprep.subr.bf16.mxu0 0
        %2698 = vmatpush1.bf16.msra.mxu0 0
        %2699 = vmatprep.subr.bf16.mxu0 0
        %2700 = vmatpush1.bf16.msra.mxu0 0
        %2701 = vmatprep.subr.bf16.mxu0 0
        %2702 = vmatpush1.bf16.msra.mxu0 0
        %2703 = vmatprep.subr.bf16.mxu0 0
        %2704 = vmatpush1.bf16.msra.mxu0 %v2688
        %2705 = vmatprep.subr.bf16.mxu0 0
        %2706 = vmatpush1.bf16.msra.mxu0 %v2687
        %2707 = vmatprep.subr.bf16.mxu0 0
        %2708 = vmatpush2.bf16.msra.mxu0 0
        %2709 = vmatprep.subr.bf16.mxu0 0
        %2710 = vmatpush2.bf16.msra.mxu0 0
        %2711 = vmatprep.subr.bf16.mxu0 0
        %2712 = vmatpush2.bf16.msra.mxu0 0
        %2713 = vmatprep.subr.bf16.mxu0 0
        %2714 = vmatpush2.bf16.msra.mxu0 0
        %2715 = vmatprep.subr.bf16.mxu0 0
        %2716 = vmatpush2.bf16.msra.mxu0 0
        %2717 = vmatprep.subr.bf16.mxu0 0
        %2718 = vmatpush2.bf16.msra.mxu0 0
        %2719 = vmatprep.subr.bf16.mxu0 0
        %2720 = vmatpush2.bf16.msra.mxu0 0
        %2721 = vmatprep.subr.bf16.mxu0 0
        %2722 = vmatpush2.bf16.msra.mxu0 0
        %2723 = vmatprep.mubr.bf16.mxu0 0
        %2724 = vmatmul.mubr.bf16.gmra.mxu0 %v2469
        %v2725 = vpop.f32.mrf.mxu0
        %v2726 = vadd.f32 %v2677, %v2725
        %v2727 = vpop.f32.mrf.mxu0
        %v2728 = vpop.f32.mrf.mxu0
        %v2729 = vadd.f32 %v2677, %v2728
        %v2730 = vpop.f32.mrf.mxu0
        %2731 = vdwg.mxu0
        %v2732 = vld [vmem:[#allocation28] sm:$0xf]
        %v2733 = vld [vmem:[#allocation28 + $0x4] sm:$0xf]
        %v2734 = vld [vmem:[#allocation28 + $0x8] sm:$0xf]
        %v2735 = vld [vmem:[#allocation28 + $0xc] sm:$0xf]
        %v2740 = vunpack.c.l.b16 %v2732
        %v2741 = vunpack.c.l.b16 %v2733
        %v2742 = vunpack.c.l.b16 %v2734
        %v2743 = vunpack.c.l.b16 %v2735
        %v2744 = vpack.c.b16 %v2741, %v2740
        %v2745 = vpack.c.b16 %v2743, %v2742
        %2748 = vmatprep.subr.bf16.mxu0 0
        %2749 = vmatpush1.bf16.msra.mxu0 0
        %2750 = vmatprep.subr.bf16.mxu0 0
        %2751 = vmatpush1.bf16.msra.mxu0 0
        %2752 = vmatprep.subr.bf16.mxu0 0
        %2753 = vmatpush1.bf16.msra.mxu0 0
        %2754 = vmatprep.subr.bf16.mxu0 0
        %2755 = vmatpush1.bf16.msra.mxu0 0
        %2756 = vmatprep.subr.bf16.mxu0 0
        %2757 = vmatpush1.bf16.msra.mxu0 0
        %2758 = vmatprep.subr.bf16.mxu0 0
        %2759 = vmatpush1.bf16.msra.mxu0 0
        %2760 = vmatprep.subr.bf16.mxu0 0
        %2761 = vmatpush1.bf16.msra.mxu0 %v2745
        %2762 = vmatprep.subr.bf16.mxu0 0
        %2763 = vmatpush1.bf16.msra.mxu0 %v2744
        %2764 = vmatprep.subr.bf16.mxu0 0
        %2765 = vmatpush2.bf16.msra.mxu0 0
        %2766 = vmatprep.subr.bf16.mxu0 0
        %2767 = vmatpush2.bf16.msra.mxu0 0
        %2768 = vmatprep.subr.bf16.mxu0 0
        %2769 = vmatpush2.bf16.msra.mxu0 0
        %2770 = vmatprep.subr.bf16.mxu0 0
        %2771 = vmatpush2.bf16.msra.mxu0 0
        %2772 = vmatprep.subr.bf16.mxu0 0
        %2773 = vmatpush2.bf16.msra.mxu0 0
        %2774 = vmatprep.subr.bf16.mxu0 0
        %2775 = vmatpush2.bf16.msra.mxu0 0
        %2776 = vmatprep.subr.bf16.mxu0 0
        %2777 = vmatpush2.bf16.msra.mxu0 0
        %2778 = vmatprep.subr.bf16.mxu0 0
        %2779 = vmatpush2.bf16.msra.mxu0 0
        %2780 = vmatprep.mubr.bf16.mxu0 0
        %2781 = vmatmul.mubr.bf16.gmra.mxu0 %v2249
        %v2782 = vpop.f32.mrf.mxu0
        %v2783 = vadd.f32 0.0, %v2782
        %v2784 = vpop.f32.mrf.mxu0
        %v2785 = vpop.f32.mrf.mxu0
        %v2786 = vadd.f32 0.0, %v2785
        %v2787 = vpop.f32.mrf.mxu0
        %2788 = vdwg.mxu0
        %v2789 = vmul.f32 %v2665, %v2783
        %v2790 = vmul.f32 %v2667, %v2786
        %v2791 = vadd.f32 %v2726, %v2789
        %v2792 = vadd.f32 %v2729, %v2790
        %v2793 = vtanh.pop %v2791
        %v2794 = vtanh.pop %v2792
        %v2795 = vsub.f32 1.0, %v2530
        %v2796 = vsub.f32 1.0, %v2532
        %v2797 = vmul.f32 %v2795, %v2793
        %v2798 = vmul.f32 %v2796, %v2794
        %v2799 = vmul.f32 %v2530, %v2225
        %v2800 = vmul.f32 %v2532, %v2228
        %v2801 = vadd.f32 %v2797, %v2799
        %v2802 = vadd.f32 %v2798, %v2800
        %v2803 = vld [vmem:[%s57] sm:$0xf]
        %v2804 = vld [vmem:[%s57 + $0x4] sm:$0xf]
        %v2805 = vld [vmem:[%s57 + $0x8] sm:$0xf]
        %v2806 = vld [vmem:[%s57 + $0xc] sm:$0xf]
        %v2807 = vpack.c.bf16 %v2801, %v2801
        %v2808 = vpack.c.bf16 %v2802, %v2802
        %v2809 = vld [vmem:[%s59] sm:$0x1]
        %v2811 = vlaneseq
        %v2812 = vshrl.u32 %v2811, 7
        %v2813 = vsub.s32 0, %v2812
        %v2814 = vrot.slane %v2809, %v2813
        %v2818 = vunpack.c.l.b16 %v2807
        %v2819 = vunpack.c.l.b16 %v2808
        %v2820 = vrot.slane %v2819, 7
        %vm2821 = vcmask 1041409
        %v2822 = vsel %vm2821, %v2820, %v2818
        %v2823 = vpack.c.b16 %v2822, %v2822
        %v2828 = vunpack.c.l.b16 %v2803
        %v2829 = vunpack.c.l.b16 %v2804
        %v2830 = vunpack.c.l.b16 %v2805
        %v2831 = vunpack.c.l.b16 %v2806
        %v2832 = vpack.c.b16 %v2829, %v2828
        %v2833 = vpack.c.b16 %v2831, %v2830
        %v2837 = vsel %vm1199, %v2823, 0
        %2839 = vmatprep.subr.bf16.mxu0 0
        %2840 = vmatpush1.bf16.msra.mxu0 0
        %2841 = vmatprep.subr.bf16.mxu0 0
        %2842 = vmatpush1.bf16.msra.mxu0 0
        %2843 = vmatprep.subr.bf16.mxu0 0
        %2844 = vmatpush1.bf16.msra.mxu0 0
        %2845 = vmatprep.subr.bf16.mxu0 0
        %2846 = vmatpush1.bf16.msra.mxu0 0
        %2847 = vmatprep.subr.bf16.mxu0 0
        %2848 = vmatpush1.bf16.msra.mxu0 0
        %2849 = vmatprep.subr.bf16.mxu0 0
        %2850 = vmatpush1.bf16.msra.mxu0 0
        %2851 = vmatprep.subr.bf16.mxu0 0
        %2852 = vmatpush1.bf16.msra.mxu0 %v2833
        %2853 = vmatprep.subr.bf16.mxu0 0
        %2854 = vmatpush1.bf16.msra.mxu0 %v2832
        %2855 = vmatprep.subr.bf16.mxu0 0
        %2856 = vmatpush2.bf16.msra.mxu0 0
        %2857 = vmatprep.subr.bf16.mxu0 0
        %2858 = vmatpush2.bf16.msra.mxu0 0
        %2859 = vmatprep.subr.bf16.mxu0 0
        %2860 = vmatpush2.bf16.msra.mxu0 0
        %2861 = vmatprep.subr.bf16.mxu0 0
        %2862 = vmatpush2.bf16.msra.mxu0 0
        %2863 = vmatprep.subr.bf16.mxu0 0
        %2864 = vmatpush2.bf16.msra.mxu0 0
        %2865 = vmatprep.subr.bf16.mxu0 0
        %2866 = vmatpush2.bf16.msra.mxu0 0
        %2867 = vmatprep.subr.bf16.mxu0 0
        %2868 = vmatpush2.bf16.msra.mxu0 0
        %2869 = vmatprep.subr.bf16.mxu0 0
        %2870 = vmatpush2.bf16.msra.mxu0 0
        %2871 = vmatprep.mubr.bf16.mxu0 0
        %2872 = vmatmul.mubr.bf16.gmra.mxu0 %v2837
        %v2873 = vpop.f32.mrf.mxu0
        %v2874 = vadd.f32 %v2814, %v2873
        %v2875 = vpop.f32.mrf.mxu0
        %v2876 = vpop.f32.mrf.mxu0
        %v2877 = vpop.f32.mrf.mxu0
        %2878 = vdwg.mxu0
        %v2881 = vunpack.c.l.s4 1966171168
        %v2882 = vunpack.c.0.s8 %v2881
        %v2883 = vlaneseq
        %v2884 = vshrl.u32 %v2883, 7
        %v2885 = vsub.s32 %v2882, %v2884
        %v2886 = vrot.slane %v2874, %v2885
        %v2887 = vcombine.high %v2886, %v2886
        %v2889 = vunpack.c.l.s4 1966171168
        %v2890 = vunpack.c.0.s8 %v2889
        %v2891 = vlaneseq
        %v2892 = vshrl.u32 %v2891, 7
        %v2893 = vsub.s32 %v2890, %v2892
        %v2894 = vrot.slane %v2886, %v2893
        %v2896 = vunpack.c.l.s4 1966171168
        %v2897 = vunpack.c.0.s8 %v2896
        %v2898 = vlaneseq
        %v2899 = vshrl.u32 %v2898, 7
        %v2900 = vsub.s32 %v2897, %v2899
        %v2901 = vrot.slane %v2887, %v2900
        %vm2904 = vcmask 16384
        %2905 = vst.msk [vmem:[%s1192] sm:$0x1] %vm2904, %v2894
        %2906 = vst.msk [vmem:[%s1192 + $0x1] sm:$0x1] %vm2904, %v2901
        %s2907 = smul.u32 2, %s82
        %p2908 = scmp.lt.s32.totalorder %s2907, 3
        %s2909 = scalar_select %p2908, %s2907, 3
        %s2910 = scalar_lea.vmem %s61, %s2909
        // Predicated region
        $region213: #{tpu_custom_call.1} parent=139 // pred_check
          %p2911 = pneg %p740
        $region214: #{tpu_custom_call.1} parent=139 // pred_check_branch
          %2913 = sbr.rel (%p2911) target = $region216
        $region215: #{tpu_custom_call.1} parent=139 // pred_region
          %s2914 = smul.u32 2, %s82
        $region216: #{tpu_custom_call.1} parent=139 // pred_fallthru
          _
      $region140: #{tpu_custom_call.1} parent=5 // pred_fallthru
        _
      %p2915 = scmp.le.s32.totalorder 2, %s77
      // Predicated region
      $region217: #{tpu_custom_call.1} parent=5 // pred_check
        %p2916 = pneg %p2915
      $region218: #{tpu_custom_call.1} parent=5 // pred_check_branch
        %2918 = sbr.rel (%p2916) target = $region220
      $region219: #{tpu_custom_call.1} parent=5 // pred_region
        %s2919 = ssub.s32 %s77, 2
        // Predicated region
        $region221: #{tpu_custom_call.1} parent=219 // pred_check
          %p2920 = pneg %p746
        $region222: #{tpu_custom_call.1} parent=219 // pred_check_branch
          %2922 = sbr.rel (%p2920) target = $region224
        $region223: #{tpu_custom_call.1} parent=219 // pred_region
          %s2923 = smul.u32 2, %s83
          %p2924 = scmp.lt.s32.totalorder %s2923, 3
          %s2925 = scalar_select %p2924, %s2923, 3
          %s2926 = scalar_lea.vmem %s61, %s2925
        $region224: #{tpu_custom_call.1} parent=219 // pred_fallthru
          _
      $region220: #{tpu_custom_call.1} parent=5 // pred_fallthru
        _
    $region6: #{tpu_custom_call.1} parent=1 // loop_footer
      %s81 = sadd.s32 1, %s77
    $region7: #{tpu_custom_call.1} parent=1 // loop_footer_branch
      %76 = sbr.rel target = $region3
    $region8: #{tpu_custom_call.1} parent=1 // loop_exit
      _
    %2927 = vsyncpa [#allocation3], 1
    %s2928 = scalar_lea.sflag [#allocation3], 1
    %2929 = vsyncpa %s2928, 1
    %2930 = vsyncpa [#allocation5], 1
    %2931 = vsyncpa [#allocation8], 1
    %2932 = vsyncpa [#allocation11], 1
    %2933 = vsyncpa [#allocation14], 1
    %2934 = vsyncpa [#allocation17], 1
    %2935 = vsyncpa [#allocation20], 1
    %2936 = vsyncpa [#allocation23], 1
    %2937 = vsyncpa [#allocation26], 1
    %2938 = vsyncpa [#allocation29], 1

</llo_original>
